<compile_context>
chip_gen: v6e
topology: v6e:2x2x1
jax: 0.10.0
libtpu: 0.0.40
codegen_flags: <defaults>
</compile_context>

<pallas_src>
import jax
import jax.numpy as jnp
from jax.experimental import pallas as pl
from jax.experimental.pallas import tpu as pltpu

_LANES = 128
_SUBLANES = 8
_EPS = 1e-5


def _round_up(n, m):
    return (n + m - 1) // m * m


# ----------------------------------------------------------------------------
# Pallas kernel: TH output rows of one batch element per grid step.
# ----------------------------------------------------------------------------
def _bottleneck_kernel(x_ref, w1_ref, b1_ref, w2_ref, b2_ref, w3_ref, b3_ref,
                       o_ref, xp_ref, col_ref):
    """Per-step shapes (Cp/Pp = lane-padded channels/planes, TH = tile rows):
       x_ref : (1, H, W, Cp) bf16   (full image; resident across the t axis)
       w1:(Cp,Pp) bf16  b1:(1,Pp) f32     (BN scale already folded into w)
       w2:(9Pp,Pp) bf16 b2:(1,Pp) f32     w3:(Pp,Cp) bf16  b3:(1,Cp) f32
       o_ref : (1, TH, W, Cp) bf16
       xp_ref: (TH+2, Wp2, Pp) bf16       padded stage-1 slab, Wp2 = rnd8(W+2)
       col_ref: (TH*W, 9*Pp) bf16         im2col slab
    """
    _, H, W, Cp = x_ref.shape
    TH = o_ref.shape[1]
    Wp2 = xp_ref.shape[1]
    Pp = w1_ref.shape[1]

    t = pl.program_id(1)
    nt = pl.num_programs(1)
    r0 = t * TH
    if TH % _SUBLANES == 0:
        r0 = pl.multiple_of(r0, _SUBLANES)

    def stage1(rows_bf16):                   # (R, W, Cp) bf16 -> (R, W, Pp) bf16
        r = rows_bf16.shape[0]
        y = jnp.dot(rows_bf16.reshape(r * W, Cp), w1_ref[...],
                    preferred_element_type=jnp.float32)
        y = jnp.maximum(y + b1_ref[...], 0.0)
        return y.astype(jnp.bfloat16).reshape(r, W, Pp)

    # ---- stage 1: 1x1 conv (+folded BN) + relu, written bf16 into xp --------
    # Zero only the halo strips the 3x3 windows read; the interior is fully
    # overwritten each step (scratch persists, so no full clear is needed).
    zcol = jnp.zeros((TH + 2, 1, Pp), jnp.bfloat16)
    xp_ref[:, pl.ds(0, 1), :] = zcol                      # left pad column
    xp_ref[:, pl.ds(W + 1, 1), :] = zcol                  # right pad column

    xp_ref[pl.ds(1, TH), pl.ds(1, W), :] = stage1(x_ref[0, pl.ds(r0, TH)])

    @pl.when(t > 0)                                       # top halo row
    def _():
        xp_ref[pl.ds(0, 1), pl.ds(1, W), :] = stage1(x_ref[0, pl.ds(r0 - 1, 1)])

    @pl.when(t == 0)                                      # image top border
    def _():
        xp_ref[pl.ds(0, 1), :, :] = jnp.zeros((1, Wp2, Pp), jnp.bfloat16)

    @pl.when(t < nt - 1)                                  # bottom halo row
    def _():
        xp_ref[pl.ds(TH + 1, 1), pl.ds(1, W), :] = stage1(
            x_ref[0, pl.ds(r0 + TH, 1)])

    @pl.when(t == nt - 1)                                 # image bottom border
    def _():
        xp_ref[pl.ds(TH + 1, 1), :, :] = jnp.zeros((1, Wp2, Pp), jnp.bfloat16)

    # ---- stage 2: 3x3 conv (stride 1, pad 1) as ONE im2col matmul, K = 9*Pp -
    for kh in range(3):
        for kw in range(3):
            win = xp_ref[pl.ds(kh, TH), pl.ds(kw, W), :]          # (TH, W, Pp)
            col_ref[:, pl.ds((kh * 3 + kw) * Pp, Pp)] = win.reshape(TH * W, Pp)
    y2 = jnp.dot(col_ref[...], w2_ref[...], preferred_element_type=jnp.float32)
    y2 = jnp.maximum(y2 + b2_ref[...], 0.0)                       # (TH*W, Pp) f32

    # ---- stage 3: 1x1 conv (+folded BN) --------------------------------------
    y3 = jnp.dot(y2.astype(jnp.bfloat16), w3_ref[...],
                 preferred_element_type=jnp.float32)
    y3 = y3 + b3_ref[...]                                         # (TH*W, Cp) f32

    # ---- identity residual (re-read resident x, f32) + relu; bf16 store ------
    res = x_ref[0, pl.ds(r0, TH)].astype(jnp.float32).reshape(TH * W, Cp)
    out = jnp.maximum(y3 + res, 0.0)
    o_ref[0] = out.astype(jnp.bfloat16).reshape(TH, W, Cp)


def _rep_spec(shape):
    zeros = (0,) * len(shape)
    return pl.BlockSpec(shape, lambda n, t, z=zeros: z)


_PARAM_ORDER = ("w1", "b1", "w2", "b2", "w3", "b3")


def _pick_tile_rows(H, W):
    """Smallest divisor of H keeping >= ~512 rows per MXU pass (v6e note);
    falls back to the whole image if nothing smaller divides H."""
    min_rows = max(1, -(-512 // W))
    for th in range(min_rows, H):
        if H % th == 0:
            return th
    return H


def bottleneck_forward_nhwc(x_nhwc, params, tile_rows=None):
    """NHWC in / NHWC bf16 out. Channels padded internally to 128 lanes."""
    N, H, W, C = x_nhwc.shape
    Cp, Pp = params["w1"].shape
    if params["w3"].shape[1] != Cp:
        raise ValueError("identity-residual path requires inplanes == 4*planes")
    # TODO(synk): stride>1 / downsample residual projection not implemented.

    TH = tile_rows if tile_rows is not None else _pick_tile_rows(H, W)
    if H % TH != 0:
        TH = H
    nt = H // TH
    Wp2 = _round_up(W + 2, _SUBLANES)

    x_p = x_nhwc if C == Cp else jnp.pad(
        x_nhwc, ((0, 0), (0, 0), (0, 0), (0, Cp - C)))
    x_p = x_p.astype(jnp.bfloat16)             # activations move HBM<->VMEM in bf16
    weight_args = [params[k] for k in _PARAM_ORDER]

    flops = 2 * N * H * W * (Cp * Pp + 9 * Pp * Pp + Pp * Cp)
    w_bytes = sum(int(w.size) * int(w.dtype.itemsize) for w in weight_args)
    bytes_accessed = 2 * (2 * N * H * W * Cp) + w_bytes     # bf16 in + bf16 out

    # Per-step VMEM footprint: double-buffered x/out blocks + weights + bf16
    # scratches + f32 temporaries; keep the request below v7x's 64 MiB VMEM.
    blk = 2 * (H * W * Cp + TH * W * Cp) * 2 + 2 * w_bytes
    scratch = ((TH + 2) * Wp2 * Pp + TH * W * 9 * Pp) * 2
    temps = TH * W * (2 * Pp + 2 * Cp) * 4
    vmem_limit = int(min(max(2 * (blk + scratch + temps), 32 * 1024 * 1024),
                         48 * 1024 * 1024))

    out = pl.pallas_call(
        _bottleneck_kernel,
        out_shape=jax.ShapeDtypeStruct((N, H, W, Cp), jnp.bfloat16),
        grid=(N, nt),
        in_specs=[pl.BlockSpec((1, H, W, Cp), lambda n, t: (n, 0, 0, 0))]
                 + [_rep_spec(w.shape) for w in weight_args],
        out_specs=pl.BlockSpec((1, TH, W, Cp), lambda n, t: (n, t, 0, 0)),
        scratch_shapes=[pltpu.VMEM((TH + 2, Wp2, Pp), jnp.bfloat16),
                        pltpu.VMEM((TH * W, 9 * Pp), jnp.bfloat16)],
        compiler_params=pltpu.CompilerParams(
            dimension_semantics=("parallel", "parallel"),
            vmem_limit_bytes=vmem_limit),
        cost_estimate=pl.CostEstimate(flops=int(flops), transcendentals=0,
                                      bytes_accessed=int(bytes_accessed)),
    )(x_p, *weight_args)

    return out[..., :C] if C != Cp else out


def bottleneck_forward(x_nchw, params, tile_rows=None):
    """PyTorch-NCHW shim. In a real model stay NHWC/bf16 end-to-end: these two
    transposes roughly double HBM traffic around a bandwidth-bound block."""
    x = jnp.transpose(x_nchw, (0, 2, 3, 1))
    out = bottleneck_forward_nhwc(x, params, tile_rows=tile_rows)
    return jnp.transpose(out, (0, 3, 1, 2))


# ----------------------------------------------------------------------------
# Deterministic parameter initialization (shapes from Bottleneck.__init__).
# ----------------------------------------------------------------------------
def init_params(key, inplanes, planes):
    assert inplanes == 4 * planes, "identity residual requires inplanes == 4*planes"
    ks = jax.random.split(key, 15)
    w1t = 0.1 * jax.random.normal(ks[0], (planes, inplanes, 1, 1), jnp.float32)
    w2t = 0.1 * jax.random.normal(ks[1], (planes, planes, 3, 3), jnp.float32)
    w3t = 0.1 * jax.random.normal(ks[2], (planes * 4, planes, 1, 1), jnp.float32)

    def bn(kg, kb, km, kv, c):
        g = jax.random.uniform(kg, (c,), jnp.float32, 0.5, 1.5)
        b = 0.1 * jax.random.normal(kb, (c,), jnp.float32)
        m = 0.1 * jax.random.normal(km, (c,), jnp.float32)
        v = jax.random.uniform(kv, (c,), jnp.float32, 0.5, 1.5)
        return g, b, m, v

    bn1 = bn(ks[3], ks[4], ks[5], ks[6], planes)
    bn2 = bn(ks[7], ks[8], ks[9], ks[10], planes)
    bn3 = bn(ks[11], ks[12], ks[13], ks[14], planes * 4)
    raw = dict(w1t=w1t, w2t=w2t, w3t=w3t, bn1=bn1, bn2=bn2, bn3=bn3)

    def fold(p):
        g, b, m, v = p
        s = g / jnp.sqrt(v + _EPS)
        return s, b - m * s                         # 1-D (c,), (c,)

    s1, b1 = fold(bn1)
    s2, b2 = fold(bn2)
    s3, b3 = fold(bn3)

    Cp = _round_up(inplanes, _LANES)                # padded in/out channels
    Pp = _round_up(planes, _LANES)                  # padded planes

    # Convs as channel matmuls; BN scales folded into output-channel columns
    # in f32 BEFORE the bf16 cast; channel dims zero-padded to lane width so
    # padded rows/cols contribute nothing (sliced off in the wrapper).
    w1 = jnp.zeros((Cp, Pp), jnp.float32).at[:inplanes, :planes].set(
        jnp.transpose(w1t[:, :, 0, 0]) * s1[None, :])
    w2 = jnp.zeros((3, 3, Pp, Pp), jnp.float32).at[:, :, :planes, :planes].set(
        jnp.transpose(w2t, (2, 3, 1, 0)) * s2[None, None, None, :]
    ).reshape(9 * Pp, Pp)
    w3 = jnp.zeros((Pp, Cp), jnp.float32).at[:planes, :4 * planes].set(
        jnp.transpose(w3t[:, :, 0, 0]) * s3[None, :])

    b1p = jnp.zeros((1, Pp), jnp.float32).at[0, :planes].set(b1)
    b2p = jnp.zeros((1, Pp), jnp.float32).at[0, :planes].set(b2)
    b3p = jnp.zeros((1, Cp), jnp.float32).at[0, :4 * planes].set(b3)

    params = dict(w1=w1.astype(jnp.bfloat16), w2=w2.astype(jnp.bfloat16),
                  w3=w3.astype(jnp.bfloat16), b1=b1p, b2=b2p, b3=b3p)
    return raw, params


# ----------------------------------------------------------------------------
# Pure-JAX reference (NCHW, eval-mode BN, f32) for correctness check.
# ----------------------------------------------------------------------------
def reference_forward(x, raw):
    def bn(t, p):
        g, b, m, v = (a[None, :, None, None] for a in p)
        return (t - m) / jnp.sqrt(v + _EPS) * g + b

    def conv(t, w, pad):
        return jax.lax.conv_general_dilated(
            t, w, (1, 1), [(pad, pad), (pad, pad)],
            dimension_numbers=("NCHW", "OIHW", "NCHW"),
            precision=jax.lax.Precision.HIGHEST)

    out = jax.nn.relu(bn(conv(x, raw["w1t"], 0), raw["bn1"]))
    out = jax.nn.relu(bn(conv(out, raw["w2t"], 1), raw["bn2"]))
    out = bn(conv(out, raw["w3t"], 0), raw["bn3"])
    return jax.nn.relu(out + x)


if __name__ == "__main__":
    inplanes, planes = 32, 8            # expansion=4 -> out channels = 32 = inplanes
    N, H, W = 2, 16, 16

    key = jax.random.PRNGKey(0)
    kx, kp = jax.random.split(key)
    x_nchw = jax.random.normal(kx, (N, inplanes, H, W), jnp.float32)
    raw, params = init_params(kp, inplanes, planes)

    # tile_rows=8 -> grid (N, 2): exercises the halo-recompute row tiling.
    out = bottleneck_forward(x_nchw, params, tile_rows=8)
    out = jax.block_until_ready(out)

    # Reference on the bf16-quantized input (kernel keeps activations bf16 in
    # HBM); bf16 MXU with f32 accumulation + bf16 output store -> relaxed tol.
    x_q = x_nchw.astype(jnp.bfloat16).astype(jnp.float32)
    ref = reference_forward(x_q, raw)
    out_f32 = out.astype(jnp.float32)
    assert out.shape == ref.shape == (N, inplanes, H, W)
    assert jnp.allclose(out_f32, ref, rtol=4e-2, atol=4e-2), "mismatch vs reference"

    print("KERNEL_OK")
</pallas_src>

<mosaic_0001>
module attributes {stable_mosaic.version = 11 : i64} {
  func.func @_bottleneck_kernel(%arg0: i32, %arg1: i32, %arg2: memref<1x16x16x128xbf16, #tpu.memory_space<vmem>>, %arg3: memref<128x128xbf16, #tpu.memory_space<vmem>>, %arg4: memref<1x128xf32, #tpu.memory_space<vmem>>, %arg5: memref<1152x128xbf16, #tpu.memory_space<vmem>>, %arg6: memref<1x128xf32, #tpu.memory_space<vmem>>, %arg7: memref<128x128xbf16, #tpu.memory_space<vmem>>, %arg8: memref<1x128xf32, #tpu.memory_space<vmem>>, %arg9: memref<1x8x16x128xbf16, #tpu.memory_space<vmem>>, %arg10: memref<10x24x128xbf16, #tpu.memory_space<vmem>>, %arg11: memref<128x1152xbf16, #tpu.memory_space<vmem>>) attributes {dimension_semantics = [#tpu.dimension_semantics<parallel>, #tpu.dimension_semantics<parallel>], iteration_bounds = array<i64: 2, 2>, scalar_prefetch = 0 : i64, scratch_operands = 2 : i64, tpu.core_type = #tpu.core_type<tc>, window_params = [{transform_indices = @transform_0, window_bounds = array<i64: 1, 16, 16, 128>}, {pipeline_mode = #tpu.pipeline_mode<synchronous>, transform_indices = @transform_1, window_bounds = array<i64: 128, 128>}, {pipeline_mode = #tpu.pipeline_mode<synchronous>, transform_indices = @transform_2, window_bounds = array<i64: 1, 128>}, {pipeline_mode = #tpu.pipeline_mode<synchronous>, transform_indices = @transform_3, window_bounds = array<i64: 1152, 128>}, {pipeline_mode = #tpu.pipeline_mode<synchronous>, transform_indices = @transform_4, window_bounds = array<i64: 1, 128>}, {pipeline_mode = #tpu.pipeline_mode<synchronous>, transform_indices = @transform_5, window_bounds = array<i64: 128, 128>}, {pipeline_mode = #tpu.pipeline_mode<synchronous>, transform_indices = @transform_6, window_bounds = array<i64: 1, 128>}, {transform_indices = @transform_7, window_bounds = array<i64: 1, 8, 16, 128>}]} {
    %c8_i32 = arith.constant 8 : i32
    %0 = arith.muli %arg1, %c8_i32 : i32
    %1 = tpu.assume_multiple %0, 8 : i32
    %cst = arith.constant 0.000000e+00 : bf16
    %2 = vector.broadcast %cst : bf16 to vector<10x1x128xbf16>
    %c0 = arith.constant 0 : index
    %c0_0 = arith.constant 0 : index
    %c0_1 = arith.constant 0 : index
    %3 = vector.load %arg10[%c0, %c0_0, %c0_1] : memref<10x24x128xbf16, #tpu.memory_space<vmem>>, vector<10x1x128xbf16>
    tpu.vector_store %arg10[%c0, %c0_0, %c0_1], %2 {strides = array<i32>} : memref<10x24x128xbf16, #tpu.memory_space<vmem>>, vector<10x1x128xbf16>,
    %c0_2 = arith.constant 0 : index
    %c17 = arith.constant 17 : index
    %c0_3 = arith.constant 0 : index
    %4 = vector.load %arg10[%c0_2, %c17, %c0_3] : memref<10x24x128xbf16, #tpu.memory_space<vmem>>, vector<10x1x128xbf16>
    tpu.vector_store %arg10[%c0_2, %c17, %c0_3], %2 {strides = array<i32>} : memref<10x24x128xbf16, #tpu.memory_space<vmem>>, vector<10x1x128xbf16>,
    %c0_4 = arith.constant 0 : index
    %5 = arith.index_cast %1 : i32 to index
    %c0_5 = arith.constant 0 : index
    %c0_6 = arith.constant 0 : index
    %6 = vector.load %arg2[%c0_4, %5, %c0_5, %c0_6] : memref<1x16x16x128xbf16, #tpu.memory_space<vmem>>, vector<1x8x16x128xbf16>
    %7 = vector.shape_cast %6 : vector<1x8x16x128xbf16> to vector<8x16x128xbf16>
    %8 = vector.shape_cast %7 : vector<8x16x128xbf16> to vector<128x128xbf16>
    %c0_7 = arith.constant 0 : index
    %c0_8 = arith.constant 0 : index
    %9 = vector.load %arg3[%c0_7, %c0_8] : memref<128x128xbf16, #tpu.memory_space<vmem>>, vector<128x128xbf16>
    %cst_9 = arith.constant dense<0.000000e+00> : vector<128x128xf32>
    %10 = tpu.matmul %8, %9, %cst_9 {dimension_numbers = #tpu.dot_dimension_numbers<[1], [0], [0], [1], [0, 0, 1, 1], [], []>} : vector<128x128xbf16>, vector<128x128xbf16>, vector<128x128xf32> -> vector<128x128xf32>
    %c0_10 = arith.constant 0 : index
    %c0_11 = arith.constant 0 : index
    %11 = vector.load %arg4[%c0_10, %c0_11] : memref<1x128xf32, #tpu.memory_space<vmem>>, vector<1x128xf32>
    %12 = vector.broadcast %11 : vector<1x128xf32> to vector<128x128xf32>
    %13 = arith.addf %10, %12 : vector<128x128xf32>
    %cst_12 = arith.constant 0.000000e+00 : f32
    %14 = vector.broadcast %cst_12 : f32 to vector<128x128xf32>
    %15 = arith.maximumf %13, %14 : vector<128x128xf32>
    %16 = arith.truncf %15 : vector<128x128xf32> to vector<128x128xbf16>
    %17 = vector.shape_cast %16 : vector<128x128xbf16> to vector<8x16x128xbf16>
    %c1 = arith.constant 1 : index
    %c1_13 = arith.constant 1 : index
    %c0_14 = arith.constant 0 : index
    %18 = vector.load %arg10[%c1, %c1_13, %c0_14] : memref<10x24x128xbf16, #tpu.memory_space<vmem>>, vector<8x16x128xbf16>
    tpu.vector_store %arg10[%c1, %c1_13, %c0_14], %17 {strides = array<i32>} : memref<10x24x128xbf16, #tpu.memory_space<vmem>>, vector<8x16x128xbf16>,
    %c0_i32 = arith.constant 0 : i32
    %19 = arith.cmpi sgt, %arg1, %c0_i32 : i32
    %20 = arith.extui %19 : i1 to i32
    %c0_i32_15 = arith.constant 0 : i32
    %21 = arith.cmpi ne, %20, %c0_i32_15 : i32
    scf.if %21 {
      %c1_i32_78 = arith.constant 1 : i32
      %85 = arith.subi %1, %c1_i32_78 : i32
      %c0_79 = arith.constant 0 : index
      %86 = arith.index_cast %85 : i32 to index
      %c0_80 = arith.constant 0 : index
      %c0_81 = arith.constant 0 : index
      %87 = vector.load %arg2[%c0_79, %86, %c0_80, %c0_81] : memref<1x16x16x128xbf16, #tpu.memory_space<vmem>>, vector<1x1x16x128xbf16>
      %88 = vector.shape_cast %87 : vector<1x1x16x128xbf16> to vector<1x16x128xbf16>
      %89 = vector.shape_cast %88 : vector<1x16x128xbf16> to vector<16x128xbf16>
      %c0_82 = arith.constant 0 : index
      %c0_83 = arith.constant 0 : index
      %90 = vector.load %arg3[%c0_82, %c0_83] : memref<128x128xbf16, #tpu.memory_space<vmem>>, vector<128x128xbf16>
      %cst_84 = arith.constant dense<0.000000e+00> : vector<16x128xf32>
      %91 = tpu.matmul %89, %90, %cst_84 {dimension_numbers = #tpu.dot_dimension_numbers<[1], [0], [0], [1], [0, 0, 1, 1], [], []>} : vector<16x128xbf16>, vector<128x128xbf16>, vector<16x128xf32> -> vector<16x128xf32>
      %c0_85 = arith.constant 0 : index
      %c0_86 = arith.constant 0 : index
      %92 = vector.load %arg4[%c0_85, %c0_86] : memref<1x128xf32, #tpu.memory_space<vmem>>, vector<1x128xf32>
      %93 = vector.broadcast %92 : vector<1x128xf32> to vector<16x128xf32>
      %94 = arith.addf %91, %93 : vector<16x128xf32>
      %cst_87 = arith.constant 0.000000e+00 : f32
      %95 = vector.broadcast %cst_87 : f32 to vector<16x128xf32>
      %96 = arith.maximumf %94, %95 : vector<16x128xf32>
      %97 = arith.truncf %96 : vector<16x128xf32> to vector<16x128xbf16>
      %98 = vector.shape_cast %97 : vector<16x128xbf16> to vector<1x16x128xbf16>
      %c0_88 = arith.constant 0 : index
      %c1_89 = arith.constant 1 : index
      %c0_90 = arith.constant 0 : index
      %99 = vector.load %arg10[%c0_88, %c1_89, %c0_90] : memref<10x24x128xbf16, #tpu.memory_space<vmem>>, vector<1x16x128xbf16>
      tpu.vector_store %arg10[%c0_88, %c1_89, %c0_90], %98 {strides = array<i32>} : memref<10x24x128xbf16, #tpu.memory_space<vmem>>, vector<1x16x128xbf16>,
    } else {
    }
    %c0_i32_16 = arith.constant 0 : i32
    %22 = arith.cmpi eq, %arg1, %c0_i32_16 : i32
    %23 = arith.extui %22 : i1 to i32
    %c0_i32_17 = arith.constant 0 : i32
    %24 = arith.cmpi ne, %23, %c0_i32_17 : i32
    scf.if %24 {
      %cst_78 = arith.constant 0.000000e+00 : bf16
      %85 = vector.broadcast %cst_78 : bf16 to vector<1x24x128xbf16>
      %c0_79 = arith.constant 0 : index
      %c0_80 = arith.constant 0 : index
      %c0_81 = arith.constant 0 : index
      %86 = vector.load %arg10[%c0_79, %c0_80, %c0_81] : memref<10x24x128xbf16, #tpu.memory_space<vmem>>, vector<1x24x128xbf16>
      tpu.vector_store %arg10[%c0_79, %c0_80, %c0_81], %85 {strides = array<i32>} : memref<10x24x128xbf16, #tpu.memory_space<vmem>>, vector<1x24x128xbf16>,
    } else {
    }
    %c1_i32 = arith.constant 1 : i32
    %25 = arith.cmpi slt, %arg1, %c1_i32 : i32
    %26 = arith.extui %25 : i1 to i32
    %c0_i32_18 = arith.constant 0 : i32
    %27 = arith.cmpi ne, %26, %c0_i32_18 : i32
    scf.if %27 {
      %c8_i32_78 = arith.constant 8 : i32
      %85 = arith.addi %1, %c8_i32_78 : i32
      %c0_79 = arith.constant 0 : index
      %86 = arith.index_cast %85 : i32 to index
      %c0_80 = arith.constant 0 : index
      %c0_81 = arith.constant 0 : index
      %87 = vector.load %arg2[%c0_79, %86, %c0_80, %c0_81] : memref<1x16x16x128xbf16, #tpu.memory_space<vmem>>, vector<1x1x16x128xbf16>
      %88 = vector.shape_cast %87 : vector<1x1x16x128xbf16> to vector<1x16x128xbf16>
      %89 = vector.shape_cast %88 : vector<1x16x128xbf16> to vector<16x128xbf16>
      %c0_82 = arith.constant 0 : index
      %c0_83 = arith.constant 0 : index
      %90 = vector.load %arg3[%c0_82, %c0_83] : memref<128x128xbf16, #tpu.memory_space<vmem>>, vector<128x128xbf16>
      %cst_84 = arith.constant dense<0.000000e+00> : vector<16x128xf32>
      %91 = tpu.matmul %89, %90, %cst_84 {dimension_numbers = #tpu.dot_dimension_numbers<[1], [0], [0], [1], [0, 0, 1, 1], [], []>} : vector<16x128xbf16>, vector<128x128xbf16>, vector<16x128xf32> -> vector<16x128xf32>
      %c0_85 = arith.constant 0 : index
      %c0_86 = arith.constant 0 : index
      %92 = vector.load %arg4[%c0_85, %c0_86] : memref<1x128xf32, #tpu.memory_space<vmem>>, vector<1x128xf32>
      %93 = vector.broadcast %92 : vector<1x128xf32> to vector<16x128xf32>
      %94 = arith.addf %91, %93 : vector<16x128xf32>
      %cst_87 = arith.constant 0.000000e+00 : f32
      %95 = vector.broadcast %cst_87 : f32 to vector<16x128xf32>
      %96 = arith.maximumf %94, %95 : vector<16x128xf32>
      %97 = arith.truncf %96 : vector<16x128xf32> to vector<16x128xbf16>
      %98 = vector.shape_cast %97 : vector<16x128xbf16> to vector<1x16x128xbf16>
      %c9 = arith.constant 9 : index
      %c1_88 = arith.constant 1 : index
      %c0_89 = arith.constant 0 : index
      %99 = vector.load %arg10[%c9, %c1_88, %c0_89] : memref<10x24x128xbf16, #tpu.memory_space<vmem>>, vector<1x16x128xbf16>
      tpu.vector_store %arg10[%c9, %c1_88, %c0_89], %98 {strides = array<i32>} : memref<10x24x128xbf16, #tpu.memory_space<vmem>>, vector<1x16x128xbf16>,
    } else {
    }
    %c1_i32_19 = arith.constant 1 : i32
    %28 = arith.cmpi eq, %arg1, %c1_i32_19 : i32
    %29 = arith.extui %28 : i1 to i32
    %c0_i32_20 = arith.constant 0 : i32
    %30 = arith.cmpi ne, %29, %c0_i32_20 : i32
    scf.if %30 {
      %cst_78 = arith.constant 0.000000e+00 : bf16
      %85 = vector.broadcast %cst_78 : bf16 to vector<1x24x128xbf16>
      %c9 = arith.constant 9 : index
      %c0_79 = arith.constant 0 : index
      %c0_80 = arith.constant 0 : index
      %86 = vector.load %arg10[%c9, %c0_79, %c0_80] : memref<10x24x128xbf16, #tpu.memory_space<vmem>>, vector<1x24x128xbf16>
      tpu.vector_store %arg10[%c9, %c0_79, %c0_80], %85 {strides = array<i32>} : memref<10x24x128xbf16, #tpu.memory_space<vmem>>, vector<1x24x128xbf16>,
    } else {
    }
    %c0_21 = arith.constant 0 : index
    %c0_22 = arith.constant 0 : index
    %c0_23 = arith.constant 0 : index
    %31 = vector.load %arg10[%c0_21, %c0_22, %c0_23] : memref<10x24x128xbf16, #tpu.memory_space<vmem>>, vector<8x16x128xbf16>
    %32 = vector.shape_cast %31 : vector<8x16x128xbf16> to vector<128x128xbf16>
    %c0_24 = arith.constant 0 : index
    %c0_25 = arith.constant 0 : index
    %33 = vector.load %arg11[%c0_24, %c0_25] : memref<128x1152xbf16, #tpu.memory_space<vmem>>, vector<128x128xbf16>
    tpu.vector_store %arg11[%c0_24, %c0_25], %32 {strides = array<i32>} : memref<128x1152xbf16, #tpu.memory_space<vmem>>, vector<128x128xbf16>,
    %c0_26 = arith.constant 0 : index
    %c1_27 = arith.constant 1 : index
    %c0_28 = arith.constant 0 : index
    %34 = vector.load %arg10[%c0_26, %c1_27, %c0_28] : memref<10x24x128xbf16, #tpu.memory_space<vmem>>, vector<8x16x128xbf16>
    %35 = vector.shape_cast %34 : vector<8x16x128xbf16> to vector<128x128xbf16>
    %c0_29 = arith.constant 0 : index
    %c128 = arith.constant 128 : index
    %36 = vector.load %arg11[%c0_29, %c128] : memref<128x1152xbf16, #tpu.memory_space<vmem>>, vector<128x128xbf16>
    tpu.vector_store %arg11[%c0_29, %c128], %35 {strides = array<i32>} : memref<128x1152xbf16, #tpu.memory_space<vmem>>, vector<128x128xbf16>,
    %c0_30 = arith.constant 0 : index
    %c2 = arith.constant 2 : index
    %c0_31 = arith.constant 0 : index
    %37 = vector.load %arg10[%c0_30, %c2, %c0_31] : memref<10x24x128xbf16, #tpu.memory_space<vmem>>, vector<8x16x128xbf16>
    %38 = vector.shape_cast %37 : vector<8x16x128xbf16> to vector<128x128xbf16>
    %c0_32 = arith.constant 0 : index
    %c256 = arith.constant 256 : index
    %39 = vector.load %arg11[%c0_32, %c256] : memref<128x1152xbf16, #tpu.memory_space<vmem>>, vector<128x128xbf16>
    tpu.vector_store %arg11[%c0_32, %c256], %38 {strides = array<i32>} : memref<128x1152xbf16, #tpu.memory_space<vmem>>, vector<128x128xbf16>,
    %c1_33 = arith.constant 1 : index
    %c0_34 = arith.constant 0 : index
    %c0_35 = arith.constant 0 : index
    %40 = vector.load %arg10[%c1_33, %c0_34, %c0_35] : memref<10x24x128xbf16, #tpu.memory_space<vmem>>, vector<8x16x128xbf16>
    %41 = vector.shape_cast %40 : vector<8x16x128xbf16> to vector<128x128xbf16>
    %c0_36 = arith.constant 0 : index
    %c384 = arith.constant 384 : index
    %42 = vector.load %arg11[%c0_36, %c384] : memref<128x1152xbf16, #tpu.memory_space<vmem>>, vector<128x128xbf16>
    tpu.vector_store %arg11[%c0_36, %c384], %41 {strides = array<i32>} : memref<128x1152xbf16, #tpu.memory_space<vmem>>, vector<128x128xbf16>,
    %c1_37 = arith.constant 1 : index
    %c1_38 = arith.constant 1 : index
    %c0_39 = arith.constant 0 : index
    %43 = vector.load %arg10[%c1_37, %c1_38, %c0_39] : memref<10x24x128xbf16, #tpu.memory_space<vmem>>, vector<8x16x128xbf16>
    %44 = vector.shape_cast %43 : vector<8x16x128xbf16> to vector<128x128xbf16>
    %c0_40 = arith.constant 0 : index
    %c512 = arith.constant 512 : index
    %45 = vector.load %arg11[%c0_40, %c512] : memref<128x1152xbf16, #tpu.memory_space<vmem>>, vector<128x128xbf16>
    tpu.vector_store %arg11[%c0_40, %c512], %44 {strides = array<i32>} : memref<128x1152xbf16, #tpu.memory_space<vmem>>, vector<128x128xbf16>,
    %c1_41 = arith.constant 1 : index
    %c2_42 = arith.constant 2 : index
    %c0_43 = arith.constant 0 : index
    %46 = vector.load %arg10[%c1_41, %c2_42, %c0_43] : memref<10x24x128xbf16, #tpu.memory_space<vmem>>, vector<8x16x128xbf16>
    %47 = vector.shape_cast %46 : vector<8x16x128xbf16> to vector<128x128xbf16>
    %c0_44 = arith.constant 0 : index
    %c640 = arith.constant 640 : index
    %48 = vector.load %arg11[%c0_44, %c640] : memref<128x1152xbf16, #tpu.memory_space<vmem>>, vector<128x128xbf16>
    tpu.vector_store %arg11[%c0_44, %c640], %47 {strides = array<i32>} : memref<128x1152xbf16, #tpu.memory_space<vmem>>, vector<128x128xbf16>,
    %c2_45 = arith.constant 2 : index
    %c0_46 = arith.constant 0 : index
    %c0_47 = arith.constant 0 : index
    %49 = vector.load %arg10[%c2_45, %c0_46, %c0_47] : memref<10x24x128xbf16, #tpu.memory_space<vmem>>, vector<8x16x128xbf16>
    %50 = vector.shape_cast %49 : vector<8x16x128xbf16> to vector<128x128xbf16>
    %c0_48 = arith.constant 0 : index
    %c768 = arith.constant 768 : index
    %51 = vector.load %arg11[%c0_48, %c768] : memref<128x1152xbf16, #tpu.memory_space<vmem>>, vector<128x128xbf16>
    tpu.vector_store %arg11[%c0_48, %c768], %50 {strides = array<i32>} : memref<128x1152xbf16, #tpu.memory_space<vmem>>, vector<128x128xbf16>,
    %c2_49 = arith.constant 2 : index
    %c1_50 = arith.constant 1 : index
    %c0_51 = arith.constant 0 : index
    %52 = vector.load %arg10[%c2_49, %c1_50, %c0_51] : memref<10x24x128xbf16, #tpu.memory_space<vmem>>, vector<8x16x128xbf16>
    %53 = vector.shape_cast %52 : vector<8x16x128xbf16> to vector<128x128xbf16>
    %c0_52 = arith.constant 0 : index
    %c896 = arith.constant 896 : index
    %54 = vector.load %arg11[%c0_52, %c896] : memref<128x1152xbf16, #tpu.memory_space<vmem>>, vector<128x128xbf16>
    tpu.vector_store %arg11[%c0_52, %c896], %53 {strides = array<i32>} : memref<128x1152xbf16, #tpu.memory_space<vmem>>, vector<128x128xbf16>,
    %c2_53 = arith.constant 2 : index
    %c2_54 = arith.constant 2 : index
    %c0_55 = arith.constant 0 : index
    %55 = vector.load %arg10[%c2_53, %c2_54, %c0_55] : memref<10x24x128xbf16, #tpu.memory_space<vmem>>, vector<8x16x128xbf16>
    %56 = vector.shape_cast %55 : vector<8x16x128xbf16> to vector<128x128xbf16>
    %c0_56 = arith.constant 0 : index
    %c1024 = arith.constant 1024 : index
    %57 = vector.load %arg11[%c0_56, %c1024] : memref<128x1152xbf16, #tpu.memory_space<vmem>>, vector<128x128xbf16>
    tpu.vector_store %arg11[%c0_56, %c1024], %56 {strides = array<i32>} : memref<128x1152xbf16, #tpu.memory_space<vmem>>, vector<128x128xbf16>,
    %c0_57 = arith.constant 0 : index
    %c0_58 = arith.constant 0 : index
    %58 = vector.load %arg11[%c0_57, %c0_58] : memref<128x1152xbf16, #tpu.memory_space<vmem>>, vector<128x1152xbf16>
    %c0_59 = arith.constant 0 : index
    %c0_60 = arith.constant 0 : index
    %59 = vector.load %arg5[%c0_59, %c0_60] : memref<1152x128xbf16, #tpu.memory_space<vmem>>, vector<1152x128xbf16>
    %cst_61 = arith.constant dense<0.000000e+00> : vector<128x128xf32>
    %60 = tpu.matmul %58, %59, %cst_61 {dimension_numbers = #tpu.dot_dimension_numbers<[1], [0], [0], [1], [0, 0, 1, 1], [], []>} : vector<128x1152xbf16>, vector<1152x128xbf16>, vector<128x128xf32> -> vector<128x128xf32>
    %c0_62 = arith.constant 0 : index
    %c0_63 = arith.constant 0 : index
    %61 = vector.load %arg6[%c0_62, %c0_63] : memref<1x128xf32, #tpu.memory_space<vmem>>, vector<1x128xf32>
    %62 = vector.broadcast %61 : vector<1x128xf32> to vector<128x128xf32>
    %63 = arith.addf %60, %62 : vector<128x128xf32>
    %cst_64 = arith.constant 0.000000e+00 : f32
    %64 = vector.broadcast %cst_64 : f32 to vector<128x128xf32>
    %65 = arith.maximumf %63, %64 : vector<128x128xf32>
    %66 = arith.truncf %65 : vector<128x128xf32> to vector<128x128xbf16>
    %c0_65 = arith.constant 0 : index
    %c0_66 = arith.constant 0 : index
    %67 = vector.load %arg7[%c0_65, %c0_66] : memref<128x128xbf16, #tpu.memory_space<vmem>>, vector<128x128xbf16>
    %cst_67 = arith.constant dense<0.000000e+00> : vector<128x128xf32>
    %68 = tpu.matmul %66, %67, %cst_67 {dimension_numbers = #tpu.dot_dimension_numbers<[1], [0], [0], [1], [0, 0, 1, 1], [], []>} : vector<128x128xbf16>, vector<128x128xbf16>, vector<128x128xf32> -> vector<128x128xf32>
    %c0_68 = arith.constant 0 : index
    %c0_69 = arith.constant 0 : index
    %69 = vector.load %arg8[%c0_68, %c0_69] : memref<1x128xf32, #tpu.memory_space<vmem>>, vector<1x128xf32>
    %70 = vector.broadcast %69 : vector<1x128xf32> to vector<128x128xf32>
    %71 = arith.addf %68, %70 : vector<128x128xf32>
    %c0_70 = arith.constant 0 : index
    %72 = arith.index_cast %1 : i32 to index
    %c0_71 = arith.constant 0 : index
    %c0_72 = arith.constant 0 : index
    %73 = vector.load %arg2[%c0_70, %72, %c0_71, %c0_72] : memref<1x16x16x128xbf16, #tpu.memory_space<vmem>>, vector<1x8x16x128xbf16>
    %74 = vector.shape_cast %73 : vector<1x8x16x128xbf16> to vector<8x16x128xbf16>
    %75 = arith.extf %74 : vector<8x16x128xbf16> to vector<8x16x128xf32>
    %76 = vector.shape_cast %75 : vector<8x16x128xf32> to vector<128x128xf32>
    %77 = arith.addf %71, %76 : vector<128x128xf32>
    %cst_73 = arith.constant 0.000000e+00 : f32
    %78 = vector.broadcast %cst_73 : f32 to vector<128x128xf32>
    %79 = arith.maximumf %77, %78 : vector<128x128xf32>
    %80 = arith.truncf %79 : vector<128x128xf32> to vector<128x128xbf16>
    %81 = vector.shape_cast %80 : vector<128x128xbf16> to vector<8x16x128xbf16>
    %c0_74 = arith.constant 0 : index
    %c0_75 = arith.constant 0 : index
    %c0_76 = arith.constant 0 : index
    %c0_77 = arith.constant 0 : index
    %82 = vector.load %arg9[%c0_74, %c0_75, %c0_76, %c0_77] : memref<1x8x16x128xbf16, #tpu.memory_space<vmem>>, vector<1x8x16x128xbf16>
    %83 = vector.shape_cast %82 : vector<1x8x16x128xbf16> to vector<8x16x128xbf16>
    %84 = vector.shape_cast %81 : vector<8x16x128xbf16> to vector<1x8x16x128xbf16>
    tpu.vector_store %arg9[%c0_74, %c0_75, %c0_76, %c0_77], %84 {strides = array<i32>} : memref<1x8x16x128xbf16, #tpu.memory_space<vmem>>, vector<1x8x16x128xbf16>,
    return
  }
  func.func @transform_0(%arg0: i32, %arg1: i32) -> (i32, i32, i32, i32) {
    %c0_i32 = arith.constant 0 : i32
    %c0_i32_0 = arith.constant 0 : i32
    %c0_i32_1 = arith.constant 0 : i32
    %c0_i32_2 = arith.constant 0 : i32
    return %arg0, %c0_i32, %c0_i32_0, %c0_i32_1 : i32, i32, i32, i32
  }
  func.func @transform_1(%arg0: i32, %arg1: i32) -> (i32, i32) {
    %c0_i32 = arith.constant 0 : i32
    %c0_i32_0 = arith.constant 0 : i32
    %c0_i32_1 = arith.constant 0 : i32
    return %c0_i32, %c0_i32_0 : i32, i32
  }
  func.func @transform_2(%arg0: i32, %arg1: i32) -> (i32, i32) {
    %c0_i32 = arith.constant 0 : i32
    %c0_i32_0 = arith.constant 0 : i32
    %c0_i32_1 = arith.constant 0 : i32
    return %c0_i32, %c0_i32_0 : i32, i32
  }
  func.func @transform_3(%arg0: i32, %arg1: i32) -> (i32, i32) {
    %c0_i32 = arith.constant 0 : i32
    %c0_i32_0 = arith.constant 0 : i32
    %c0_i32_1 = arith.constant 0 : i32
    return %c0_i32, %c0_i32_0 : i32, i32
  }
  func.func @transform_4(%arg0: i32, %arg1: i32) -> (i32, i32) {
    %c0_i32 = arith.constant 0 : i32
    %c0_i32_0 = arith.constant 0 : i32
    %c0_i32_1 = arith.constant 0 : i32
    return %c0_i32, %c0_i32_0 : i32, i32
  }
  func.func @transform_5(%arg0: i32, %arg1: i32) -> (i32, i32) {
    %c0_i32 = arith.constant 0 : i32
    %c0_i32_0 = arith.constant 0 : i32
    %c0_i32_1 = arith.constant 0 : i32
    return %c0_i32, %c0_i32_0 : i32, i32
  }
  func.func @transform_6(%arg0: i32, %arg1: i32) -> (i32, i32) {
    %c0_i32 = arith.constant 0 : i32
    %c0_i32_0 = arith.constant 0 : i32
    %c0_i32_1 = arith.constant 0 : i32
    return %c0_i32, %c0_i32_0 : i32, i32
  }
  func.func @transform_7(%arg0: i32, %arg1: i32) -> (i32, i32, i32, i32) {
    %c0_i32 = arith.constant 0 : i32
    %c0_i32_0 = arith.constant 0 : i32
    %c0_i32_1 = arith.constant 0 : i32
    return %arg0, %arg1, %c0_i32, %c0_i32_0 : i32, i32, i32, i32
  }
}

</mosaic_0001>

<llo_original>
// kernel: tpu_custom_call.1
$region0: #{tpu_custom_call.1}
  #allocation0 [shape = 'u32[]', space=smem, size = 0x4, offset = 0x4, fixed_abs, tag = 'smem constant byte address 0x4 - core index']
  #allocation1 [shape = 'u32[144,128]{1,0:T(1,128)}', space=vmem, size = 0x12000, scoped, tag = 'internal scratch']
  #allocation2 [shape = 'bf16[10,24,128]{2,1,0:T(8,128)(2,1)}', space=vmem, size = 0xf000, scoped, tag = 'scratch operand']
  #allocation3 [shape = 'bf16[128,1152]{1,0:T(8,128)(2,1)}', space=vmem, size = 0x48000, scoped, tag = 'scratch operand']
  %s0 = inlined_call_operand.hbm [shape: bf16[2,16,16,128], index: 0, kind: input, shape index: {}]
  %s1 = inlined_call_operand.hbm [shape: bf16[128,128], index: 1, kind: input, shape index: {}]
  %s2 = inlined_call_operand.vmem [shape: f32[1,128], index: 2, kind: input, shape index: {}]
  %s3 = inlined_call_operand.hbm [shape: bf16[1152,128], index: 3, kind: input, shape index: {}]
  %s4 = inlined_call_operand.vmem [shape: f32[1,128], index: 4, kind: input, shape index: {}]
  %s5 = inlined_call_operand.hbm [shape: bf16[128,128], index: 5, kind: input, shape index: {}]
  %s6 = inlined_call_operand.vmem [shape: f32[1,128], index: 6, kind: input, shape index: {}]
  %s7 = inlined_call_operand.hbm [shape: bf16[2,16,16,128], index: 7, kind: output, shape index: {}]
  %s8 = sld [smem:[#allocation0]]
  $region93: #{tpu_custom_call.1} parent=0
    _
  %s10 = ssub.s32 1, %s8
  %s11 = scalar_select 0, %s10, %s8
  $region1: #{tpu_custom_call.1} parent=0
    #allocation4 [shape = 'u8[131072]{0}', space=vmem, size = 0x20000, scoped, tag = 'input window, operand 0']
    #allocation5 [shape = 's32[2]{0}', space=sflag, size = 0x8, scoped, tag = 'scoped memory for tpu_custom_call.1']
    #allocation6 [shape = 's32[2]{0}', space=sflag, size = 0x8, scoped, tag = 'scoped memory for tpu_custom_call.1']
    #allocation7 [shape = 'u8[32768]{0}', space=vmem, size = 0x8000, scoped, tag = 'input window, operand 1, single buffered']
    #allocation8 [shape = 's32[1]{0}', space=sflag, size = 0x4, scoped, tag = 'scoped memory for tpu_custom_call.1']
    #allocation9 [shape = 'u8[294912]{0}', space=vmem, size = 0x48000, scoped, tag = 'input window, operand 3, single buffered']
    #allocation10 [shape = 'u8[32768]{0}', space=vmem, size = 0x8000, scoped, tag = 'input window, operand 5, single buffered']
    #allocation11 [shape = 's32[1]{0}', space=sflag, size = 0x4, scoped, tag = 'scoped memory for tpu_custom_call.1']
    #allocation12 [shape = 'u8[65536]{0}', space=vmem, size = 0x10000, scoped, tag = 'output window, operand 0']
    %12 = vsyncpa [#allocation5], 0
    %s13 = scalar_lea.sflag [#allocation5], 1
    %14 = vsyncpa %s13, 0
    %15 = vsyncpa [#allocation8], 0
    %16 = vsyncpa [#allocation11], 0
    %17 = vsyncpa [#allocation6], 0
    %s18 = scalar_lea.sflag [#allocation6], 1
    %19 = vsyncpa %s18, 0
    loop: start=0, step=1, limit=6
    $region2: #{tpu_custom_call.1} parent=1 // loop_pre_header
      _
    $region3: #{tpu_custom_call.1} parent=1 // loop_header
      %s21 = sphi 0, %s25
      %p22 = scmp.ge.s32.totalorder %s21, 6
      %s28 = sphi 0, %s40
      %s29 = sphi 0, %s36
      %s30 = sphi 0, %s28
      %s31 = sphi 0, %s29
      %s32 = sphi 0, %s30
      %s33 = sphi 0, %s31
      %s43 = sphi 0, %s45
      %s46 = sphi 0, %s43
      %s47 = sphi 0, %s46
      %s63 = sphi 0, %s47
      %s67 = sphi 0, %s67
      %s69 = sphi 0, %s67
      %s70 = sphi 0, %s69
      %s84 = sphi 0, %s70
      %s88 = sphi 0, %s88
      %s90 = sphi 0, %s88
      %s91 = sphi 0, %s90
      %s105 = sphi 0, %s91
      %s109 = sphi 0, %s109
      %s111 = sphi 0, %s109
      %s112 = sphi 0, %s111
      %s126 = sphi 0, %s112
      %s130 = sphi 0, %s130
      %s132 = sphi 0, %s130
      %s133 = sphi 0, %s132
      %s147 = sphi 0, %s133
      %s151 = sphi 0, %s151
      %s153 = sphi 0, %s151
      %s154 = sphi 0, %s153
      %s168 = sphi 0, %s154
      %s172 = sphi 0, %s172
      %s174 = sphi 0, %s172
      %s175 = sphi 0, %s174
      %s189 = sphi 0, %s175
      %s197 = sphi 0, %s199
      %s200 = sphi 0, %s197
      %s201 = sphi 0, %s200
      %s217 = sphi 0, %s201
    $region4: #{tpu_custom_call.1} parent=1 // loop_header_branch
      %24 = sbr.rel (%p22) target = $region8
    $region5: #{tpu_custom_call.1} parent=1 // loop_body
      %s26 = ssub.s32 %s21, 1
      %s27 = ssub.s32 %s21, 2
      %s34 = sadd.s32 1, %s29
      %p35 = scmp.ge.s32.totalorder %s34, 2
      %s36 = scalar_select %p35, 0, %s34
      %s37 = sadd.s32 1, %s28
      %s38 = scalar_select %p35, %s37, %s28
      %p39 = scmp.ge.s32.totalorder %s38, 2
      %s40 = scalar_select %p39, 0, %s38
      %s41 = ssub.s32 %s28, %s40
      %p42 = scmp.eq.s32.totalorder %s41, 0
      %s44 = sadd.s32 %s43, 1
      %s45 = scalar_select %p42, %s43, %s44
      %p48 = pneg %p42
      %p49 = scmp.eq.s32.totalorder %s21, 3
      %p50 = por %p48, %p49
      %p51 = scmp.ne.s32.totalorder %s43, %s46
      %p52 = scmp.eq.s32.totalorder %s21, 0
      %p53 = por %p51, %p52
      %p54 = scmp.ne.s32.totalorder %s43, %s46
      %p55 = scmp.eq.s32.totalorder %s26, 3
      %p56 = por %p54, %p55
      %p57 = scmp.ne.s32.totalorder %s46, %s47
      %p58 = scmp.eq.s32.totalorder %s26, 0
      %p59 = por %p57, %p58
      %p60 = scmp.ne.s32.totalorder %s46, %s47
      %p61 = scmp.eq.s32.totalorder %s27, 3
      %p62 = por %p60, %p61
      %p64 = scmp.ne.s32.totalorder %s47, %s63
      %p65 = scmp.eq.s32.totalorder %s27, 0
      %p66 = por %p64, %p65
      %s68 = sadd.s32 %s67, 1
      %p71 = scmp.eq.s32.totalorder %s21, 3
      %p72 = scmp.ne.s32.totalorder %s67, %s69
      %p73 = scmp.eq.s32.totalorder %s21, 0
      %p74 = por %p72, %p73
      %p75 = scmp.ne.s32.totalorder %s67, %s69
      %p76 = scmp.eq.s32.totalorder %s26, 3
      %p77 = por %p75, %p76
      %p78 = scmp.ne.s32.totalorder %s69, %s70
      %p79 = scmp.eq.s32.totalorder %s26, 0
      %p80 = por %p78, %p79
      %p81 = scmp.ne.s32.totalorder %s69, %s70
      %p82 = scmp.eq.s32.totalorder %s27, 3
      %p83 = por %p81, %p82
      %p85 = scmp.ne.s32.totalorder %s70, %s84
      %p86 = scmp.eq.s32.totalorder %s27, 0
      %p87 = por %p85, %p86
      %s89 = sadd.s32 %s88, 1
      %p92 = scmp.eq.s32.totalorder %s21, 3
      %p93 = scmp.ne.s32.totalorder %s88, %s90
      %p94 = scmp.eq.s32.totalorder %s21, 0
      %p95 = por %p93, %p94
      %p96 = scmp.ne.s32.totalorder %s88, %s90
      %p97 = scmp.eq.s32.totalorder %s26, 3
      %p98 = por %p96, %p97
      %p99 = scmp.ne.s32.totalorder %s90, %s91
      %p100 = scmp.eq.s32.totalorder %s26, 0
      %p101 = por %p99, %p100
      %p102 = scmp.ne.s32.totalorder %s90, %s91
      %p103 = scmp.eq.s32.totalorder %s27, 3
      %p104 = por %p102, %p103
      %p106 = scmp.ne.s32.totalorder %s91, %s105
      %p107 = scmp.eq.s32.totalorder %s27, 0
      %p108 = por %p106, %p107
      %s110 = sadd.s32 %s109, 1
      %p113 = scmp.eq.s32.totalorder %s21, 3
      %p114 = scmp.ne.s32.totalorder %s109, %s111
      %p115 = scmp.eq.s32.totalorder %s21, 0
      %p116 = por %p114, %p115
      %p117 = scmp.ne.s32.totalorder %s109, %s111
      %p118 = scmp.eq.s32.totalorder %s26, 3
      %p119 = por %p117, %p118
      %p120 = scmp.ne.s32.totalorder %s111, %s112
      %p121 = scmp.eq.s32.totalorder %s26, 0
      %p122 = por %p120, %p121
      %p123 = scmp.ne.s32.totalorder %s111, %s112
      %p124 = scmp.eq.s32.totalorder %s27, 3
      %p125 = por %p123, %p124
      %p127 = scmp.ne.s32.totalorder %s112, %s126
      %p128 = scmp.eq.s32.totalorder %s27, 0
      %p129 = por %p127, %p128
      %s131 = sadd.s32 %s130, 1
      %p134 = scmp.eq.s32.totalorder %s21, 3
      %p135 = scmp.ne.s32.totalorder %s130, %s132
      %p136 = scmp.eq.s32.totalorder %s21, 0
      %p137 = por %p135, %p136
      %p138 = scmp.ne.s32.totalorder %s130, %s132
      %p139 = scmp.eq.s32.totalorder %s26, 3
      %p140 = por %p138, %p139
      %p141 = scmp.ne.s32.totalorder %s132, %s133
      %p142 = scmp.eq.s32.totalorder %s26, 0
      %p143 = por %p141, %p142
      %p144 = scmp.ne.s32.totalorder %s132, %s133
      %p145 = scmp.eq.s32.totalorder %s27, 3
      %p146 = por %p144, %p145
      %p148 = scmp.ne.s32.totalorder %s133, %s147
      %p149 = scmp.eq.s32.totalorder %s27, 0
      %p150 = por %p148, %p149
      %s152 = sadd.s32 %s151, 1
      %p155 = scmp.eq.s32.totalorder %s21, 3
      %p156 = scmp.ne.s32.totalorder %s151, %s153
      %p157 = scmp.eq.s32.totalorder %s21, 0
      %p158 = por %p156, %p157
      %p159 = scmp.ne.s32.totalorder %s151, %s153
      %p160 = scmp.eq.s32.totalorder %s26, 3
      %p161 = por %p159, %p160
      %p162 = scmp.ne.s32.totalorder %s153, %s154
      %p163 = scmp.eq.s32.totalorder %s26, 0
      %p164 = por %p162, %p163
      %p165 = scmp.ne.s32.totalorder %s153, %s154
      %p166 = scmp.eq.s32.totalorder %s27, 3
      %p167 = por %p165, %p166
      %p169 = scmp.ne.s32.totalorder %s154, %s168
      %p170 = scmp.eq.s32.totalorder %s27, 0
      %p171 = por %p169, %p170
      %s173 = sadd.s32 %s172, 1
      %p176 = scmp.eq.s32.totalorder %s21, 3
      %p177 = scmp.ne.s32.totalorder %s172, %s174
      %p178 = scmp.eq.s32.totalorder %s21, 0
      %p179 = por %p177, %p178
      %p180 = scmp.ne.s32.totalorder %s172, %s174
      %p181 = scmp.eq.s32.totalorder %s26, 3
      %p182 = por %p180, %p181
      %p183 = scmp.ne.s32.totalorder %s174, %s175
      %p184 = scmp.eq.s32.totalorder %s26, 0
      %p185 = por %p183, %p184
      %p186 = scmp.ne.s32.totalorder %s174, %s175
      %p187 = scmp.eq.s32.totalorder %s27, 3
      %p188 = por %p186, %p187
      %p190 = scmp.ne.s32.totalorder %s175, %s189
      %p191 = scmp.eq.s32.totalorder %s27, 0
      %p192 = por %p190, %p191
      %s193 = ssub.s32 %s28, %s40
      %s194 = ssub.s32 %s29, %s36
      %s195 = sor.u32 %s193, %s194
      %p196 = scmp.eq.s32.totalorder %s195, 0
      %s198 = sadd.s32 %s197, 1
      %s199 = scalar_select %p196, %s197, %s198
      %p202 = pneg %p196
      %p203 = scmp.eq.s32.totalorder %s21, 3
      %p204 = por %p202, %p203
      %p205 = scmp.ne.s32.totalorder %s197, %s200
      %p206 = scmp.eq.s32.totalorder %s21, 0
      %p207 = por %p205, %p206
      %p208 = scmp.ne.s32.totalorder %s197, %s200
      %p209 = scmp.eq.s32.totalorder %s26, 3
      %p210 = por %p208, %p209
      %p211 = scmp.ne.s32.totalorder %s200, %s201
      %p212 = scmp.eq.s32.totalorder %s26, 0
      %p213 = por %p211, %p212
      %p214 = scmp.ne.s32.totalorder %s200, %s201
      %p215 = scmp.eq.s32.totalorder %s27, 3
      %p216 = por %p214, %p215
      %p218 = scmp.ne.s32.totalorder %s201, %s217
      %p219 = scmp.eq.s32.totalorder %s27, 0
      %p220 = por %p218, %p219
      %p221 = scmp.le.s32.totalorder 1, %s21
      %p222 = scmp.lt.s32.totalorder %s21, 5
      %p223 = pnand %p221, %p222
      %p224 = pneg %p223
      // Predicated region
      $region9: #{tpu_custom_call.1} parent=5 // pred_check
        _
      $region10: #{tpu_custom_call.1} parent=5 // pred_check_branch
        %226 = sbr.rel (%p223) target = $region12
      $region11: #{tpu_custom_call.1} parent=5 // pred_region
        %s227 = ssub.s32 %s21, 1
        // Predicated region
        $region13: #{tpu_custom_call.1} parent=11 // pred_check
          %p228 = pneg %p80
        $region14: #{tpu_custom_call.1} parent=11 // pred_check_branch
          %230 = sbr.rel (%p228) target = $region16
        $region15: #{tpu_custom_call.1} parent=11 // pred_region
          %s232 = ssub.s32 1024, 1024
          %233 = vsyncadd [#allocation8], %s232
          %s234 = sshll.u32 [#allocation7], 4
          %s235 = int_to_ptr.vmem [resolvable:$true] %s234
          %240 = dma.hbm_to_vmem [thread:$0]  %s1, 1024, %s235, [#allocation8], 64, 64, 4
        $region16: #{tpu_custom_call.1} parent=11 // pred_fallthru
          _
        // Predicated region
        $region17: #{tpu_custom_call.1} parent=11 // pred_check
          %p241 = pneg %p101
        $region18: #{tpu_custom_call.1} parent=11 // pred_check_branch
          %243 = sbr.rel (%p241) target = $region20
        $region19: #{tpu_custom_call.1} parent=11 // pred_region
          _
        $region20: #{tpu_custom_call.1} parent=11 // pred_fallthru
          _
        // Predicated region
        $region21: #{tpu_custom_call.1} parent=11 // pred_check
          %p244 = pneg %p122
        $region22: #{tpu_custom_call.1} parent=11 // pred_check_branch
          %246 = sbr.rel (%p244) target = $region24
        $region23: #{tpu_custom_call.1} parent=11 // pred_region
          %s248 = ssub.s32 9216, 9216
          %249 = vsyncadd [#allocation8], %s248
          %s250 = sshll.u32 [#allocation9], 4
          %s251 = int_to_ptr.vmem [resolvable:$true] %s250
          %256 = dma.hbm_to_vmem [thread:$0]  %s3, 9216, %s251, [#allocation8], 64, 64, 4
        $region24: #{tpu_custom_call.1} parent=11 // pred_fallthru
          _
        // Predicated region
        $region25: #{tpu_custom_call.1} parent=11 // pred_check
          %p257 = pneg %p143
        $region26: #{tpu_custom_call.1} parent=11 // pred_check_branch
          %259 = sbr.rel (%p257) target = $region28
        $region27: #{tpu_custom_call.1} parent=11 // pred_region
          _
        $region28: #{tpu_custom_call.1} parent=11 // pred_fallthru
          _
        // Predicated region
        $region29: #{tpu_custom_call.1} parent=11 // pred_check
          %p260 = pneg %p164
        $region30: #{tpu_custom_call.1} parent=11 // pred_check_branch
          %262 = sbr.rel (%p260) target = $region32
        $region31: #{tpu_custom_call.1} parent=11 // pred_region
          %s264 = ssub.s32 1024, 1024
          %265 = vsyncadd [#allocation11], %s264
          %s266 = sshll.u32 [#allocation10], 4
          %s267 = int_to_ptr.vmem [resolvable:$true] %s266
          %272 = dma.hbm_to_vmem [thread:$0]  %s5, 1024, %s267, [#allocation11], 64, 64, 4
        $region32: #{tpu_custom_call.1} parent=11 // pred_fallthru
          _
        // Predicated region
        $region33: #{tpu_custom_call.1} parent=11 // pred_check
          %p273 = pneg %p185
        $region34: #{tpu_custom_call.1} parent=11 // pred_check_branch
          %275 = sbr.rel (%p273) target = $region36
        $region35: #{tpu_custom_call.1} parent=11 // pred_region
          _
        $region36: #{tpu_custom_call.1} parent=11 // pred_fallthru
          _
      $region12: #{tpu_custom_call.1} parent=5 // pred_fallthru
        _
      %p276 = scmp.lt.s32.totalorder %s21, 4
      // Predicated region
      $region37: #{tpu_custom_call.1} parent=5 // pred_check
        %p277 = pneg %p276
      $region38: #{tpu_custom_call.1} parent=5 // pred_check_branch
        %279 = sbr.rel (%p277) target = $region40
      $region39: #{tpu_custom_call.1} parent=5 // pred_region
        // Predicated region
        $region41: #{tpu_custom_call.1} parent=39 // pred_check
          %p280 = pneg %p53
        $region42: #{tpu_custom_call.1} parent=39 // pred_check_branch
          %282 = sbr.rel (%p280) target = $region44
        $region43: #{tpu_custom_call.1} parent=39 // pred_region
          %s283 = sand.u32 %s43, 1
          %s284 = scalar_lea.sflag [#allocation5], %s283
          %s285 = sand.u32 %s43, 1
          %s286 = smul.addr %s285, 128
          %s287 = scalar_lea.vmem [#allocation4], %s286
          %s289 = ssub.s32 2048, 2048
          %290 = vsyncadd %s284, %s289
          %s291 = smul.addr %s28, 32
          %s292 = smul.addr %s291, 64
          %s293 = scalar_lea.hbm %s0, %s292
          %s294 = sshll.u32 %s287, 4
          %s295 = int_to_ptr.vmem [resolvable:$true] %s294
          %300 = dma.hbm_to_vmem [thread:$0]  %s293, 2048, %s295, %s284, 64, 64, 4
        $region44: #{tpu_custom_call.1} parent=39 // pred_fallthru
          _
      $region40: #{tpu_custom_call.1} parent=5 // pred_fallthru
        _
      %p301 = scmp.le.s32.totalorder 1, %s21
      %p302 = scmp.lt.s32.totalorder %s21, 5
      %p303 = pnand %p301, %p302
      %p304 = pneg %p303
      // Predicated region
      $region45: #{tpu_custom_call.1} parent=5 // pred_check
        _
      $region46: #{tpu_custom_call.1} parent=5 // pred_check_branch
        %306 = sbr.rel (%p303) target = $region48
      $region47: #{tpu_custom_call.1} parent=5 // pred_region
        %s307 = ssub.s32 %s21, 1
        %s308 = sand.u32 %s46, 1
        %s309 = scalar_lea.sflag [#allocation5], %s308
        %s310 = sand.u32 %s46, 1
        %s311 = smul.addr %s310, 128
        %s312 = scalar_lea.vmem [#allocation4], %s311
        // Predicated region
        $region49: #{tpu_custom_call.1} parent=47 // pred_check
          %p313 = pneg %p59
        $region50: #{tpu_custom_call.1} parent=47 // pred_check_branch
          %315 = sbr.rel (%p313) target = $region52
        $region51: #{tpu_custom_call.1} parent=47 // pred_region
          %316 = dma.done %s309, 2048
        $region52: #{tpu_custom_call.1} parent=47 // pred_fallthru
          _
        // Predicated region
        $region53: #{tpu_custom_call.1} parent=47 // pred_check
          %p317 = pneg %p80
        $region54: #{tpu_custom_call.1} parent=47 // pred_check_branch
          %319 = sbr.rel (%p317) target = $region56
        $region55: #{tpu_custom_call.1} parent=47 // pred_region
          %320 = dma.done [#allocation8], 1024
        $region56: #{tpu_custom_call.1} parent=47 // pred_fallthru
          _
        // Predicated region
        $region57: #{tpu_custom_call.1} parent=47 // pred_check
          %p321 = pneg %p122
        $region58: #{tpu_custom_call.1} parent=47 // pred_check_branch
          %323 = sbr.rel (%p321) target = $region60
        $region59: #{tpu_custom_call.1} parent=47 // pred_region
          %324 = dma.done [#allocation8], 9216
        $region60: #{tpu_custom_call.1} parent=47 // pred_fallthru
          _
        // Predicated region
        $region61: #{tpu_custom_call.1} parent=47 // pred_check
          %p325 = pneg %p164
        $region62: #{tpu_custom_call.1} parent=47 // pred_check_branch
          %327 = sbr.rel (%p325) target = $region64
        $region63: #{tpu_custom_call.1} parent=47 // pred_region
          %328 = dma.done [#allocation11], 1024
        $region64: #{tpu_custom_call.1} parent=47 // pred_fallthru
          _
        %s329 = sand.u32 %s46, 1
        %s330 = scalar_lea.sflag [#allocation5], %s329
        %s331 = sand.u32 %s46, 1
        %s332 = smul.addr %s331, 128
        %s333 = scalar_lea.vmem [#allocation4], %s332
        %p334 = pneg %p59
        %p335 = pneg %p56
        %p336 = pneg %p80
        %p337 = pneg %p77
        %p338 = pneg %p101
        %p339 = pneg %p98
        %p340 = pneg %p122
        %p341 = pneg %p119
        %p342 = pneg %p143
        %p343 = pneg %p140
        %p344 = pneg %p164
        %p345 = pneg %p161
        %p346 = pneg %p185
        %p347 = pneg %p182
        %p348 = pneg %p213
        %p349 = pneg %p210
        %s350 = sand.u32 %s200, 1
        %s351 = scalar_lea.sflag [#allocation6], %s350
        %s352 = sand.u32 %s200, 1
        %s353 = smul.addr %s352, 64
        %s354 = scalar_lea.vmem [#allocation12], %s353
        %s355 = smul.u32 8, %s31
        %s357 = smul.u32 %s31, 8
        %vm358 = vcmask 1040384
        %vm359 = vsmask.f32 256
        %vm360 = vmand %vm358, %vm359
        %v361 = vld [vmem:[#allocation2] sm:$0x1]
        %v362 = vsel %vm360, 0, %v361
        %363 = vst [vmem:[#allocation2] sm:$0x1] %v362
        %v364 = vld [vmem:[#allocation2 + $0xc] sm:$0x1]
        %v365 = vsel %vm360, 0, %v364
        %366 = vst [vmem:[#allocation2 + $0xc] sm:$0x1] %v365
        %v367 = vld [vmem:[#allocation2 + $0x18] sm:$0x1]
        %v368 = vsel %vm360, 0, %v367
        %369 = vst [vmem:[#allocation2 + $0x18] sm:$0x1] %v368
        %v370 = vld [vmem:[#allocation2 + $0x24] sm:$0x1]
        %v371 = vsel %vm360, 0, %v370
        %372 = vst [vmem:[#allocation2 + $0x24] sm:$0x1] %v371
        %v373 = vld [vmem:[#allocation2 + $0x30] sm:$0x1]
        %v374 = vsel %vm360, 0, %v373
        %375 = vst [vmem:[#allocation2 + $0x30] sm:$0x1] %v374
        %v376 = vld [vmem:[#allocation2 + $0x3c] sm:$0x1]
        %v377 = vsel %vm360, 0, %v376
        %378 = vst [vmem:[#allocation2 + $0x3c] sm:$0x1] %v377
        %v379 = vld [vmem:[#allocation2 + $0x48] sm:$0x1]
        %v380 = vsel %vm360, 0, %v379
        %381 = vst [vmem:[#allocation2 + $0x48] sm:$0x1] %v380
        %v382 = vld [vmem:[#allocation2 + $0x54] sm:$0x1]
        %v383 = vsel %vm360, 0, %v382
        %384 = vst [vmem:[#allocation2 + $0x54] sm:$0x1] %v383
        %v385 = vld [vmem:[#allocation2 + $0x60] sm:$0x1]
        %v386 = vsel %vm360, 0, %v385
        %387 = vst [vmem:[#allocation2 + $0x60] sm:$0x1] %v386
        %v388 = vld [vmem:[#allocation2 + $0x6c] sm:$0x1]
        %v389 = vsel %vm360, 0, %v388
        %390 = vst [vmem:[#allocation2 + $0x6c] sm:$0x1] %v389
        %vm391 = vsmask.f32 7938
        %vm392 = vmand %vm358, %vm391
        %v393 = vld [vmem:[#allocation2 + $0x8] sm:$0x1]
        %v394 = vsel %vm392, 0, %v393
        %395 = vst [vmem:[#allocation2 + $0x8] sm:$0x1] %v394
        %v396 = vld [vmem:[#allocation2 + $0x14] sm:$0x1]
        %v397 = vsel %vm392, 0, %v396
        %398 = vst [vmem:[#allocation2 + $0x14] sm:$0x1] %v397
        %v399 = vld [vmem:[#allocation2 + $0x20] sm:$0x1]
        %v400 = vsel %vm392, 0, %v399
        %401 = vst [vmem:[#allocation2 + $0x20] sm:$0x1] %v400
        %v402 = vld [vmem:[#allocation2 + $0x2c] sm:$0x1]
        %v403 = vsel %vm392, 0, %v402
        %404 = vst [vmem:[#allocation2 + $0x2c] sm:$0x1] %v403
        %v405 = vld [vmem:[#allocation2 + $0x38] sm:$0x1]
        %v406 = vsel %vm392, 0, %v405
        %407 = vst [vmem:[#allocation2 + $0x38] sm:$0x1] %v406
        %v408 = vld [vmem:[#allocation2 + $0x44] sm:$0x1]
        %v409 = vsel %vm392, 0, %v408
        %410 = vst [vmem:[#allocation2 + $0x44] sm:$0x1] %v409
        %v411 = vld [vmem:[#allocation2 + $0x50] sm:$0x1]
        %v412 = vsel %vm392, 0, %v411
        %413 = vst [vmem:[#allocation2 + $0x50] sm:$0x1] %v412
        %v414 = vld [vmem:[#allocation2 + $0x5c] sm:$0x1]
        %v415 = vsel %vm392, 0, %v414
        %416 = vst [vmem:[#allocation2 + $0x5c] sm:$0x1] %v415
        %v417 = vld [vmem:[#allocation2 + $0x68] sm:$0x1]
        %v418 = vsel %vm392, 0, %v417
        %419 = vst [vmem:[#allocation2 + $0x68] sm:$0x1] %v418
        %v420 = vld [vmem:[#allocation2 + $0x74] sm:$0x1]
        %v421 = vsel %vm392, 0, %v420
        %422 = vst [vmem:[#allocation2 + $0x74] sm:$0x1] %v421
        %s423 = smul.u32 %s357, 2
        %s424 = smul.addr %s423, 4
        %s425 = scalar_lea.vmem %s312, %s424 [#allocation4]
        %v426 = vld [vmem:[%s425] sm:$0xf]
        %v427 = vld [vmem:[%s425 + $0x4] sm:$0xf]
        %v428 = vld [vmem:[%s425 + $0x8] sm:$0xf]
        %v429 = vld [vmem:[%s425 + $0xc] sm:$0xf]
        %v430 = vld [vmem:[%s425 + $0x10] sm:$0xf]
        %v431 = vld [vmem:[%s425 + $0x14] sm:$0xf]
        %v432 = vld [vmem:[%s425 + $0x18] sm:$0xf]
        %v433 = vld [vmem:[%s425 + $0x1c] sm:$0xf]
        %v434 = vld [vmem:[%s425 + $0x20] sm:$0xf]
        %v435 = vld [vmem:[%s425 + $0x24] sm:$0xf]
        %v436 = vld [vmem:[%s425 + $0x28] sm:$0xf]
        %v437 = vld [vmem:[%s425 + $0x2c] sm:$0xf]
        %v438 = vld [vmem:[%s425 + $0x30] sm:$0xf]
        %v439 = vld [vmem:[%s425 + $0x34] sm:$0xf]
        %v440 = vld [vmem:[%s425 + $0x38] sm:$0xf]
        %v441 = vld [vmem:[%s425 + $0x3c] sm:$0xf]
        %v442 = vld [vmem:[#allocation7] sm:$0xf]
        %v443 = vld [vmem:[#allocation7 + $0x4] sm:$0xf]
        %v444 = vld [vmem:[#allocation7 + $0x8] sm:$0xf]
        %v445 = vld [vmem:[#allocation7 + $0xc] sm:$0xf]
        %v446 = vld [vmem:[#allocation7 + $0x10] sm:$0xf]
        %v447 = vld [vmem:[#allocation7 + $0x14] sm:$0xf]
        %v448 = vld [vmem:[#allocation7 + $0x18] sm:$0xf]
        %v449 = vld [vmem:[#allocation7 + $0x1c] sm:$0xf]
        %v450 = vld [vmem:[#allocation7 + $0x20] sm:$0xf]
        %v451 = vld [vmem:[#allocation7 + $0x24] sm:$0xf]
        %v452 = vld [vmem:[#allocation7 + $0x28] sm:$0xf]
        %v453 = vld [vmem:[#allocation7 + $0x2c] sm:$0xf]
        %v454 = vld [vmem:[#allocation7 + $0x30] sm:$0xf]
        %v455 = vld [vmem:[#allocation7 + $0x34] sm:$0xf]
        %v456 = vld [vmem:[#allocation7 + $0x38] sm:$0xf]
        %v457 = vld [vmem:[#allocation7 + $0x3c] sm:$0xf]
        %v458 = vld [vmem:[%s2] sm:$0x1]
        %v460 = vlaneseq
        %v461 = vshrl.u32 %v460, 7
        %v462 = vsub.s32 0, %v461
        %v463 = vrot.slane %v458, %v462
        %v481 = vunpack.c.l.b16 %v426
        %v482 = vunpack.c.l.b16 %v427
        %v483 = vunpack.c.l.b16 %v428
        %v484 = vunpack.c.l.b16 %v429
        %v485 = vunpack.c.l.b16 %v430
        %v486 = vunpack.c.l.b16 %v431
        %v487 = vunpack.c.l.b16 %v432
        %v488 = vunpack.c.l.b16 %v433
        %v489 = vunpack.c.l.b16 %v434
        %v490 = vunpack.c.l.b16 %v435
        %v491 = vunpack.c.l.b16 %v436
        %v492 = vunpack.c.l.b16 %v437
        %v493 = vunpack.c.l.b16 %v438
        %v494 = vunpack.c.l.b16 %v439
        %v495 = vunpack.c.l.b16 %v440
        %v496 = vunpack.c.l.b16 %v441
        %v497 = vpack.c.b16 %v482, %v481
        %v498 = vpack.c.b16 %v484, %v483
        %v499 = vpack.c.b16 %v486, %v485
        %v500 = vpack.c.b16 %v488, %v487
        %v501 = vpack.c.b16 %v490, %v489
        %v502 = vpack.c.b16 %v492, %v491
        %v503 = vpack.c.b16 %v494, %v493
        %v504 = vpack.c.b16 %v496, %v495
        %v529 = vunpack.c.l.b16 %v442
        %v530 = vunpack.c.l.b16 %v443
        %v531 = vunpack.c.l.b16 %v444
        %v532 = vunpack.c.l.b16 %v445
        %v533 = vunpack.c.l.b16 %v446
        %v534 = vunpack.c.l.b16 %v447
        %v535 = vunpack.c.l.b16 %v448
        %v536 = vunpack.c.l.b16 %v449
        %v537 = vunpack.c.l.b16 %v450
        %v538 = vunpack.c.l.b16 %v451
        %v539 = vunpack.c.l.b16 %v452
        %v540 = vunpack.c.l.b16 %v453
        %v541 = vunpack.c.l.b16 %v454
        %v542 = vunpack.c.l.b16 %v455
        %v543 = vunpack.c.l.b16 %v456
        %v544 = vunpack.c.l.b16 %v457
        %v545 = vpack.c.b16 %v530, %v529
        %v546 = vpack.c.b16 %v532, %v531
        %v547 = vpack.c.b16 %v534, %v533
        %v548 = vpack.c.b16 %v536, %v535
        %v549 = vpack.c.b16 %v538, %v537
        %v550 = vpack.c.b16 %v540, %v539
        %v551 = vpack.c.b16 %v542, %v541
        %v552 = vpack.c.b16 %v544, %v543
        %561 = vmatprep.subr.bf16.mxu0 0
        %562 = vmatpush1.bf16.msra.mxu0 %v552
        %563 = vmatprep.subr.bf16.mxu0 0
        %564 = vmatpush1.bf16.msra.mxu0 %v551
        %565 = vmatprep.subr.bf16.mxu0 0
        %566 = vmatpush1.bf16.msra.mxu0 %v550
        %567 = vmatprep.subr.bf16.mxu0 0
        %568 = vmatpush1.bf16.msra.mxu0 %v549
        %569 = vmatprep.subr.bf16.mxu0 0
        %570 = vmatpush1.bf16.msra.mxu0 %v548
        %571 = vmatprep.subr.bf16.mxu0 0
        %572 = vmatpush1.bf16.msra.mxu0 %v547
        %573 = vmatprep.subr.bf16.mxu0 0
        %574 = vmatpush1.bf16.msra.mxu0 %v546
        %575 = vmatprep.subr.bf16.mxu0 0
        %576 = vmatpush1.bf16.msra.mxu0 %v545
        %577 = vmatprep.subr.bf16.mxu0 0
        %578 = vmatpush2.bf16.msra.mxu0 0
        %579 = vmatprep.subr.bf16.mxu0 0
        %580 = vmatpush2.bf16.msra.mxu0 0
        %581 = vmatprep.subr.bf16.mxu0 0
        %582 = vmatpush2.bf16.msra.mxu0 0
        %583 = vmatprep.subr.bf16.mxu0 0
        %584 = vmatpush2.bf16.msra.mxu0 0
        %585 = vmatprep.subr.bf16.mxu0 0
        %586 = vmatpush2.bf16.msra.mxu0 0
        %587 = vmatprep.subr.bf16.mxu0 0
        %588 = vmatpush2.bf16.msra.mxu0 0
        %589 = vmatprep.subr.bf16.mxu0 0
        %590 = vmatpush2.bf16.msra.mxu0 0
        %591 = vmatprep.subr.bf16.mxu0 0
        %592 = vmatpush2.bf16.msra.mxu0 0
        %593 = vmatprep.mubr.bf16.mxu0 0
        %594 = vmatmul.mubr.bf16.gmra.mxu0 %v497
        %v595 = vpop.f32.mrf.mxu0
        %v596 = vadd.f32 %v463, %v595
        %v597 = vpop.f32.mrf.mxu0
        %v598 = vpop.f32.mrf.mxu0
        %v599 = vadd.f32 %v463, %v598
        %v600 = vpop.f32.mrf.mxu0
        %601 = vmatprep.mubr.bf16.mxu0 0
        %602 = vmatmul.mubr.bf16.gmra.mxu0 %v498
        %v603 = vpop.f32.mrf.mxu0
        %v604 = vadd.f32 %v463, %v603
        %v605 = vpop.f32.mrf.mxu0
        %v606 = vpop.f32.mrf.mxu0
        %v607 = vadd.f32 %v463, %v606
        %v608 = vpop.f32.mrf.mxu0
        %609 = vmatprep.mubr.bf16.mxu0 0
        %610 = vmatmul.mubr.bf16.gmra.mxu0 %v499
        %v611 = vpop.f32.mrf.mxu0
        %v612 = vadd.f32 %v463, %v611
        %v613 = vpop.f32.mrf.mxu0
        %v614 = vpop.f32.mrf.mxu0
        %v615 = vadd.f32 %v463, %v614
        %v616 = vpop.f32.mrf.mxu0
        %617 = vmatprep.mubr.bf16.mxu0 0
        %618 = vmatmul.mubr.bf16.gmra.mxu0 %v500
        %v619 = vpop.f32.mrf.mxu0
        %v620 = vadd.f32 %v463, %v619
        %v621 = vpop.f32.mrf.mxu0
        %v622 = vpop.f32.mrf.mxu0
        %v623 = vadd.f32 %v463, %v622
        %v624 = vpop.f32.mrf.mxu0
        %625 = vmatprep.mubr.bf16.mxu0 0
        %626 = vmatmul.mubr.bf16.gmra.mxu0 %v501
        %v627 = vpop.f32.mrf.mxu0
        %v628 = vadd.f32 %v463, %v627
        %v629 = vpop.f32.mrf.mxu0
        %v630 = vpop.f32.mrf.mxu0
        %v631 = vadd.f32 %v463, %v630
        %v632 = vpop.f32.mrf.mxu0
        %633 = vmatprep.mubr.bf16.mxu0 0
        %634 = vmatmul.mubr.bf16.gmra.mxu0 %v502
        %v635 = vpop.f32.mrf.mxu0
        %v636 = vadd.f32 %v463, %v635
        %v637 = vpop.f32.mrf.mxu0
        %v638 = vpop.f32.mrf.mxu0
        %v639 = vadd.f32 %v463, %v638
        %v640 = vpop.f32.mrf.mxu0
        %641 = vmatprep.mubr.bf16.mxu0 0
        %642 = vmatmul.mubr.bf16.gmra.mxu0 %v503
        %v643 = vpop.f32.mrf.mxu0
        %v644 = vadd.f32 %v463, %v643
        %v645 = vpop.f32.mrf.mxu0
        %v646 = vpop.f32.mrf.mxu0
        %v647 = vadd.f32 %v463, %v646
        %v648 = vpop.f32.mrf.mxu0
        %649 = vmatprep.mubr.bf16.mxu0 0
        %650 = vmatmul.mubr.bf16.gmra.mxu0 %v504
        %v651 = vpop.f32.mrf.mxu0
        %v652 = vadd.f32 %v463, %v651
        %v653 = vpop.f32.mrf.mxu0
        %v654 = vpop.f32.mrf.mxu0
        %v655 = vadd.f32 %v463, %v654
        %v656 = vpop.f32.mrf.mxu0
        %657 = vdwg.mxu0
        %v658 = vmax.f32 %v596, 0.0
        %v659 = vmax.f32 %v599, 0.0
        %v660 = vmax.f32 %v604, 0.0
        %v661 = vmax.f32 %v607, 0.0
        %v662 = vmax.f32 %v612, 0.0
        %v663 = vmax.f32 %v615, 0.0
        %v664 = vmax.f32 %v620, 0.0
        %v665 = vmax.f32 %v623, 0.0
        %v666 = vmax.f32 %v628, 0.0
        %v667 = vmax.f32 %v631, 0.0
        %v668 = vmax.f32 %v636, 0.0
        %v669 = vmax.f32 %v639, 0.0
        %v670 = vmax.f32 %v644, 0.0
        %v671 = vmax.f32 %v647, 0.0
        %v672 = vmax.f32 %v652, 0.0
        %v673 = vmax.f32 %v655, 0.0
        %v674 = vpack.c.bf16 %v659, %v658
        %v675 = vpack.c.bf16 %v661, %v660
        %v676 = vpack.c.bf16 %v663, %v662
        %v677 = vpack.c.bf16 %v665, %v664
        %v678 = vpack.c.bf16 %v667, %v666
        %v679 = vpack.c.bf16 %v669, %v668
        %v680 = vpack.c.bf16 %v671, %v670
        %v681 = vpack.c.bf16 %v673, %v672
        %v690 = vunpack.c.l.b16 %v674
        %v691 = vunpack.c.h.b16 %v674
        %v692 = vunpack.c.l.b16 %v675
        %v693 = vunpack.c.h.b16 %v675
        %v694 = vunpack.c.l.b16 %v676
        %v695 = vunpack.c.h.b16 %v676
        %v696 = vunpack.c.l.b16 %v677
        %v697 = vunpack.c.h.b16 %v677
        %v698 = vunpack.c.l.b16 %v678
        %v699 = vunpack.c.h.b16 %v678
        %v700 = vunpack.c.l.b16 %v679
        %v701 = vunpack.c.h.b16 %v679
        %v702 = vunpack.c.l.b16 %v680
        %v703 = vunpack.c.h.b16 %v680
        %v704 = vunpack.c.l.b16 %v681
        %v705 = vunpack.c.h.b16 %v681
        %v706 = vpack.c.b16 %v690, %v690
        %v707 = vpack.c.b16 %v691, %v691
        %v708 = vpack.c.b16 %v692, %v692
        %v709 = vpack.c.b16 %v693, %v693
        %v710 = vpack.c.b16 %v694, %v694
        %v711 = vpack.c.b16 %v695, %v695
        %v712 = vpack.c.b16 %v696, %v696
        %v713 = vpack.c.b16 %v697, %v697
        %v714 = vpack.c.b16 %v698, %v698
        %v715 = vpack.c.b16 %v699, %v699
        %v716 = vpack.c.b16 %v700, %v700
        %v717 = vpack.c.b16 %v701, %v701
        %v718 = vpack.c.b16 %v702, %v702
        %v719 = vpack.c.b16 %v703, %v703
        %v720 = vpack.c.b16 %v704, %v704
        %v721 = vpack.c.b16 %v705, %v705
        %vm722 = vsmask.f32 4368
        %vm723 = vmor %vm359, %vm722
        %v725 = vshrl.u32 %v706, 16
        %v727 = vrot.slane %v725, 7
        %v728 = vshll.u32 %v706, 16
        %v730 = vor.u32 %v727, %v728
        %v731 = vrot.slane %v727, 4
        %v733 = vshrl.u32 %v707, 16
        %v735 = vrot.slane %v733, 7
        %v736 = vshll.u32 %v707, 16
        %v738 = vor.u32 %v735, %v736
        %v739 = vsel %vm723, %v731, %v738
        %v740 = vrot.slane %v735, 4
        %v742 = vshrl.u32 %v708, 16
        %v744 = vrot.slane %v742, 7
        %v745 = vshll.u32 %v708, 16
        %v747 = vor.u32 %v744, %v745
        %v748 = vrot.slane %v744, 4
        %v750 = vshrl.u32 %v709, 16
        %v752 = vrot.slane %v750, 7
        %v753 = vshll.u32 %v709, 16
        %v755 = vor.u32 %v752, %v753
        %v756 = vsel %vm723, %v748, %v755
        %v757 = vrot.slane %v752, 4
        %v759 = vshrl.u32 %v710, 16
        %v761 = vrot.slane %v759, 7
        %v762 = vshll.u32 %v710, 16
        %v764 = vor.u32 %v761, %v762
        %v765 = vrot.slane %v761, 4
        %v767 = vshrl.u32 %v711, 16
        %v769 = vrot.slane %v767, 7
        %v770 = vshll.u32 %v711, 16
        %v772 = vor.u32 %v769, %v770
        %v773 = vsel %vm723, %v765, %v772
        %v774 = vrot.slane %v769, 4
        %v776 = vshrl.u32 %v712, 16
        %v778 = vrot.slane %v776, 7
        %v779 = vshll.u32 %v712, 16
        %v781 = vor.u32 %v778, %v779
        %v782 = vrot.slane %v778, 4
        %v784 = vshrl.u32 %v713, 16
        %v786 = vrot.slane %v784, 7
        %v787 = vshll.u32 %v713, 16
        %v789 = vor.u32 %v786, %v787
        %v790 = vsel %vm723, %v782, %v789
        %v791 = vrot.slane %v786, 4
        %v793 = vshrl.u32 %v714, 16
        %v795 = vrot.slane %v793, 7
        %v796 = vshll.u32 %v714, 16
        %v798 = vor.u32 %v795, %v796
        %v799 = vrot.slane %v795, 4
        %v801 = vshrl.u32 %v715, 16
        %v803 = vrot.slane %v801, 7
        %v804 = vshll.u32 %v715, 16
        %v806 = vor.u32 %v803, %v804
        %v807 = vsel %vm723, %v799, %v806
        %v808 = vrot.slane %v803, 4
        %v810 = vshrl.u32 %v716, 16
        %v812 = vrot.slane %v810, 7
        %v813 = vshll.u32 %v716, 16
        %v815 = vor.u32 %v812, %v813
        %v816 = vrot.slane %v812, 4
        %v818 = vshrl.u32 %v717, 16
        %v820 = vrot.slane %v818, 7
        %v821 = vshll.u32 %v717, 16
        %v823 = vor.u32 %v820, %v821
        %v824 = vsel %vm723, %v816, %v823
        %v825 = vrot.slane %v820, 4
        %v827 = vshrl.u32 %v718, 16
        %v829 = vrot.slane %v827, 7
        %v830 = vshll.u32 %v718, 16
        %v832 = vor.u32 %v829, %v830
        %v833 = vrot.slane %v829, 4
        %v835 = vshrl.u32 %v719, 16
        %v837 = vrot.slane %v835, 7
        %v838 = vshll.u32 %v719, 16
        %v840 = vor.u32 %v837, %v838
        %v841 = vsel %vm723, %v833, %v840
        %v842 = vrot.slane %v837, 4
        %v844 = vshrl.u32 %v720, 16
        %v846 = vrot.slane %v844, 7
        %v847 = vshll.u32 %v720, 16
        %v849 = vor.u32 %v846, %v847
        %v850 = vrot.slane %v846, 4
        %v852 = vshrl.u32 %v721, 16
        %v854 = vrot.slane %v852, 7
        %v855 = vshll.u32 %v721, 16
        %v857 = vor.u32 %v854, %v855
        %v858 = vsel %vm723, %v850, %v857
        %v859 = vrot.slane %v854, 4
        %s884 = scalar_lea.vmem [#allocation2], 12
        %vm885 = vcmask 1043456
        %vm886 = vmand %vm885, %vm391
        %v887 = vld [vmem:[%s884] sm:$0xf]
        %v888 = vsel %vm886, %v730, %v887
        %889 = vst [vmem:[%s884] sm:$0xf] %v888
        %890 = vst [vmem:[%s884 + $0x4] sm:$0xf] %v739
        %v891 = vld [vmem:[%s884 + $0x8] sm:$0x1]
        %v892 = vsel %vm360, %v740, %v891
        %893 = vst [vmem:[%s884 + $0x8] sm:$0x1] %v892
        %v894 = vld [vmem:[%s884 + $0xc] sm:$0xf]
        %v895 = vsel %vm886, %v747, %v894
        %896 = vst [vmem:[%s884 + $0xc] sm:$0xf] %v895
        %897 = vst [vmem:[%s884 + $0x10] sm:$0xf] %v756
        %v898 = vld [vmem:[%s884 + $0x14] sm:$0x1]
        %v899 = vsel %vm360, %v757, %v898
        %900 = vst [vmem:[%s884 + $0x14] sm:$0x1] %v899
        %v901 = vld [vmem:[%s884 + $0x18] sm:$0xf]
        %v902 = vsel %vm886, %v764, %v901
        %903 = vst [vmem:[%s884 + $0x18] sm:$0xf] %v902
        %904 = vst [vmem:[%s884 + $0x1c] sm:$0xf] %v773
        %v905 = vld [vmem:[%s884 + $0x20] sm:$0x1]
        %v906 = vsel %vm360, %v774, %v905
        %907 = vst [vmem:[%s884 + $0x20] sm:$0x1] %v906
        %v908 = vld [vmem:[%s884 + $0x24] sm:$0xf]
        %v909 = vsel %vm886, %v781, %v908
        %910 = vst [vmem:[%s884 + $0x24] sm:$0xf] %v909
        %911 = vst [vmem:[%s884 + $0x28] sm:$0xf] %v790
        %v912 = vld [vmem:[%s884 + $0x2c] sm:$0x1]
        %v913 = vsel %vm360, %v791, %v912
        %914 = vst [vmem:[%s884 + $0x2c] sm:$0x1] %v913
        %v915 = vld [vmem:[%s884 + $0x30] sm:$0xf]
        %v916 = vsel %vm886, %v798, %v915
        %917 = vst [vmem:[%s884 + $0x30] sm:$0xf] %v916
        %918 = vst [vmem:[%s884 + $0x34] sm:$0xf] %v807
        %v919 = vld [vmem:[%s884 + $0x38] sm:$0x1]
        %v920 = vsel %vm360, %v808, %v919
        %921 = vst [vmem:[%s884 + $0x38] sm:$0x1] %v920
        %v922 = vld [vmem:[%s884 + $0x3c] sm:$0xf]
        %v923 = vsel %vm886, %v815, %v922
        %924 = vst [vmem:[%s884 + $0x3c] sm:$0xf] %v923
        %925 = vst [vmem:[%s884 + $0x40] sm:$0xf] %v824
        %v926 = vld [vmem:[%s884 + $0x44] sm:$0x1]
        %v927 = vsel %vm360, %v825, %v926
        %928 = vst [vmem:[%s884 + $0x44] sm:$0x1] %v927
        %v929 = vld [vmem:[%s884 + $0x48] sm:$0xf]
        %v930 = vsel %vm886, %v832, %v929
        %931 = vst [vmem:[%s884 + $0x48] sm:$0xf] %v930
        %932 = vst [vmem:[%s884 + $0x4c] sm:$0xf] %v841
        %v933 = vld [vmem:[%s884 + $0x50] sm:$0x1]
        %v934 = vsel %vm360, %v842, %v933
        %935 = vst [vmem:[%s884 + $0x50] sm:$0x1] %v934
        %v936 = vld [vmem:[%s884 + $0x54] sm:$0xf]
        %v937 = vsel %vm886, %v849, %v936
        %938 = vst [vmem:[%s884 + $0x54] sm:$0xf] %v937
        %939 = vst [vmem:[%s884 + $0x58] sm:$0xf] %v858
        %v940 = vld [vmem:[%s884 + $0x5c] sm:$0x1]
        %v941 = vsel %vm360, %v859, %v940
        %942 = vst [vmem:[%s884 + $0x5c] sm:$0x1] %v941
        %p943 = scmp.gt.s32.totalorder %s31, 0
        // Predicated region
        $region65: #{tpu_custom_call.1} parent=47 // pred_check
          %p944 = pneg %p943
        $region66: #{tpu_custom_call.1} parent=47 // pred_check_branch
          %946 = sbr.rel (%p944) target = $region68
        $region67: #{tpu_custom_call.1} parent=47 // pred_region
          %s947 = ssub.s32 %s357, 1
          %s948 = smul.u32 %s947, 2
          %s949 = smul.addr %s948, 4
          %s950 = scalar_lea.vmem %s312, %s949 [#allocation4]
          %v951 = vld [vmem:[%s950] sm:$0xf]
          %v952 = vld [vmem:[%s950 + $0x4] sm:$0xf]
          %v953 = vld [vmem:[#allocation7] sm:$0xf]
          %v954 = vld [vmem:[#allocation7 + $0x4] sm:$0xf]
          %v955 = vld [vmem:[#allocation7 + $0x8] sm:$0xf]
          %v956 = vld [vmem:[#allocation7 + $0xc] sm:$0xf]
          %v957 = vld [vmem:[#allocation7 + $0x10] sm:$0xf]
          %v958 = vld [vmem:[#allocation7 + $0x14] sm:$0xf]
          %v959 = vld [vmem:[#allocation7 + $0x18] sm:$0xf]
          %v960 = vld [vmem:[#allocation7 + $0x1c] sm:$0xf]
          %v961 = vld [vmem:[#allocation7 + $0x20] sm:$0xf]
          %v962 = vld [vmem:[#allocation7 + $0x24] sm:$0xf]
          %v963 = vld [vmem:[#allocation7 + $0x28] sm:$0xf]
          %v964 = vld [vmem:[#allocation7 + $0x2c] sm:$0xf]
          %v965 = vld [vmem:[#allocation7 + $0x30] sm:$0xf]
          %v966 = vld [vmem:[#allocation7 + $0x34] sm:$0xf]
          %v967 = vld [vmem:[#allocation7 + $0x38] sm:$0xf]
          %v968 = vld [vmem:[#allocation7 + $0x3c] sm:$0xf]
          %v969 = vld [vmem:[%s2] sm:$0x1]
          %v971 = vlaneseq
          %v972 = vshrl.u32 %v971, 7
          %v973 = vsub.s32 0, %v972
          %v974 = vrot.slane %v969, %v973
          %v978 = vunpack.c.l.b16 %v951
          %v979 = vunpack.c.l.b16 %v952
          %v980 = vpack.c.b16 %v979, %v978
          %v998 = vunpack.c.l.b16 %v953
          %v999 = vunpack.c.l.b16 %v954
          %v1000 = vunpack.c.l.b16 %v955
          %v1001 = vunpack.c.l.b16 %v956
          %v1002 = vunpack.c.l.b16 %v957
          %v1003 = vunpack.c.l.b16 %v958
          %v1004 = vunpack.c.l.b16 %v959
          %v1005 = vunpack.c.l.b16 %v960
          %v1006 = vunpack.c.l.b16 %v961
          %v1007 = vunpack.c.l.b16 %v962
          %v1008 = vunpack.c.l.b16 %v963
          %v1009 = vunpack.c.l.b16 %v964
          %v1010 = vunpack.c.l.b16 %v965
          %v1011 = vunpack.c.l.b16 %v966
          %v1012 = vunpack.c.l.b16 %v967
          %v1013 = vunpack.c.l.b16 %v968
          %v1014 = vpack.c.b16 %v999, %v998
          %v1015 = vpack.c.b16 %v1001, %v1000
          %v1016 = vpack.c.b16 %v1003, %v1002
          %v1017 = vpack.c.b16 %v1005, %v1004
          %v1018 = vpack.c.b16 %v1007, %v1006
          %v1019 = vpack.c.b16 %v1009, %v1008
          %v1020 = vpack.c.b16 %v1011, %v1010
          %v1021 = vpack.c.b16 %v1013, %v1012
          %1030 = vmatprep.subr.bf16.mxu0 0
          %1031 = vmatpush1.bf16.msra.mxu0 %v1021
          %1032 = vmatprep.subr.bf16.mxu0 0
          %1033 = vmatpush1.bf16.msra.mxu0 %v1020
          %1034 = vmatprep.subr.bf16.mxu0 0
          %1035 = vmatpush1.bf16.msra.mxu0 %v1019
          %1036 = vmatprep.subr.bf16.mxu0 0
          %1037 = vmatpush1.bf16.msra.mxu0 %v1018
          %1038 = vmatprep.subr.bf16.mxu0 0
          %1039 = vmatpush1.bf16.msra.mxu0 %v1017
          %1040 = vmatprep.subr.bf16.mxu0 0
          %1041 = vmatpush1.bf16.msra.mxu0 %v1016
          %1042 = vmatprep.subr.bf16.mxu0 0
          %1043 = vmatpush1.bf16.msra.mxu0 %v1015
          %1044 = vmatprep.subr.bf16.mxu0 0
          %1045 = vmatpush1.bf16.msra.mxu0 %v1014
          %1046 = vmatprep.subr.bf16.mxu0 0
          %1047 = vmatpush2.bf16.msra.mxu0 0
          %1048 = vmatprep.subr.bf16.mxu0 0
          %1049 = vmatpush2.bf16.msra.mxu0 0
          %1050 = vmatprep.subr.bf16.mxu0 0
          %1051 = vmatpush2.bf16.msra.mxu0 0
          %1052 = vmatprep.subr.bf16.mxu0 0
          %1053 = vmatpush2.bf16.msra.mxu0 0
          %1054 = vmatprep.subr.bf16.mxu0 0
          %1055 = vmatpush2.bf16.msra.mxu0 0
          %1056 = vmatprep.subr.bf16.mxu0 0
          %1057 = vmatpush2.bf16.msra.mxu0 0
          %1058 = vmatprep.subr.bf16.mxu0 0
          %1059 = vmatpush2.bf16.msra.mxu0 0
          %1060 = vmatprep.subr.bf16.mxu0 0
          %1061 = vmatpush2.bf16.msra.mxu0 0
          %1062 = vmatprep.mubr.bf16.mxu0 0
          %1063 = vmatmul.mubr.bf16.gmra.mxu0 %v980
          %v1064 = vpop.f32.mrf.mxu0
          %v1065 = vadd.f32 %v974, %v1064
          %v1066 = vpop.f32.mrf.mxu0
          %v1067 = vpop.f32.mrf.mxu0
          %v1068 = vadd.f32 %v974, %v1067
          %v1069 = vpop.f32.mrf.mxu0
          %1070 = vdwg.mxu0
          %v1071 = vmax.f32 %v1065, 0.0
          %v1072 = vmax.f32 %v1068, 0.0
          %v1073 = vpack.c.bf16 %v1072, %v1071
          %v1075 = vunpack.c.l.b16 %v1073
          %v1076 = vunpack.c.h.b16 %v1073
          %v1077 = vpack.c.b16 %v1075, %v1075
          %v1078 = vpack.c.b16 %v1076, %v1076
          %v1080 = vshrl.u32 %v1077, 16
          %v1082 = vrot.slane %v1080, 7
          %v1083 = vshll.u32 %v1077, 16
          %v1085 = vor.u32 %v1082, %v1083
          %v1086 = vrot.slane %v1082, 4
          %v1088 = vshrl.u32 %v1078, 16
          %v1090 = vrot.slane %v1088, 7
          %v1091 = vshll.u32 %v1078, 16
          %v1093 = vor.u32 %v1090, %v1091
          %v1094 = vsel %vm723, %v1086, %v1093
          %v1095 = vrot.slane %v1090, 4
          %v1099 = vld [vmem:[#allocation2] sm:$0xf]
          %v1100 = vsel %vm886, %v1085, %v1099
          %1101 = vst [vmem:[#allocation2] sm:$0xf] %v1100
          %1102 = vst [vmem:[#allocation2 + $0x4] sm:$0xf] %v1094
          %v1103 = vld [vmem:[#allocation2 + $0x8] sm:$0x1]
          %v1104 = vsel %vm360, %v1095, %v1103
          %1105 = vst [vmem:[#allocation2 + $0x8] sm:$0x1] %v1104
        $region68: #{tpu_custom_call.1} parent=47 // pred_fallthru
          _
        %p1106 = scmp.eq.s32.totalorder %s31, 0
        // Predicated region
        $region69: #{tpu_custom_call.1} parent=47 // pred_check
          %p1107 = pneg %p1106
        $region70: #{tpu_custom_call.1} parent=47 // pred_check_branch
          %1109 = sbr.rel (%p1107) target = $region72
        $region71: #{tpu_custom_call.1} parent=47 // pred_region
          %1110 = vst [vmem:[#allocation2] sm:$0xf] 0
          %1111 = vst [vmem:[#allocation2 + $0x4] sm:$0xf] 0
          %1112 = vst [vmem:[#allocation2 + $0x8] sm:$0xf] 0
        $region72: #{tpu_custom_call.1} parent=47 // pred_fallthru
          _
        %p1113 = scmp.lt.s32.totalorder %s31, 1
        // Predicated region
        $region73: #{tpu_custom_call.1} parent=47 // pred_check
          %p1114 = pneg %p1113
        $region74: #{tpu_custom_call.1} parent=47 // pred_check_branch
          %1116 = sbr.rel (%p1114) target = $region76
        $region75: #{tpu_custom_call.1} parent=47 // pred_region
          %s1117 = sadd.s32 %s357, 8
          %s1118 = smul.u32 %s1117, 2
          %s1119 = smul.addr %s1118, 4
          %s1120 = scalar_lea.vmem %s312, %s1119 [#allocation4]
          %v1121 = vld [vmem:[%s1120] sm:$0xf]
          %v1122 = vld [vmem:[%s1120 + $0x4] sm:$0xf]
          %v1123 = vld [vmem:[#allocation7] sm:$0xf]
          %v1124 = vld [vmem:[#allocation7 + $0x4] sm:$0xf]
          %v1125 = vld [vmem:[#allocation7 + $0x8] sm:$0xf]
          %v1126 = vld [vmem:[#allocation7 + $0xc] sm:$0xf]
          %v1127 = vld [vmem:[#allocation7 + $0x10] sm:$0xf]
          %v1128 = vld [vmem:[#allocation7 + $0x14] sm:$0xf]
          %v1129 = vld [vmem:[#allocation7 + $0x18] sm:$0xf]
          %v1130 = vld [vmem:[#allocation7 + $0x1c] sm:$0xf]
          %v1131 = vld [vmem:[#allocation7 + $0x20] sm:$0xf]
          %v1132 = vld [vmem:[#allocation7 + $0x24] sm:$0xf]
          %v1133 = vld [vmem:[#allocation7 + $0x28] sm:$0xf]
          %v1134 = vld [vmem:[#allocation7 + $0x2c] sm:$0xf]
          %v1135 = vld [vmem:[#allocation7 + $0x30] sm:$0xf]
          %v1136 = vld [vmem:[#allocation7 + $0x34] sm:$0xf]
          %v1137 = vld [vmem:[#allocation7 + $0x38] sm:$0xf]
          %v1138 = vld [vmem:[#allocation7 + $0x3c] sm:$0xf]
          %v1139 = vld [vmem:[%s2] sm:$0x1]
          %v1141 = vlaneseq
          %v1142 = vshrl.u32 %v1141, 7
          %v1143 = vsub.s32 0, %v1142
          %v1144 = vrot.slane %v1139, %v1143
          %v1148 = vunpack.c.l.b16 %v1121
          %v1149 = vunpack.c.l.b16 %v1122
          %v1150 = vpack.c.b16 %v1149, %v1148
          %v1168 = vunpack.c.l.b16 %v1123
          %v1169 = vunpack.c.l.b16 %v1124
          %v1170 = vunpack.c.l.b16 %v1125
          %v1171 = vunpack.c.l.b16 %v1126
          %v1172 = vunpack.c.l.b16 %v1127
          %v1173 = vunpack.c.l.b16 %v1128
          %v1174 = vunpack.c.l.b16 %v1129
          %v1175 = vunpack.c.l.b16 %v1130
          %v1176 = vunpack.c.l.b16 %v1131
          %v1177 = vunpack.c.l.b16 %v1132
          %v1178 = vunpack.c.l.b16 %v1133
          %v1179 = vunpack.c.l.b16 %v1134
          %v1180 = vunpack.c.l.b16 %v1135
          %v1181 = vunpack.c.l.b16 %v1136
          %v1182 = vunpack.c.l.b16 %v1137
          %v1183 = vunpack.c.l.b16 %v1138
          %v1184 = vpack.c.b16 %v1169, %v1168
          %v1185 = vpack.c.b16 %v1171, %v1170
          %v1186 = vpack.c.b16 %v1173, %v1172
          %v1187 = vpack.c.b16 %v1175, %v1174
          %v1188 = vpack.c.b16 %v1177, %v1176
          %v1189 = vpack.c.b16 %v1179, %v1178
          %v1190 = vpack.c.b16 %v1181, %v1180
          %v1191 = vpack.c.b16 %v1183, %v1182
          %1200 = vmatprep.subr.bf16.mxu0 0
          %1201 = vmatpush1.bf16.msra.mxu0 %v1191
          %1202 = vmatprep.subr.bf16.mxu0 0
          %1203 = vmatpush1.bf16.msra.mxu0 %v1190
          %1204 = vmatprep.subr.bf16.mxu0 0
          %1205 = vmatpush1.bf16.msra.mxu0 %v1189
          %1206 = vmatprep.subr.bf16.mxu0 0
          %1207 = vmatpush1.bf16.msra.mxu0 %v1188
          %1208 = vmatprep.subr.bf16.mxu0 0
          %1209 = vmatpush1.bf16.msra.mxu0 %v1187
          %1210 = vmatprep.subr.bf16.mxu0 0
          %1211 = vmatpush1.bf16.msra.mxu0 %v1186
          %1212 = vmatprep.subr.bf16.mxu0 0
          %1213 = vmatpush1.bf16.msra.mxu0 %v1185
          %1214 = vmatprep.subr.bf16.mxu0 0
          %1215 = vmatpush1.bf16.msra.mxu0 %v1184
          %1216 = vmatprep.subr.bf16.mxu0 0
          %1217 = vmatpush2.bf16.msra.mxu0 0
          %1218 = vmatprep.subr.bf16.mxu0 0
          %1219 = vmatpush2.bf16.msra.mxu0 0
          %1220 = vmatprep.subr.bf16.mxu0 0
          %1221 = vmatpush2.bf16.msra.mxu0 0
          %1222 = vmatprep.subr.bf16.mxu0 0
          %1223 = vmatpush2.bf16.msra.mxu0 0
          %1224 = vmatprep.subr.bf16.mxu0 0
          %1225 = vmatpush2.bf16.msra.mxu0 0
          %1226 = vmatprep.subr.bf16.mxu0 0
          %1227 = vmatpush2.bf16.msra.mxu0 0
          %1228 = vmatprep.subr.bf16.mxu0 0
          %1229 = vmatpush2.bf16.msra.mxu0 0
          %1230 = vmatprep.subr.bf16.mxu0 0
          %1231 = vmatpush2.bf16.msra.mxu0 0
          %1232 = vmatprep.mubr.bf16.mxu0 0
          %1233 = vmatmul.mubr.bf16.gmra.mxu0 %v1150
          %v1234 = vpop.f32.mrf.mxu0
          %v1235 = vadd.f32 %v1144, %v1234
          %v1236 = vpop.f32.mrf.mxu0
          %v1237 = vpop.f32.mrf.mxu0
          %v1238 = vadd.f32 %v1144, %v1237
          %v1239 = vpop.f32.mrf.mxu0
          %1240 = vdwg.mxu0
          %v1241 = vmax.f32 %v1235, 0.0
          %v1242 = vmax.f32 %v1238, 0.0
          %v1243 = vpack.c.bf16 %v1242, %v1241
          %v1245 = vunpack.c.l.b16 %v1243
          %v1246 = vunpack.c.h.b16 %v1243
          %v1247 = vpack.c.b16 %v1245, %v1245
          %v1248 = vpack.c.b16 %v1246, %v1246
          %v1250 = vshrl.u32 %v1247, 16
          %v1252 = vrot.slane %v1250, 7
          %v1253 = vshll.u32 %v1247, 16
          %v1255 = vor.u32 %v1252, %v1253
          %v1256 = vrot.slane %v1252, 4
          %v1258 = vshrl.u32 %v1248, 16
          %v1260 = vrot.slane %v1258, 7
          %v1261 = vshll.u32 %v1248, 16
          %v1263 = vor.u32 %v1260, %v1261
          %v1264 = vsel %vm723, %v1256, %v1263
          %v1265 = vrot.slane %v1260, 4
          %s1269 = scalar_lea.vmem [#allocation2], 108
          %v1270 = vld [vmem:[%s1269] sm:$0xf]
          %v1271 = vsel %vm886, %v1255, %v1270
          %1272 = vst [vmem:[%s1269] sm:$0xf] %v1271
          %1273 = vst [vmem:[%s1269 + $0x4] sm:$0xf] %v1264
          %v1274 = vld [vmem:[%s1269 + $0x8] sm:$0x1]
          %v1275 = vsel %vm360, %v1265, %v1274
          %1276 = vst [vmem:[%s1269 + $0x8] sm:$0x1] %v1275
        $region76: #{tpu_custom_call.1} parent=47 // pred_fallthru
          _
        %p1277 = scmp.eq.s32.totalorder %s31, 1
        // Predicated region
        $region77: #{tpu_custom_call.1} parent=47 // pred_check
          %p1278 = pneg %p1277
        $region78: #{tpu_custom_call.1} parent=47 // pred_check_branch
          %1280 = sbr.rel (%p1278) target = $region80
        $region79: #{tpu_custom_call.1} parent=47 // pred_region
          %s1281 = scalar_lea.vmem [#allocation2], 108
          %1282 = vst [vmem:[%s1281] sm:$0xf] 0
          %1283 = vst [vmem:[%s1281 + $0x4] sm:$0xf] 0
          %1284 = vst [vmem:[%s1281 + $0x8] sm:$0xf] 0
        $region80: #{tpu_custom_call.1} parent=47 // pred_fallthru
          _
        %v1285 = vld [vmem:[#allocation2] sm:$0xf]
        %v1286 = vld [vmem:[#allocation2 + $0x4] sm:$0xf]
        %v1287 = vld [vmem:[#allocation2 + $0xc] sm:$0xf]
        %v1288 = vld [vmem:[#allocation2 + $0x10] sm:$0xf]
        %v1289 = vld [vmem:[#allocation2 + $0x18] sm:$0xf]
        %v1290 = vld [vmem:[#allocation2 + $0x1c] sm:$0xf]
        %v1291 = vld [vmem:[#allocation2 + $0x24] sm:$0xf]
        %v1292 = vld [vmem:[#allocation2 + $0x28] sm:$0xf]
        %v1293 = vld [vmem:[#allocation2 + $0x30] sm:$0xf]
        %v1294 = vld [vmem:[#allocation2 + $0x34] sm:$0xf]
        %v1295 = vld [vmem:[#allocation2 + $0x3c] sm:$0xf]
        %v1296 = vld [vmem:[#allocation2 + $0x40] sm:$0xf]
        %v1297 = vld [vmem:[#allocation2 + $0x48] sm:$0xf]
        %v1298 = vld [vmem:[#allocation2 + $0x4c] sm:$0xf]
        %v1299 = vld [vmem:[#allocation2 + $0x54] sm:$0xf]
        %v1300 = vld [vmem:[#allocation2 + $0x58] sm:$0xf]
        %1301 = vst [vmem:[#allocation3] sm:$0xf] %v1285
        %1302 = vst [vmem:[#allocation3 + $0x24] sm:$0xf] %v1286
        %1303 = vst [vmem:[#allocation3 + $0x48] sm:$0xf] %v1287
        %1304 = vst [vmem:[#allocation3 + $0x6c] sm:$0xf] %v1288
        %1305 = vst [vmem:[#allocation3 + $0x90] sm:$0xf] %v1289
        %1306 = vst [vmem:[#allocation3 + $0xb4] sm:$0xf] %v1290
        %1307 = vst [vmem:[#allocation3 + $0xd8] sm:$0xf] %v1291
        %1308 = vst [vmem:[#allocation3 + $0xfc] sm:$0xf] %v1292
        %1309 = vst [vmem:[#allocation3 + $0x120] sm:$0xf] %v1293
        %1310 = vst [vmem:[#allocation3 + $0x144] sm:$0xf] %v1294
        %1311 = vst [vmem:[#allocation3 + $0x168] sm:$0xf] %v1295
        %1312 = vst [vmem:[#allocation3 + $0x18c] sm:$0xf] %v1296
        %1313 = vst [vmem:[#allocation3 + $0x1b0] sm:$0xf] %v1297
        %1314 = vst [vmem:[#allocation3 + $0x1d4] sm:$0xf] %v1298
        %1315 = vst [vmem:[#allocation3 + $0x1f8] sm:$0xf] %v1299
        %1316 = vst [vmem:[#allocation3 + $0x21c] sm:$0xf] %v1300
        %v1317 = vld [vmem:[#allocation2] sm:$0xf]
        %v1318 = vld [vmem:[#allocation2 + $0x4] sm:$0xf]
        %v1319 = vld [vmem:[#allocation2 + $0x8] sm:$0x1]
        %v1320 = vld [vmem:[#allocation2 + $0xc] sm:$0xf]
        %v1321 = vld [vmem:[#allocation2 + $0x10] sm:$0xf]
        %v1322 = vld [vmem:[#allocation2 + $0x14] sm:$0x1]
        %v1323 = vld [vmem:[#allocation2 + $0x18] sm:$0xf]
        %v1324 = vld [vmem:[#allocation2 + $0x1c] sm:$0xf]
        %v1325 = vld [vmem:[#allocation2 + $0x20] sm:$0x1]
        %v1326 = vld [vmem:[#allocation2 + $0x24] sm:$0xf]
        %v1327 = vld [vmem:[#allocation2 + $0x28] sm:$0xf]
        %v1328 = vld [vmem:[#allocation2 + $0x2c] sm:$0x1]
        %v1329 = vld [vmem:[#allocation2 + $0x30] sm:$0xf]
        %v1330 = vld [vmem:[#allocation2 + $0x34] sm:$0xf]
        %v1331 = vld [vmem:[#allocation2 + $0x38] sm:$0x1]
        %v1332 = vld [vmem:[#allocation2 + $0x3c] sm:$0xf]
        %v1333 = vld [vmem:[#allocation2 + $0x40] sm:$0xf]
        %v1334 = vld [vmem:[#allocation2 + $0x44] sm:$0x1]
        %v1335 = vld [vmem:[#allocation2 + $0x48] sm:$0xf]
        %v1336 = vld [vmem:[#allocation2 + $0x4c] sm:$0xf]
        %v1337 = vld [vmem:[#allocation2 + $0x50] sm:$0x1]
        %v1338 = vld [vmem:[#allocation2 + $0x54] sm:$0xf]
        %v1339 = vld [vmem:[#allocation2 + $0x58] sm:$0xf]
        %v1340 = vld [vmem:[#allocation2 + $0x5c] sm:$0x1]
        %vm1341 = vsmask.f32 3328
        %vm1342 = vsmask.f32 7440
        %vm1343 = vmor %vm1341, %vm1342
        %v1345 = vshrl.u32 %v1317, 16
        %v1347 = vrot.slane %v1345, 4
        %v1348 = vshll.u32 %v1317, 16
        %v1350 = vrot.slane %v1348, 5
        %v1351 = vor.u32 %v1347, %v1350
        %v1352 = vrot.slane %v1351, 4
        %v1354 = vshll.u32 %v1318, 16
        %v1356 = vrot.slane %v1354, 5
        %v1357 = vsel %vm1343, %v1352, %v1356
        %v1358 = vshrl.u32 %v1318, 16
        %v1360 = vrot.slane %v1358, 4
        %v1361 = vor.u32 %v1360, %v1356
        %v1362 = vrot.slane %v1361, 4
        %v1364 = vshll.u32 %v1319, 16
        %v1366 = vrot.slane %v1364, 5
        %v1367 = vsel %vm1343, %v1362, %v1366
        %v1369 = vshrl.u32 %v1320, 16
        %v1371 = vrot.slane %v1369, 4
        %v1372 = vshll.u32 %v1320, 16
        %v1374 = vrot.slane %v1372, 5
        %v1375 = vor.u32 %v1371, %v1374
        %v1376 = vrot.slane %v1375, 4
        %v1378 = vshll.u32 %v1321, 16
        %v1380 = vrot.slane %v1378, 5
        %v1381 = vsel %vm1343, %v1376, %v1380
        %v1382 = vshrl.u32 %v1321, 16
        %v1384 = vrot.slane %v1382, 4
        %v1385 = vor.u32 %v1384, %v1380
        %v1386 = vrot.slane %v1385, 4
        %v1388 = vshll.u32 %v1322, 16
        %v1390 = vrot.slane %v1388, 5
        %v1391 = vsel %vm1343, %v1386, %v1390
        %v1393 = vshrl.u32 %v1323, 16
        %v1395 = vrot.slane %v1393, 4
        %v1396 = vshll.u32 %v1323, 16
        %v1398 = vrot.slane %v1396, 5
        %v1399 = vor.u32 %v1395, %v1398
        %v1400 = vrot.slane %v1399, 4
        %v1402 = vshll.u32 %v1324, 16
        %v1404 = vrot.slane %v1402, 5
        %v1405 = vsel %vm1343, %v1400, %v1404
        %v1406 = vshrl.u32 %v1324, 16
        %v1408 = vrot.slane %v1406, 4
        %v1409 = vor.u32 %v1408, %v1404
        %v1410 = vrot.slane %v1409, 4
        %v1412 = vshll.u32 %v1325, 16
        %v1414 = vrot.slane %v1412, 5
        %v1415 = vsel %vm1343, %v1410, %v1414
        %v1417 = vshrl.u32 %v1326, 16
        %v1419 = vrot.slane %v1417, 4
        %v1420 = vshll.u32 %v1326, 16
        %v1422 = vrot.slane %v1420, 5
        %v1423 = vor.u32 %v1419, %v1422
        %v1424 = vrot.slane %v1423, 4
        %v1426 = vshll.u32 %v1327, 16
        %v1428 = vrot.slane %v1426, 5
        %v1429 = vsel %vm1343, %v1424, %v1428
        %v1430 = vshrl.u32 %v1327, 16
        %v1432 = vrot.slane %v1430, 4
        %v1433 = vor.u32 %v1432, %v1428
        %v1434 = vrot.slane %v1433, 4
        %v1436 = vshll.u32 %v1328, 16
        %v1438 = vrot.slane %v1436, 5
        %v1439 = vsel %vm1343, %v1434, %v1438
        %v1441 = vshrl.u32 %v1329, 16
        %v1443 = vrot.slane %v1441, 4
        %v1444 = vshll.u32 %v1329, 16
        %v1446 = vrot.slane %v1444, 5
        %v1447 = vor.u32 %v1443, %v1446
        %v1448 = vrot.slane %v1447, 4
        %v1450 = vshll.u32 %v1330, 16
        %v1452 = vrot.slane %v1450, 5
        %v1453 = vsel %vm1343, %v1448, %v1452
        %v1454 = vshrl.u32 %v1330, 16
        %v1456 = vrot.slane %v1454, 4
        %v1457 = vor.u32 %v1456, %v1452
        %v1458 = vrot.slane %v1457, 4
        %v1460 = vshll.u32 %v1331, 16
        %v1462 = vrot.slane %v1460, 5
        %v1463 = vsel %vm1343, %v1458, %v1462
        %v1465 = vshrl.u32 %v1332, 16
        %v1467 = vrot.slane %v1465, 4
        %v1468 = vshll.u32 %v1332, 16
        %v1470 = vrot.slane %v1468, 5
        %v1471 = vor.u32 %v1467, %v1470
        %v1472 = vrot.slane %v1471, 4
        %v1474 = vshll.u32 %v1333, 16
        %v1476 = vrot.slane %v1474, 5
        %v1477 = vsel %vm1343, %v1472, %v1476
        %v1478 = vshrl.u32 %v1333, 16
        %v1480 = vrot.slane %v1478, 4
        %v1481 = vor.u32 %v1480, %v1476
        %v1482 = vrot.slane %v1481, 4
        %v1484 = vshll.u32 %v1334, 16
        %v1486 = vrot.slane %v1484, 5
        %v1487 = vsel %vm1343, %v1482, %v1486
        %v1489 = vshrl.u32 %v1335, 16
        %v1491 = vrot.slane %v1489, 4
        %v1492 = vshll.u32 %v1335, 16
        %v1494 = vrot.slane %v1492, 5
        %v1495 = vor.u32 %v1491, %v1494
        %v1496 = vrot.slane %v1495, 4
        %v1498 = vshll.u32 %v1336, 16
        %v1500 = vrot.slane %v1498, 5
        %v1501 = vsel %vm1343, %v1496, %v1500
        %v1502 = vshrl.u32 %v1336, 16
        %v1504 = vrot.slane %v1502, 4
        %v1505 = vor.u32 %v1504, %v1500
        %v1506 = vrot.slane %v1505, 4
        %v1508 = vshll.u32 %v1337, 16
        %v1510 = vrot.slane %v1508, 5
        %v1511 = vsel %vm1343, %v1506, %v1510
        %v1513 = vshrl.u32 %v1338, 16
        %v1515 = vrot.slane %v1513, 4
        %v1516 = vshll.u32 %v1338, 16
        %v1518 = vrot.slane %v1516, 5
        %v1519 = vor.u32 %v1515, %v1518
        %v1520 = vrot.slane %v1519, 4
        %v1522 = vshll.u32 %v1339, 16
        %v1524 = vrot.slane %v1522, 5
        %v1525 = vsel %vm1343, %v1520, %v1524
        %v1526 = vshrl.u32 %v1339, 16
        %v1528 = vrot.slane %v1526, 4
        %v1529 = vor.u32 %v1528, %v1524
        %v1530 = vrot.slane %v1529, 4
        %v1532 = vshll.u32 %v1340, 16
        %v1534 = vrot.slane %v1532, 5
        %v1535 = vsel %vm1343, %v1530, %v1534
        %1552 = vst [vmem:[#allocation3 + $0x4] sm:$0xf] %v1357
        %1553 = vst [vmem:[#allocation3 + $0x28] sm:$0xf] %v1367
        %1554 = vst [vmem:[#allocation3 + $0x4c] sm:$0xf] %v1381
        %1555 = vst [vmem:[#allocation3 + $0x70] sm:$0xf] %v1391
        %1556 = vst [vmem:[#allocation3 + $0x94] sm:$0xf] %v1405
        %1557 = vst [vmem:[#allocation3 + $0xb8] sm:$0xf] %v1415
        %1558 = vst [vmem:[#allocation3 + $0xdc] sm:$0xf] %v1429
        %1559 = vst [vmem:[#allocation3 + $0x100] sm:$0xf] %v1439
        %1560 = vst [vmem:[#allocation3 + $0x124] sm:$0xf] %v1453
        %1561 = vst [vmem:[#allocation3 + $0x148] sm:$0xf] %v1463
        %1562 = vst [vmem:[#allocation3 + $0x16c] sm:$0xf] %v1477
        %1563 = vst [vmem:[#allocation3 + $0x190] sm:$0xf] %v1487
        %1564 = vst [vmem:[#allocation3 + $0x1b4] sm:$0xf] %v1501
        %1565 = vst [vmem:[#allocation3 + $0x1d8] sm:$0xf] %v1511
        %1566 = vst [vmem:[#allocation3 + $0x1fc] sm:$0xf] %v1525
        %1567 = vst [vmem:[#allocation3 + $0x220] sm:$0xf] %v1535
        %v1568 = vld [vmem:[#allocation2] sm:$0xe]
        %v1569 = vld [vmem:[#allocation2 + $0x4] sm:$0xf]
        %v1570 = vld [vmem:[#allocation2 + $0x8] sm:$0x1]
        %v1571 = vld [vmem:[#allocation2 + $0xc] sm:$0xe]
        %v1572 = vld [vmem:[#allocation2 + $0x10] sm:$0xf]
        %v1573 = vld [vmem:[#allocation2 + $0x14] sm:$0x1]
        %v1574 = vld [vmem:[#allocation2 + $0x18] sm:$0xe]
        %v1575 = vld [vmem:[#allocation2 + $0x1c] sm:$0xf]
        %v1576 = vld [vmem:[#allocation2 + $0x20] sm:$0x1]
        %v1577 = vld [vmem:[#allocation2 + $0x24] sm:$0xe]
        %v1578 = vld [vmem:[#allocation2 + $0x28] sm:$0xf]
        %v1579 = vld [vmem:[#allocation2 + $0x2c] sm:$0x1]
        %v1580 = vld [vmem:[#allocation2 + $0x30] sm:$0xe]
        %v1581 = vld [vmem:[#allocation2 + $0x34] sm:$0xf]
        %v1582 = vld [vmem:[#allocation2 + $0x38] sm:$0x1]
        %v1583 = vld [vmem:[#allocation2 + $0x3c] sm:$0xe]
        %v1584 = vld [vmem:[#allocation2 + $0x40] sm:$0xf]
        %v1585 = vld [vmem:[#allocation2 + $0x44] sm:$0x1]
        %v1586 = vld [vmem:[#allocation2 + $0x48] sm:$0xe]
        %v1587 = vld [vmem:[#allocation2 + $0x4c] sm:$0xf]
        %v1588 = vld [vmem:[#allocation2 + $0x50] sm:$0x1]
        %v1589 = vld [vmem:[#allocation2 + $0x54] sm:$0xe]
        %v1590 = vld [vmem:[#allocation2 + $0x58] sm:$0xf]
        %v1591 = vld [vmem:[#allocation2 + $0x5c] sm:$0x1]
        %vm1616 = vcmask 1042432
        %vm1617 = vcmask 1046532
        %vm1618 = vmor %vm1616, %vm1617
        %v1619 = vrot.slane %v1568, 5
        %v1620 = vrot.slane %v1619, 4
        %v1621 = vrot.slane %v1569, 5
        %v1622 = vsel %vm1618, %v1620, %v1621
        %v1623 = vrot.slane %v1621, 4
        %v1624 = vrot.slane %v1570, 5
        %v1625 = vsel %vm1618, %v1623, %v1624
        %v1626 = vrot.slane %v1571, 5
        %v1627 = vrot.slane %v1626, 4
        %v1628 = vrot.slane %v1572, 5
        %v1629 = vsel %vm1618, %v1627, %v1628
        %v1630 = vrot.slane %v1628, 4
        %v1631 = vrot.slane %v1573, 5
        %v1632 = vsel %vm1618, %v1630, %v1631
        %v1633 = vrot.slane %v1574, 5
        %v1634 = vrot.slane %v1633, 4
        %v1635 = vrot.slane %v1575, 5
        %v1636 = vsel %vm1618, %v1634, %v1635
        %v1637 = vrot.slane %v1635, 4
        %v1638 = vrot.slane %v1576, 5
        %v1639 = vsel %vm1618, %v1637, %v1638
        %v1640 = vrot.slane %v1577, 5
        %v1641 = vrot.slane %v1640, 4
        %v1642 = vrot.slane %v1578, 5
        %v1643 = vsel %vm1618, %v1641, %v1642
        %v1644 = vrot.slane %v1642, 4
        %v1645 = vrot.slane %v1579, 5
        %v1646 = vsel %vm1618, %v1644, %v1645
        %v1647 = vrot.slane %v1580, 5
        %v1648 = vrot.slane %v1647, 4
        %v1649 = vrot.slane %v1581, 5
        %v1650 = vsel %vm1618, %v1648, %v1649
        %v1651 = vrot.slane %v1649, 4
        %v1652 = vrot.slane %v1582, 5
        %v1653 = vsel %vm1618, %v1651, %v1652
        %v1654 = vrot.slane %v1583, 5
        %v1655 = vrot.slane %v1654, 4
        %v1656 = vrot.slane %v1584, 5
        %v1657 = vsel %vm1618, %v1655, %v1656
        %v1658 = vrot.slane %v1656, 4
        %v1659 = vrot.slane %v1585, 5
        %v1660 = vsel %vm1618, %v1658, %v1659
        %v1661 = vrot.slane %v1586, 5
        %v1662 = vrot.slane %v1661, 4
        %v1663 = vrot.slane %v1587, 5
        %v1664 = vsel %vm1618, %v1662, %v1663
        %v1665 = vrot.slane %v1663, 4
        %v1666 = vrot.slane %v1588, 5
        %v1667 = vsel %vm1618, %v1665, %v1666
        %v1668 = vrot.slane %v1589, 5
        %v1669 = vrot.slane %v1668, 4
        %v1670 = vrot.slane %v1590, 5
        %v1671 = vsel %vm1618, %v1669, %v1670
        %v1672 = vrot.slane %v1670, 4
        %v1673 = vrot.slane %v1591, 5
        %v1674 = vsel %vm1618, %v1672, %v1673
        %1691 = vst [vmem:[#allocation3 + $0x8] sm:$0xf] %v1622
        %1692 = vst [vmem:[#allocation3 + $0x2c] sm:$0xf] %v1625
        %1693 = vst [vmem:[#allocation3 + $0x50] sm:$0xf] %v1629
        %1694 = vst [vmem:[#allocation3 + $0x74] sm:$0xf] %v1632
        %1695 = vst [vmem:[#allocation3 + $0x98] sm:$0xf] %v1636
        %1696 = vst [vmem:[#allocation3 + $0xbc] sm:$0xf] %v1639
        %1697 = vst [vmem:[#allocation3 + $0xe0] sm:$0xf] %v1643
        %1698 = vst [vmem:[#allocation3 + $0x104] sm:$0xf] %v1646
        %1699 = vst [vmem:[#allocation3 + $0x128] sm:$0xf] %v1650
        %1700 = vst [vmem:[#allocation3 + $0x14c] sm:$0xf] %v1653
        %1701 = vst [vmem:[#allocation3 + $0x170] sm:$0xf] %v1657
        %1702 = vst [vmem:[#allocation3 + $0x194] sm:$0xf] %v1660
        %1703 = vst [vmem:[#allocation3 + $0x1b8] sm:$0xf] %v1664
        %1704 = vst [vmem:[#allocation3 + $0x1dc] sm:$0xf] %v1667
        %1705 = vst [vmem:[#allocation3 + $0x200] sm:$0xf] %v1671
        %1706 = vst [vmem:[#allocation3 + $0x224] sm:$0xf] %v1674
        %v1707 = vld [vmem:[%s884] sm:$0xf]
        %v1708 = vld [vmem:[%s884 + $0x4] sm:$0xf]
        %v1709 = vld [vmem:[%s884 + $0xc] sm:$0xf]
        %v1710 = vld [vmem:[%s884 + $0x10] sm:$0xf]
        %v1711 = vld [vmem:[%s884 + $0x18] sm:$0xf]
        %v1712 = vld [vmem:[%s884 + $0x1c] sm:$0xf]
        %v1713 = vld [vmem:[%s884 + $0x24] sm:$0xf]
        %v1714 = vld [vmem:[%s884 + $0x28] sm:$0xf]
        %v1715 = vld [vmem:[%s884 + $0x30] sm:$0xf]
        %v1716 = vld [vmem:[%s884 + $0x34] sm:$0xf]
        %v1717 = vld [vmem:[%s884 + $0x3c] sm:$0xf]
        %v1718 = vld [vmem:[%s884 + $0x40] sm:$0xf]
        %v1719 = vld [vmem:[%s884 + $0x48] sm:$0xf]
        %v1720 = vld [vmem:[%s884 + $0x4c] sm:$0xf]
        %v1721 = vld [vmem:[%s884 + $0x54] sm:$0xf]
        %v1722 = vld [vmem:[%s884 + $0x58] sm:$0xf]
        %1723 = vst [vmem:[#allocation3 + $0xc] sm:$0xf] %v1707
        %1724 = vst [vmem:[#allocation3 + $0x30] sm:$0xf] %v1708
        %1725 = vst [vmem:[#allocation3 + $0x54] sm:$0xf] %v1709
        %1726 = vst [vmem:[#allocation3 + $0x78] sm:$0xf] %v1710
        %1727 = vst [vmem:[#allocation3 + $0x9c] sm:$0xf] %v1711
        %1728 = vst [vmem:[#allocation3 + $0xc0] sm:$0xf] %v1712
        %1729 = vst [vmem:[#allocation3 + $0xe4] sm:$0xf] %v1713
        %1730 = vst [vmem:[#allocation3 + $0x108] sm:$0xf] %v1714
        %1731 = vst [vmem:[#allocation3 + $0x12c] sm:$0xf] %v1715
        %1732 = vst [vmem:[#allocation3 + $0x150] sm:$0xf] %v1716
        %1733 = vst [vmem:[#allocation3 + $0x174] sm:$0xf] %v1717
        %1734 = vst [vmem:[#allocation3 + $0x198] sm:$0xf] %v1718
        %1735 = vst [vmem:[#allocation3 + $0x1bc] sm:$0xf] %v1719
        %1736 = vst [vmem:[#allocation3 + $0x1e0] sm:$0xf] %v1720
        %1737 = vst [vmem:[#allocation3 + $0x204] sm:$0xf] %v1721
        %1738 = vst [vmem:[#allocation3 + $0x228] sm:$0xf] %v1722
        %v1739 = vld [vmem:[%s884] sm:$0xf]
        %v1740 = vld [vmem:[%s884 + $0x4] sm:$0xf]
        %v1741 = vld [vmem:[%s884 + $0x8] sm:$0x1]
        %v1742 = vld [vmem:[%s884 + $0xc] sm:$0xf]
        %v1743 = vld [vmem:[%s884 + $0x10] sm:$0xf]
        %v1744 = vld [vmem:[%s884 + $0x14] sm:$0x1]
        %v1745 = vld [vmem:[%s884 + $0x18] sm:$0xf]
        %v1746 = vld [vmem:[%s884 + $0x1c] sm:$0xf]
        %v1747 = vld [vmem:[%s884 + $0x20] sm:$0x1]
        %v1748 = vld [vmem:[%s884 + $0x24] sm:$0xf]
        %v1749 = vld [vmem:[%s884 + $0x28] sm:$0xf]
        %v1750 = vld [vmem:[%s884 + $0x2c] sm:$0x1]
        %v1751 = vld [vmem:[%s884 + $0x30] sm:$0xf]
        %v1752 = vld [vmem:[%s884 + $0x34] sm:$0xf]
        %v1753 = vld [vmem:[%s884 + $0x38] sm:$0x1]
        %v1754 = vld [vmem:[%s884 + $0x3c] sm:$0xf]
        %v1755 = vld [vmem:[%s884 + $0x40] sm:$0xf]
        %v1756 = vld [vmem:[%s884 + $0x44] sm:$0x1]
        %v1757 = vld [vmem:[%s884 + $0x48] sm:$0xf]
        %v1758 = vld [vmem:[%s884 + $0x4c] sm:$0xf]
        %v1759 = vld [vmem:[%s884 + $0x50] sm:$0x1]
        %v1760 = vld [vmem:[%s884 + $0x54] sm:$0xf]
        %v1761 = vld [vmem:[%s884 + $0x58] sm:$0xf]
        %v1762 = vld [vmem:[%s884 + $0x5c] sm:$0x1]
        %v1764 = vshrl.u32 %v1739, 16
        %v1766 = vrot.slane %v1764, 4
        %v1767 = vshll.u32 %v1739, 16
        %v1769 = vrot.slane %v1767, 5
        %v1770 = vor.u32 %v1766, %v1769
        %v1771 = vrot.slane %v1770, 4
        %v1773 = vshll.u32 %v1740, 16
        %v1775 = vrot.slane %v1773, 5
        %v1776 = vsel %vm1343, %v1771, %v1775
        %v1777 = vshrl.u32 %v1740, 16
        %v1779 = vrot.slane %v1777, 4
        %v1780 = vor.u32 %v1779, %v1775
        %v1781 = vrot.slane %v1780, 4
        %v1783 = vshll.u32 %v1741, 16
        %v1785 = vrot.slane %v1783, 5
        %v1786 = vsel %vm1343, %v1781, %v1785
        %v1788 = vshrl.u32 %v1742, 16
        %v1790 = vrot.slane %v1788, 4
        %v1791 = vshll.u32 %v1742, 16
        %v1793 = vrot.slane %v1791, 5
        %v1794 = vor.u32 %v1790, %v1793
        %v1795 = vrot.slane %v1794, 4
        %v1797 = vshll.u32 %v1743, 16
        %v1799 = vrot.slane %v1797, 5
        %v1800 = vsel %vm1343, %v1795, %v1799
        %v1801 = vshrl.u32 %v1743, 16
        %v1803 = vrot.slane %v1801, 4
        %v1804 = vor.u32 %v1803, %v1799
        %v1805 = vrot.slane %v1804, 4
        %v1807 = vshll.u32 %v1744, 16
        %v1809 = vrot.slane %v1807, 5
        %v1810 = vsel %vm1343, %v1805, %v1809
        %v1812 = vshrl.u32 %v1745, 16
        %v1814 = vrot.slane %v1812, 4
        %v1815 = vshll.u32 %v1745, 16
        %v1817 = vrot.slane %v1815, 5
        %v1818 = vor.u32 %v1814, %v1817
        %v1819 = vrot.slane %v1818, 4
        %v1821 = vshll.u32 %v1746, 16
        %v1823 = vrot.slane %v1821, 5
        %v1824 = vsel %vm1343, %v1819, %v1823
        %v1825 = vshrl.u32 %v1746, 16
        %v1827 = vrot.slane %v1825, 4
        %v1828 = vor.u32 %v1827, %v1823
        %v1829 = vrot.slane %v1828, 4
        %v1831 = vshll.u32 %v1747, 16
        %v1833 = vrot.slane %v1831, 5
        %v1834 = vsel %vm1343, %v1829, %v1833
        %v1836 = vshrl.u32 %v1748, 16
        %v1838 = vrot.slane %v1836, 4
        %v1839 = vshll.u32 %v1748, 16
        %v1841 = vrot.slane %v1839, 5
        %v1842 = vor.u32 %v1838, %v1841
        %v1843 = vrot.slane %v1842, 4
        %v1845 = vshll.u32 %v1749, 16
        %v1847 = vrot.slane %v1845, 5
        %v1848 = vsel %vm1343, %v1843, %v1847
        %v1849 = vshrl.u32 %v1749, 16
        %v1851 = vrot.slane %v1849, 4
        %v1852 = vor.u32 %v1851, %v1847
        %v1853 = vrot.slane %v1852, 4
        %v1855 = vshll.u32 %v1750, 16
        %v1857 = vrot.slane %v1855, 5
        %v1858 = vsel %vm1343, %v1853, %v1857
        %v1860 = vshrl.u32 %v1751, 16
        %v1862 = vrot.slane %v1860, 4
        %v1863 = vshll.u32 %v1751, 16
        %v1865 = vrot.slane %v1863, 5
        %v1866 = vor.u32 %v1862, %v1865
        %v1867 = vrot.slane %v1866, 4
        %v1869 = vshll.u32 %v1752, 16
        %v1871 = vrot.slane %v1869, 5
        %v1872 = vsel %vm1343, %v1867, %v1871
        %v1873 = vshrl.u32 %v1752, 16
        %v1875 = vrot.slane %v1873, 4
        %v1876 = vor.u32 %v1875, %v1871
        %v1877 = vrot.slane %v1876, 4
        %v1879 = vshll.u32 %v1753, 16
        %v1881 = vrot.slane %v1879, 5
        %v1882 = vsel %vm1343, %v1877, %v1881
        %v1884 = vshrl.u32 %v1754, 16
        %v1886 = vrot.slane %v1884, 4
        %v1887 = vshll.u32 %v1754, 16
        %v1889 = vrot.slane %v1887, 5
        %v1890 = vor.u32 %v1886, %v1889
        %v1891 = vrot.slane %v1890, 4
        %v1893 = vshll.u32 %v1755, 16
        %v1895 = vrot.slane %v1893, 5
        %v1896 = vsel %vm1343, %v1891, %v1895
        %v1897 = vshrl.u32 %v1755, 16
        %v1899 = vrot.slane %v1897, 4
        %v1900 = vor.u32 %v1899, %v1895
        %v1901 = vrot.slane %v1900, 4
        %v1903 = vshll.u32 %v1756, 16
        %v1905 = vrot.slane %v1903, 5
        %v1906 = vsel %vm1343, %v1901, %v1905
        %v1908 = vshrl.u32 %v1757, 16
        %v1910 = vrot.slane %v1908, 4
        %v1911 = vshll.u32 %v1757, 16
        %v1913 = vrot.slane %v1911, 5
        %v1914 = vor.u32 %v1910, %v1913
        %v1915 = vrot.slane %v1914, 4
        %v1917 = vshll.u32 %v1758, 16
        %v1919 = vrot.slane %v1917, 5
        %v1920 = vsel %vm1343, %v1915, %v1919
        %v1921 = vshrl.u32 %v1758, 16
        %v1923 = vrot.slane %v1921, 4
        %v1924 = vor.u32 %v1923, %v1919
        %v1925 = vrot.slane %v1924, 4
        %v1927 = vshll.u32 %v1759, 16
        %v1929 = vrot.slane %v1927, 5
        %v1930 = vsel %vm1343, %v1925, %v1929
        %v1932 = vshrl.u32 %v1760, 16
        %v1934 = vrot.slane %v1932, 4
        %v1935 = vshll.u32 %v1760, 16
        %v1937 = vrot.slane %v1935, 5
        %v1938 = vor.u32 %v1934, %v1937
        %v1939 = vrot.slane %v1938, 4
        %v1941 = vshll.u32 %v1761, 16
        %v1943 = vrot.slane %v1941, 5
        %v1944 = vsel %vm1343, %v1939, %v1943
        %v1945 = vshrl.u32 %v1761, 16
        %v1947 = vrot.slane %v1945, 4
        %v1948 = vor.u32 %v1947, %v1943
        %v1949 = vrot.slane %v1948, 4
        %v1951 = vshll.u32 %v1762, 16
        %v1953 = vrot.slane %v1951, 5
        %v1954 = vsel %vm1343, %v1949, %v1953
        %1971 = vst [vmem:[#allocation3 + $0x10] sm:$0xf] %v1776
        %1972 = vst [vmem:[#allocation3 + $0x34] sm:$0xf] %v1786
        %1973 = vst [vmem:[#allocation3 + $0x58] sm:$0xf] %v1800
        %1974 = vst [vmem:[#allocation3 + $0x7c] sm:$0xf] %v1810
        %1975 = vst [vmem:[#allocation3 + $0xa0] sm:$0xf] %v1824
        %1976 = vst [vmem:[#allocation3 + $0xc4] sm:$0xf] %v1834
        %1977 = vst [vmem:[#allocation3 + $0xe8] sm:$0xf] %v1848
        %1978 = vst [vmem:[#allocation3 + $0x10c] sm:$0xf] %v1858
        %1979 = vst [vmem:[#allocation3 + $0x130] sm:$0xf] %v1872
        %1980 = vst [vmem:[#allocation3 + $0x154] sm:$0xf] %v1882
        %1981 = vst [vmem:[#allocation3 + $0x178] sm:$0xf] %v1896
        %1982 = vst [vmem:[#allocation3 + $0x19c] sm:$0xf] %v1906
        %1983 = vst [vmem:[#allocation3 + $0x1c0] sm:$0xf] %v1920
        %1984 = vst [vmem:[#allocation3 + $0x1e4] sm:$0xf] %v1930
        %1985 = vst [vmem:[#allocation3 + $0x208] sm:$0xf] %v1944
        %1986 = vst [vmem:[#allocation3 + $0x22c] sm:$0xf] %v1954
        %v1987 = vld [vmem:[%s884] sm:$0xe]
        %v1988 = vld [vmem:[%s884 + $0x4] sm:$0xf]
        %v1989 = vld [vmem:[%s884 + $0x8] sm:$0x1]
        %v1990 = vld [vmem:[%s884 + $0xc] sm:$0xe]
        %v1991 = vld [vmem:[%s884 + $0x10] sm:$0xf]
        %v1992 = vld [vmem:[%s884 + $0x14] sm:$0x1]
        %v1993 = vld [vmem:[%s884 + $0x18] sm:$0xe]
        %v1994 = vld [vmem:[%s884 + $0x1c] sm:$0xf]
        %v1995 = vld [vmem:[%s884 + $0x20] sm:$0x1]
        %v1996 = vld [vmem:[%s884 + $0x24] sm:$0xe]
        %v1997 = vld [vmem:[%s884 + $0x28] sm:$0xf]
        %v1998 = vld [vmem:[%s884 + $0x2c] sm:$0x1]
        %v1999 = vld [vmem:[%s884 + $0x30] sm:$0xe]
        %v2000 = vld [vmem:[%s884 + $0x34] sm:$0xf]
        %v2001 = vld [vmem:[%s884 + $0x38] sm:$0x1]
        %v2002 = vld [vmem:[%s884 + $0x3c] sm:$0xe]
        %v2003 = vld [vmem:[%s884 + $0x40] sm:$0xf]
        %v2004 = vld [vmem:[%s884 + $0x44] sm:$0x1]
        %v2005 = vld [vmem:[%s884 + $0x48] sm:$0xe]
        %v2006 = vld [vmem:[%s884 + $0x4c] sm:$0xf]
        %v2007 = vld [vmem:[%s884 + $0x50] sm:$0x1]
        %v2008 = vld [vmem:[%s884 + $0x54] sm:$0xe]
        %v2009 = vld [vmem:[%s884 + $0x58] sm:$0xf]
        %v2010 = vld [vmem:[%s884 + $0x5c] sm:$0x1]
        %v2035 = vrot.slane %v1987, 5
        %v2036 = vrot.slane %v2035, 4
        %v2037 = vrot.slane %v1988, 5
        %v2038 = vsel %vm1618, %v2036, %v2037
        %v2039 = vrot.slane %v2037, 4
        %v2040 = vrot.slane %v1989, 5
        %v2041 = vsel %vm1618, %v2039, %v2040
        %v2042 = vrot.slane %v1990, 5
        %v2043 = vrot.slane %v2042, 4
        %v2044 = vrot.slane %v1991, 5
        %v2045 = vsel %vm1618, %v2043, %v2044
        %v2046 = vrot.slane %v2044, 4
        %v2047 = vrot.slane %v1992, 5
        %v2048 = vsel %vm1618, %v2046, %v2047
        %v2049 = vrot.slane %v1993, 5
        %v2050 = vrot.slane %v2049, 4
        %v2051 = vrot.slane %v1994, 5
        %v2052 = vsel %vm1618, %v2050, %v2051
        %v2053 = vrot.slane %v2051, 4
        %v2054 = vrot.slane %v1995, 5
        %v2055 = vsel %vm1618, %v2053, %v2054
        %v2056 = vrot.slane %v1996, 5
        %v2057 = vrot.slane %v2056, 4
        %v2058 = vrot.slane %v1997, 5
        %v2059 = vsel %vm1618, %v2057, %v2058
        %v2060 = vrot.slane %v2058, 4
        %v2061 = vrot.slane %v1998, 5
        %v2062 = vsel %vm1618, %v2060, %v2061
        %v2063 = vrot.slane %v1999, 5
        %v2064 = vrot.slane %v2063, 4
        %v2065 = vrot.slane %v2000, 5
        %v2066 = vsel %vm1618, %v2064, %v2065
        %v2067 = vrot.slane %v2065, 4
        %v2068 = vrot.slane %v2001, 5
        %v2069 = vsel %vm1618, %v2067, %v2068
        %v2070 = vrot.slane %v2002, 5
        %v2071 = vrot.slane %v2070, 4
        %v2072 = vrot.slane %v2003, 5
        %v2073 = vsel %vm1618, %v2071, %v2072
        %v2074 = vrot.slane %v2072, 4
        %v2075 = vrot.slane %v2004, 5
        %v2076 = vsel %vm1618, %v2074, %v2075
        %v2077 = vrot.slane %v2005, 5
        %v2078 = vrot.slane %v2077, 4
        %v2079 = vrot.slane %v2006, 5
        %v2080 = vsel %vm1618, %v2078, %v2079
        %v2081 = vrot.slane %v2079, 4
        %v2082 = vrot.slane %v2007, 5
        %v2083 = vsel %vm1618, %v2081, %v2082
        %v2084 = vrot.slane %v2008, 5
        %v2085 = vrot.slane %v2084, 4
        %v2086 = vrot.slane %v2009, 5
        %v2087 = vsel %vm1618, %v2085, %v2086
        %v2088 = vrot.slane %v2086, 4
        %v2089 = vrot.slane %v2010, 5
        %v2090 = vsel %vm1618, %v2088, %v2089
        %2107 = vst [vmem:[#allocation3 + $0x14] sm:$0xf] %v2038
        %2108 = vst [vmem:[#allocation3 + $0x38] sm:$0xf] %v2041
        %2109 = vst [vmem:[#allocation3 + $0x5c] sm:$0xf] %v2045
        %2110 = vst [vmem:[#allocation3 + $0x80] sm:$0xf] %v2048
        %2111 = vst [vmem:[#allocation3 + $0xa4] sm:$0xf] %v2052
        %2112 = vst [vmem:[#allocation3 + $0xc8] sm:$0xf] %v2055
        %2113 = vst [vmem:[#allocation3 + $0xec] sm:$0xf] %v2059
        %2114 = vst [vmem:[#allocation3 + $0x110] sm:$0xf] %v2062
        %2115 = vst [vmem:[#allocation3 + $0x134] sm:$0xf] %v2066
        %2116 = vst [vmem:[#allocation3 + $0x158] sm:$0xf] %v2069
        %2117 = vst [vmem:[#allocation3 + $0x17c] sm:$0xf] %v2073
        %2118 = vst [vmem:[#allocation3 + $0x1a0] sm:$0xf] %v2076
        %2119 = vst [vmem:[#allocation3 + $0x1c4] sm:$0xf] %v2080
        %2120 = vst [vmem:[#allocation3 + $0x1e8] sm:$0xf] %v2083
        %2121 = vst [vmem:[#allocation3 + $0x20c] sm:$0xf] %v2087
        %2122 = vst [vmem:[#allocation3 + $0x230] sm:$0xf] %v2090
        %s2123 = scalar_lea.vmem [#allocation2], 24
        %v2124 = vld [vmem:[%s2123] sm:$0xf]
        %v2125 = vld [vmem:[%s2123 + $0x4] sm:$0xf]
        %v2126 = vld [vmem:[%s2123 + $0xc] sm:$0xf]
        %v2127 = vld [vmem:[%s2123 + $0x10] sm:$0xf]
        %v2128 = vld [vmem:[%s2123 + $0x18] sm:$0xf]
        %v2129 = vld [vmem:[%s2123 + $0x1c] sm:$0xf]
        %v2130 = vld [vmem:[%s2123 + $0x24] sm:$0xf]
        %v2131 = vld [vmem:[%s2123 + $0x28] sm:$0xf]
        %v2132 = vld [vmem:[%s2123 + $0x30] sm:$0xf]
        %v2133 = vld [vmem:[%s2123 + $0x34] sm:$0xf]
        %v2134 = vld [vmem:[%s2123 + $0x3c] sm:$0xf]
        %v2135 = vld [vmem:[%s2123 + $0x40] sm:$0xf]
        %v2136 = vld [vmem:[%s2123 + $0x48] sm:$0xf]
        %v2137 = vld [vmem:[%s2123 + $0x4c] sm:$0xf]
        %v2138 = vld [vmem:[%s2123 + $0x54] sm:$0xf]
        %v2139 = vld [vmem:[%s2123 + $0x58] sm:$0xf]
        %2140 = vst [vmem:[#allocation3 + $0x18] sm:$0xf] %v2124
        %2141 = vst [vmem:[#allocation3 + $0x3c] sm:$0xf] %v2125
        %2142 = vst [vmem:[#allocation3 + $0x60] sm:$0xf] %v2126
        %2143 = vst [vmem:[#allocation3 + $0x84] sm:$0xf] %v2127
        %2144 = vst [vmem:[#allocation3 + $0xa8] sm:$0xf] %v2128
        %2145 = vst [vmem:[#allocation3 + $0xcc] sm:$0xf] %v2129
        %2146 = vst [vmem:[#allocation3 + $0xf0] sm:$0xf] %v2130
        %2147 = vst [vmem:[#allocation3 + $0x114] sm:$0xf] %v2131
        %2148 = vst [vmem:[#allocation3 + $0x138] sm:$0xf] %v2132
        %2149 = vst [vmem:[#allocation3 + $0x15c] sm:$0xf] %v2133
        %2150 = vst [vmem:[#allocation3 + $0x180] sm:$0xf] %v2134
        %2151 = vst [vmem:[#allocation3 + $0x1a4] sm:$0xf] %v2135
        %2152 = vst [vmem:[#allocation3 + $0x1c8] sm:$0xf] %v2136
        %2153 = vst [vmem:[#allocation3 + $0x1ec] sm:$0xf] %v2137
        %2154 = vst [vmem:[#allocation3 + $0x210] sm:$0xf] %v2138
        %2155 = vst [vmem:[#allocation3 + $0x234] sm:$0xf] %v2139
        %v2156 = vld [vmem:[%s2123] sm:$0xf]
        %v2157 = vld [vmem:[%s2123 + $0x4] sm:$0xf]
        %v2158 = vld [vmem:[%s2123 + $0x8] sm:$0x1]
        %v2159 = vld [vmem:[%s2123 + $0xc] sm:$0xf]
        %v2160 = vld [vmem:[%s2123 + $0x10] sm:$0xf]
        %v2161 = vld [vmem:[%s2123 + $0x14] sm:$0x1]
        %v2162 = vld [vmem:[%s2123 + $0x18] sm:$0xf]
        %v2163 = vld [vmem:[%s2123 + $0x1c] sm:$0xf]
        %v2164 = vld [vmem:[%s2123 + $0x20] sm:$0x1]
        %v2165 = vld [vmem:[%s2123 + $0x24] sm:$0xf]
        %v2166 = vld [vmem:[%s2123 + $0x28] sm:$0xf]
        %v2167 = vld [vmem:[%s2123 + $0x2c] sm:$0x1]
        %v2168 = vld [vmem:[%s2123 + $0x30] sm:$0xf]
        %v2169 = vld [vmem:[%s2123 + $0x34] sm:$0xf]
        %v2170 = vld [vmem:[%s2123 + $0x38] sm:$0x1]
        %v2171 = vld [vmem:[%s2123 + $0x3c] sm:$0xf]
        %v2172 = vld [vmem:[%s2123 + $0x40] sm:$0xf]
        %v2173 = vld [vmem:[%s2123 + $0x44] sm:$0x1]
        %v2174 = vld [vmem:[%s2123 + $0x48] sm:$0xf]
        %v2175 = vld [vmem:[%s2123 + $0x4c] sm:$0xf]
        %v2176 = vld [vmem:[%s2123 + $0x50] sm:$0x1]
        %v2177 = vld [vmem:[%s2123 + $0x54] sm:$0xf]
        %v2178 = vld [vmem:[%s2123 + $0x58] sm:$0xf]
        %v2179 = vld [vmem:[%s2123 + $0x5c] sm:$0x1]
        %v2181 = vshrl.u32 %v2156, 16
        %v2183 = vrot.slane %v2181, 4
        %v2184 = vshll.u32 %v2156, 16
        %v2186 = vrot.slane %v2184, 5
        %v2187 = vor.u32 %v2183, %v2186
        %v2188 = vrot.slane %v2187, 4
        %v2190 = vshll.u32 %v2157, 16
        %v2192 = vrot.slane %v2190, 5
        %v2193 = vsel %vm1343, %v2188, %v2192
        %v2194 = vshrl.u32 %v2157, 16
        %v2196 = vrot.slane %v2194, 4
        %v2197 = vor.u32 %v2196, %v2192
        %v2198 = vrot.slane %v2197, 4
        %v2200 = vshll.u32 %v2158, 16
        %v2202 = vrot.slane %v2200, 5
        %v2203 = vsel %vm1343, %v2198, %v2202
        %v2205 = vshrl.u32 %v2159, 16
        %v2207 = vrot.slane %v2205, 4
        %v2208 = vshll.u32 %v2159, 16
        %v2210 = vrot.slane %v2208, 5
        %v2211 = vor.u32 %v2207, %v2210
        %v2212 = vrot.slane %v2211, 4
        %v2214 = vshll.u32 %v2160, 16
        %v2216 = vrot.slane %v2214, 5
        %v2217 = vsel %vm1343, %v2212, %v2216
        %v2218 = vshrl.u32 %v2160, 16
        %v2220 = vrot.slane %v2218, 4
        %v2221 = vor.u32 %v2220, %v2216
        %v2222 = vrot.slane %v2221, 4
        %v2224 = vshll.u32 %v2161, 16
        %v2226 = vrot.slane %v2224, 5
        %v2227 = vsel %vm1343, %v2222, %v2226
        %v2229 = vshrl.u32 %v2162, 16
        %v2231 = vrot.slane %v2229, 4
        %v2232 = vshll.u32 %v2162, 16
        %v2234 = vrot.slane %v2232, 5
        %v2235 = vor.u32 %v2231, %v2234
        %v2236 = vrot.slane %v2235, 4
        %v2238 = vshll.u32 %v2163, 16
        %v2240 = vrot.slane %v2238, 5
        %v2241 = vsel %vm1343, %v2236, %v2240
        %v2242 = vshrl.u32 %v2163, 16
        %v2244 = vrot.slane %v2242, 4
        %v2245 = vor.u32 %v2244, %v2240
        %v2246 = vrot.slane %v2245, 4
        %v2248 = vshll.u32 %v2164, 16
        %v2250 = vrot.slane %v2248, 5
        %v2251 = vsel %vm1343, %v2246, %v2250
        %v2253 = vshrl.u32 %v2165, 16
        %v2255 = vrot.slane %v2253, 4
        %v2256 = vshll.u32 %v2165, 16
        %v2258 = vrot.slane %v2256, 5
        %v2259 = vor.u32 %v2255, %v2258
        %v2260 = vrot.slane %v2259, 4
        %v2262 = vshll.u32 %v2166, 16
        %v2264 = vrot.slane %v2262, 5
        %v2265 = vsel %vm1343, %v2260, %v2264
        %v2266 = vshrl.u32 %v2166, 16
        %v2268 = vrot.slane %v2266, 4
        %v2269 = vor.u32 %v2268, %v2264
        %v2270 = vrot.slane %v2269, 4
        %v2272 = vshll.u32 %v2167, 16
        %v2274 = vrot.slane %v2272, 5
        %v2275 = vsel %vm1343, %v2270, %v2274
        %v2277 = vshrl.u32 %v2168, 16
        %v2279 = vrot.slane %v2277, 4
        %v2280 = vshll.u32 %v2168, 16
        %v2282 = vrot.slane %v2280, 5
        %v2283 = vor.u32 %v2279, %v2282
        %v2284 = vrot.slane %v2283, 4
        %v2286 = vshll.u32 %v2169, 16
        %v2288 = vrot.slane %v2286, 5
        %v2289 = vsel %vm1343, %v2284, %v2288
        %v2290 = vshrl.u32 %v2169, 16
        %v2292 = vrot.slane %v2290, 4
        %v2293 = vor.u32 %v2292, %v2288
        %v2294 = vrot.slane %v2293, 4
        %v2296 = vshll.u32 %v2170, 16
        %v2298 = vrot.slane %v2296, 5
        %v2299 = vsel %vm1343, %v2294, %v2298
        %v2301 = vshrl.u32 %v2171, 16
        %v2303 = vrot.slane %v2301, 4
        %v2304 = vshll.u32 %v2171, 16
        %v2306 = vrot.slane %v2304, 5
        %v2307 = vor.u32 %v2303, %v2306
        %v2308 = vrot.slane %v2307, 4
        %v2310 = vshll.u32 %v2172, 16
        %v2312 = vrot.slane %v2310, 5
        %v2313 = vsel %vm1343, %v2308, %v2312
        %v2314 = vshrl.u32 %v2172, 16
        %v2316 = vrot.slane %v2314, 4
        %v2317 = vor.u32 %v2316, %v2312
        %v2318 = vrot.slane %v2317, 4
        %v2320 = vshll.u32 %v2173, 16
        %v2322 = vrot.slane %v2320, 5
        %v2323 = vsel %vm1343, %v2318, %v2322
        %v2325 = vshrl.u32 %v2174, 16
        %v2327 = vrot.slane %v2325, 4
        %v2328 = vshll.u32 %v2174, 16
        %v2330 = vrot.slane %v2328, 5
        %v2331 = vor.u32 %v2327, %v2330
        %v2332 = vrot.slane %v2331, 4
        %v2334 = vshll.u32 %v2175, 16
        %v2336 = vrot.slane %v2334, 5
        %v2337 = vsel %vm1343, %v2332, %v2336
        %v2338 = vshrl.u32 %v2175, 16
        %v2340 = vrot.slane %v2338, 4
        %v2341 = vor.u32 %v2340, %v2336
        %v2342 = vrot.slane %v2341, 4
        %v2344 = vshll.u32 %v2176, 16
        %v2346 = vrot.slane %v2344, 5
        %v2347 = vsel %vm1343, %v2342, %v2346
        %v2349 = vshrl.u32 %v2177, 16
        %v2351 = vrot.slane %v2349, 4
        %v2352 = vshll.u32 %v2177, 16
        %v2354 = vrot.slane %v2352, 5
        %v2355 = vor.u32 %v2351, %v2354
        %v2356 = vrot.slane %v2355, 4
        %v2358 = vshll.u32 %v2178, 16
        %v2360 = vrot.slane %v2358, 5
        %v2361 = vsel %vm1343, %v2356, %v2360
        %v2362 = vshrl.u32 %v2178, 16
        %v2364 = vrot.slane %v2362, 4
        %v2365 = vor.u32 %v2364, %v2360
        %v2366 = vrot.slane %v2365, 4
        %v2368 = vshll.u32 %v2179, 16
        %v2370 = vrot.slane %v2368, 5
        %v2371 = vsel %vm1343, %v2366, %v2370
        %2388 = vst [vmem:[#allocation3 + $0x1c] sm:$0xf] %v2193
        %2389 = vst [vmem:[#allocation3 + $0x40] sm:$0xf] %v2203
        %2390 = vst [vmem:[#allocation3 + $0x64] sm:$0xf] %v2217
        %2391 = vst [vmem:[#allocation3 + $0x88] sm:$0xf] %v2227
        %2392 = vst [vmem:[#allocation3 + $0xac] sm:$0xf] %v2241
        %2393 = vst [vmem:[#allocation3 + $0xd0] sm:$0xf] %v2251
        %2394 = vst [vmem:[#allocation3 + $0xf4] sm:$0xf] %v2265
        %2395 = vst [vmem:[#allocation3 + $0x118] sm:$0xf] %v2275
        %2396 = vst [vmem:[#allocation3 + $0x13c] sm:$0xf] %v2289
        %2397 = vst [vmem:[#allocation3 + $0x160] sm:$0xf] %v2299
        %2398 = vst [vmem:[#allocation3 + $0x184] sm:$0xf] %v2313
        %2399 = vst [vmem:[#allocation3 + $0x1a8] sm:$0xf] %v2323
        %2400 = vst [vmem:[#allocation3 + $0x1cc] sm:$0xf] %v2337
        %2401 = vst [vmem:[#allocation3 + $0x1f0] sm:$0xf] %v2347
        %2402 = vst [vmem:[#allocation3 + $0x214] sm:$0xf] %v2361
        %2403 = vst [vmem:[#allocation3 + $0x238] sm:$0xf] %v2371
        %v2404 = vld [vmem:[%s2123] sm:$0xe]
        %v2405 = vld [vmem:[%s2123 + $0x4] sm:$0xf]
        %v2406 = vld [vmem:[%s2123 + $0x8] sm:$0x1]
        %v2407 = vld [vmem:[%s2123 + $0xc] sm:$0xe]
        %v2408 = vld [vmem:[%s2123 + $0x10] sm:$0xf]
        %v2409 = vld [vmem:[%s2123 + $0x14] sm:$0x1]
        %v2410 = vld [vmem:[%s2123 + $0x18] sm:$0xe]
        %v2411 = vld [vmem:[%s2123 + $0x1c] sm:$0xf]
        %v2412 = vld [vmem:[%s2123 + $0x20] sm:$0x1]
        %v2413 = vld [vmem:[%s2123 + $0x24] sm:$0xe]
        %v2414 = vld [vmem:[%s2123 + $0x28] sm:$0xf]
        %v2415 = vld [vmem:[%s2123 + $0x2c] sm:$0x1]
        %v2416 = vld [vmem:[%s2123 + $0x30] sm:$0xe]
        %v2417 = vld [vmem:[%s2123 + $0x34] sm:$0xf]
        %v2418 = vld [vmem:[%s2123 + $0x38] sm:$0x1]
        %v2419 = vld [vmem:[%s2123 + $0x3c] sm:$0xe]
        %v2420 = vld [vmem:[%s2123 + $0x40] sm:$0xf]
        %v2421 = vld [vmem:[%s2123 + $0x44] sm:$0x1]
        %v2422 = vld [vmem:[%s2123 + $0x48] sm:$0xe]
        %v2423 = vld [vmem:[%s2123 + $0x4c] sm:$0xf]
        %v2424 = vld [vmem:[%s2123 + $0x50] sm:$0x1]
        %v2425 = vld [vmem:[%s2123 + $0x54] sm:$0xe]
        %v2426 = vld [vmem:[%s2123 + $0x58] sm:$0xf]
        %v2427 = vld [vmem:[%s2123 + $0x5c] sm:$0x1]
        %v2452 = vrot.slane %v2404, 5
        %v2453 = vrot.slane %v2452, 4
        %v2454 = vrot.slane %v2405, 5
        %v2455 = vsel %vm1618, %v2453, %v2454
        %v2456 = vrot.slane %v2454, 4
        %v2457 = vrot.slane %v2406, 5
        %v2458 = vsel %vm1618, %v2456, %v2457
        %v2459 = vrot.slane %v2407, 5
        %v2460 = vrot.slane %v2459, 4
        %v2461 = vrot.slane %v2408, 5
        %v2462 = vsel %vm1618, %v2460, %v2461
        %v2463 = vrot.slane %v2461, 4
        %v2464 = vrot.slane %v2409, 5
        %v2465 = vsel %vm1618, %v2463, %v2464
        %v2466 = vrot.slane %v2410, 5
        %v2467 = vrot.slane %v2466, 4
        %v2468 = vrot.slane %v2411, 5
        %v2469 = vsel %vm1618, %v2467, %v2468
        %v2470 = vrot.slane %v2468, 4
        %v2471 = vrot.slane %v2412, 5
        %v2472 = vsel %vm1618, %v2470, %v2471
        %v2473 = vrot.slane %v2413, 5
        %v2474 = vrot.slane %v2473, 4
        %v2475 = vrot.slane %v2414, 5
        %v2476 = vsel %vm1618, %v2474, %v2475
        %v2477 = vrot.slane %v2475, 4
        %v2478 = vrot.slane %v2415, 5
        %v2479 = vsel %vm1618, %v2477, %v2478
        %v2480 = vrot.slane %v2416, 5
        %v2481 = vrot.slane %v2480, 4
        %v2482 = vrot.slane %v2417, 5
        %v2483 = vsel %vm1618, %v2481, %v2482
        %v2484 = vrot.slane %v2482, 4
        %v2485 = vrot.slane %v2418, 5
        %v2486 = vsel %vm1618, %v2484, %v2485
        %v2487 = vrot.slane %v2419, 5
        %v2488 = vrot.slane %v2487, 4
        %v2489 = vrot.slane %v2420, 5
        %v2490 = vsel %vm1618, %v2488, %v2489
        %v2491 = vrot.slane %v2489, 4
        %v2492 = vrot.slane %v2421, 5
        %v2493 = vsel %vm1618, %v2491, %v2492
        %v2494 = vrot.slane %v2422, 5
        %v2495 = vrot.slane %v2494, 4
        %v2496 = vrot.slane %v2423, 5
        %v2497 = vsel %vm1618, %v2495, %v2496
        %v2498 = vrot.slane %v2496, 4
        %v2499 = vrot.slane %v2424, 5
        %v2500 = vsel %vm1618, %v2498, %v2499
        %v2501 = vrot.slane %v2425, 5
        %v2502 = vrot.slane %v2501, 4
        %v2503 = vrot.slane %v2426, 5
        %v2504 = vsel %vm1618, %v2502, %v2503
        %v2505 = vrot.slane %v2503, 4
        %v2506 = vrot.slane %v2427, 5
        %v2507 = vsel %vm1618, %v2505, %v2506
        %2524 = vst [vmem:[#allocation3 + $0x20] sm:$0xf] %v2455
        %2525 = vst [vmem:[#allocation3 + $0x44] sm:$0xf] %v2458
        %2526 = vst [vmem:[#allocation3 + $0x68] sm:$0xf] %v2462
        %2527 = vst [vmem:[#allocation3 + $0x8c] sm:$0xf] %v2465
        %2528 = vst [vmem:[#allocation3 + $0xb0] sm:$0xf] %v2469
        %2529 = vst [vmem:[#allocation3 + $0xd4] sm:$0xf] %v2472
        %2530 = vst [vmem:[#allocation3 + $0xf8] sm:$0xf] %v2476
        %2531 = vst [vmem:[#allocation3 + $0x11c] sm:$0xf] %v2479
        %2532 = vst [vmem:[#allocation3 + $0x140] sm:$0xf] %v2483
        %2533 = vst [vmem:[#allocation3 + $0x164] sm:$0xf] %v2486
        %2534 = vst [vmem:[#allocation3 + $0x188] sm:$0xf] %v2490
        %2535 = vst [vmem:[#allocation3 + $0x1ac] sm:$0xf] %v2493
        %2536 = vst [vmem:[#allocation3 + $0x1d0] sm:$0xf] %v2497
        %2537 = vst [vmem:[#allocation3 + $0x1f4] sm:$0xf] %v2500
        %2538 = vst [vmem:[#allocation3 + $0x218] sm:$0xf] %v2504
        %2539 = vst [vmem:[#allocation3 + $0x23c] sm:$0xf] %v2507
        %v2540 = vld [vmem:[#allocation3] sm:$0xff]
        %v2541 = vld [vmem:[#allocation3 + $0x8] sm:$0xff]
        %v2542 = vld [vmem:[#allocation3 + $0x10] sm:$0xff]
        %v2543 = vld [vmem:[#allocation3 + $0x18] sm:$0xff]
        %v2544 = vld [vmem:[#allocation3 + $0x20] sm:$0xf]
        %v2545 = vld [vmem:[#allocation3 + $0x24] sm:$0xff]
        %v2546 = vld [vmem:[#allocation3 + $0x2c] sm:$0xff]
        %v2547 = vld [vmem:[#allocation3 + $0x34] sm:$0xff]
        %v2548 = vld [vmem:[#allocation3 + $0x3c] sm:$0xff]
        %v2549 = vld [vmem:[#allocation3 + $0x44] sm:$0xf]
        %v2550 = vld [vmem:[#allocation3 + $0x48] sm:$0xff]
        %v2551 = vld [vmem:[#allocation3 + $0x50] sm:$0xff]
        %v2552 = vld [vmem:[#allocation3 + $0x58] sm:$0xff]
        %v2553 = vld [vmem:[#allocation3 + $0x60] sm:$0xff]
        %v2554 = vld [vmem:[#allocation3 + $0x68] sm:$0xf]
        %v2555 = vld [vmem:[#allocation3 + $0x6c] sm:$0xff]
        %v2556 = vld [vmem:[#allocation3 + $0x74] sm:$0xff]
        %v2557 = vld [vmem:[#allocation3 + $0x7c] sm:$0xff]
        %v2558 = vld [vmem:[#allocation3 + $0x84] sm:$0xff]
        %v2559 = vld [vmem:[#allocation3 + $0x8c] sm:$0xf]
        %v2560 = vld [vmem:[#allocation3 + $0x90] sm:$0xff]
        %v2561 = vld [vmem:[#allocation3 + $0x98] sm:$0xff]
        %v2562 = vld [vmem:[#allocation3 + $0xa0] sm:$0xff]
        %v2563 = vld [vmem:[#allocation3 + $0xa8] sm:$0xff]
        %v2564 = vld [vmem:[#allocation3 + $0xb0] sm:$0xf]
        %v2565 = vld [vmem:[#allocation3 + $0xb4] sm:$0xff]
        %v2566 = vld [vmem:[#allocation3 + $0xbc] sm:$0xff]
        %v2567 = vld [vmem:[#allocation3 + $0xc4] sm:$0xff]
        %v2568 = vld [vmem:[#allocation3 + $0xcc] sm:$0xff]
        %v2569 = vld [vmem:[#allocation3 + $0xd4] sm:$0xf]
        %v2570 = vld [vmem:[#allocation3 + $0xd8] sm:$0xff]
        %v2571 = vld [vmem:[#allocation3 + $0xe0] sm:$0xff]
        %v2572 = vld [vmem:[#allocation3 + $0xe8] sm:$0xff]
        %v2573 = vld [vmem:[#allocation3 + $0xf0] sm:$0xff]
        %v2574 = vld [vmem:[#allocation3 + $0xf8] sm:$0xf]
        %v2575 = vld [vmem:[#allocation3 + $0xfc] sm:$0xff]
        %v2576 = vld [vmem:[#allocation3 + $0x104] sm:$0xff]
        %v2577 = vld [vmem:[#allocation3 + $0x10c] sm:$0xff]
        %v2578 = vld [vmem:[#allocation3 + $0x114] sm:$0xff]
        %v2579 = vld [vmem:[#allocation3 + $0x11c] sm:$0xf]
        %v2580 = vld [vmem:[#allocation3 + $0x120] sm:$0xff]
        %v2581 = vld [vmem:[#allocation3 + $0x128] sm:$0xff]
        %v2582 = vld [vmem:[#allocation3 + $0x130] sm:$0xff]
        %v2583 = vld [vmem:[#allocation3 + $0x138] sm:$0xff]
        %v2584 = vld [vmem:[#allocation3 + $0x140] sm:$0xf]
        %v2585 = vld [vmem:[#allocation3 + $0x144] sm:$0xff]
        %v2586 = vld [vmem:[#allocation3 + $0x14c] sm:$0xff]
        %v2587 = vld [vmem:[#allocation3 + $0x154] sm:$0xff]
        %v2588 = vld [vmem:[#allocation3 + $0x15c] sm:$0xff]
        %v2589 = vld [vmem:[#allocation3 + $0x164] sm:$0xf]
        %v2590 = vld [vmem:[#allocation3 + $0x168] sm:$0xff]
        %v2591 = vld [vmem:[#allocation3 + $0x170] sm:$0xff]
        %v2592 = vld [vmem:[#allocation3 + $0x178] sm:$0xff]
        %v2593 = vld [vmem:[#allocation3 + $0x180] sm:$0xff]
        %v2594 = vld [vmem:[#allocation3 + $0x188] sm:$0xf]
        %v2595 = vld [vmem:[#allocation3 + $0x18c] sm:$0xff]
        %v2596 = vld [vmem:[#allocation3 + $0x194] sm:$0xff]
        %v2597 = vld [vmem:[#allocation3 + $0x19c] sm:$0xff]
        %v2598 = vld [vmem:[#allocation3 + $0x1a4] sm:$0xff]
        %v2599 = vld [vmem:[#allocation3 + $0x1ac] sm:$0xf]
        %v2600 = vld [vmem:[#allocation3 + $0x1b0] sm:$0xff]
        %v2601 = vld [vmem:[#allocation3 + $0x1b8] sm:$0xff]
        %v2602 = vld [vmem:[#allocation3 + $0x1c0] sm:$0xff]
        %v2603 = vld [vmem:[#allocation3 + $0x1c8] sm:$0xff]
        %v2604 = vld [vmem:[#allocation3 + $0x1d0] sm:$0xf]
        %v2605 = vld [vmem:[#allocation3 + $0x1d4] sm:$0xff]
        %v2606 = vld [vmem:[#allocation3 + $0x1dc] sm:$0xff]
        %v2607 = vld [vmem:[#allocation3 + $0x1e4] sm:$0xff]
        %v2608 = vld [vmem:[#allocation3 + $0x1ec] sm:$0xff]
        %v2609 = vld [vmem:[#allocation3 + $0x1f4] sm:$0xf]
        %v2610 = vld [vmem:[#allocation3 + $0x1f8] sm:$0xff]
        %v2611 = vld [vmem:[#allocation3 + $0x200] sm:$0xff]
        %v2612 = vld [vmem:[#allocation3 + $0x208] sm:$0xff]
        %v2613 = vld [vmem:[#allocation3 + $0x210] sm:$0xff]
        %v2614 = vld [vmem:[#allocation3 + $0x218] sm:$0xf]
        %v2615 = vld [vmem:[#allocation3 + $0x21c] sm:$0xff]
        %v2616 = vld [vmem:[#allocation3 + $0x224] sm:$0xff]
        %v2617 = vld [vmem:[#allocation3 + $0x22c] sm:$0xff]
        %v2618 = vld [vmem:[#allocation3 + $0x234] sm:$0xff]
        %v2619 = vld [vmem:[#allocation3 + $0x23c] sm:$0xf]
        %v2620 = vld [vmem:[#allocation9] sm:$0xf]
        %v2621 = vld [vmem:[#allocation9 + $0x4] sm:$0xf]
        %v2622 = vld [vmem:[#allocation9 + $0x8] sm:$0xf]
        %v2623 = vld [vmem:[#allocation9 + $0xc] sm:$0xf]
        %v2624 = vld [vmem:[#allocation9 + $0x10] sm:$0xf]
        %v2625 = vld [vmem:[#allocation9 + $0x14] sm:$0xf]
        %v2626 = vld [vmem:[#allocation9 + $0x18] sm:$0xf]
        %v2627 = vld [vmem:[#allocation9 + $0x1c] sm:$0xf]
        %v2628 = vld [vmem:[#allocation9 + $0x20] sm:$0xf]
        %v2629 = vld [vmem:[#allocation9 + $0x24] sm:$0xf]
        %v2630 = vld [vmem:[#allocation9 + $0x28] sm:$0xf]
        %v2631 = vld [vmem:[#allocation9 + $0x2c] sm:$0xf]
        %v2632 = vld [vmem:[#allocation9 + $0x30] sm:$0xf]
        %v2633 = vld [vmem:[#allocation9 + $0x34] sm:$0xf]
        %v2634 = vld [vmem:[#allocation9 + $0x38] sm:$0xf]
        %v2635 = vld [vmem:[#allocation9 + $0x3c] sm:$0xf]
        %v2636 = vld [vmem:[#allocation9 + $0x40] sm:$0xf]
        %v2637 = vld [vmem:[#allocation9 + $0x44] sm:$0xf]
        %v2638 = vld [vmem:[#allocation9 + $0x48] sm:$0xf]
        %v2639 = vld [vmem:[#allocation9 + $0x4c] sm:$0xf]
        %v2640 = vld [vmem:[#allocation9 + $0x50] sm:$0xf]
        %v2641 = vld [vmem:[#allocation9 + $0x54] sm:$0xf]
        %v2642 = vld [vmem:[#allocation9 + $0x58] sm:$0xf]
        %v2643 = vld [vmem:[#allocation9 + $0x5c] sm:$0xf]
        %v2644 = vld [vmem:[#allocation9 + $0x60] sm:$0xf]
        %v2645 = vld [vmem:[#allocation9 + $0x64] sm:$0xf]
        %v2646 = vld [vmem:[#allocation9 + $0x68] sm:$0xf]
        %v2647 = vld [vmem:[#allocation9 + $0x6c] sm:$0xf]
        %v2648 = vld [vmem:[#allocation9 + $0x70] sm:$0xf]
        %v2649 = vld [vmem:[#allocation9 + $0x74] sm:$0xf]
        %v2650 = vld [vmem:[#allocation9 + $0x78] sm:$0xf]
        %v2651 = vld [vmem:[#allocation9 + $0x7c] sm:$0xf]
        %v2652 = vld [vmem:[#allocation9 + $0x80] sm:$0xf]
        %v2653 = vld [vmem:[#allocation9 + $0x84] sm:$0xf]
        %v2654 = vld [vmem:[#allocation9 + $0x88] sm:$0xf]
        %v2655 = vld [vmem:[#allocation9 + $0x8c] sm:$0xf]
        %v2656 = vld [vmem:[#allocation9 + $0x90] sm:$0xf]
        %v2657 = vld [vmem:[#allocation9 + $0x94] sm:$0xf]
        %v2658 = vld [vmem:[#allocation9 + $0x98] sm:$0xf]
        %v2659 = vld [vmem:[#allocation9 + $0x9c] sm:$0xf]
        %v2660 = vld [vmem:[#allocation9 + $0xa0] sm:$0xf]
        %v2661 = vld [vmem:[#allocation9 + $0xa4] sm:$0xf]
        %v2662 = vld [vmem:[#allocation9 + $0xa8] sm:$0xf]
        %v2663 = vld [vmem:[#allocation9 + $0xac] sm:$0xf]
        %v2664 = vld [vmem:[#allocation9 + $0xb0] sm:$0xf]
        %v2665 = vld [vmem:[#allocation9 + $0xb4] sm:$0xf]
        %v2666 = vld [vmem:[#allocation9 + $0xb8] sm:$0xf]
        %v2667 = vld [vmem:[#allocation9 + $0xbc] sm:$0xf]
        %v2668 = vld [vmem:[#allocation9 + $0xc0] sm:$0xf]
        %v2669 = vld [vmem:[#allocation9 + $0xc4] sm:$0xf]
        %v2670 = vld [vmem:[#allocation9 + $0xc8] sm:$0xf]
        %v2671 = vld [vmem:[#allocation9 + $0xcc] sm:$0xf]
        %v2672 = vld [vmem:[#allocation9 + $0xd0] sm:$0xf]
        %v2673 = vld [vmem:[#allocation9 + $0xd4] sm:$0xf]
        %v2674 = vld [vmem:[#allocation9 + $0xd8] sm:$0xf]
        %v2675 = vld [vmem:[#allocation9 + $0xdc] sm:$0xf]
        %v2676 = vld [vmem:[#allocation9 + $0xe0] sm:$0xf]
        %v2677 = vld [vmem:[#allocation9 + $0xe4] sm:$0xf]
        %v2678 = vld [vmem:[#allocation9 + $0xe8] sm:$0xf]
        %v2679 = vld [vmem:[#allocation9 + $0xec] sm:$0xf]
        %v2680 = vld [vmem:[#allocation9 + $0xf0] sm:$0xf]
        %v2681 = vld [vmem:[#allocation9 + $0xf4] sm:$0xf]
        %v2682 = vld [vmem:[#allocation9 + $0xf8] sm:$0xf]
        %v2683 = vld [vmem:[#allocation9 + $0xfc] sm:$0xf]
        %v2684 = vld [vmem:[#allocation9 + $0x100] sm:$0xf]
        %v2685 = vld [vmem:[#allocation9 + $0x104] sm:$0xf]
        %v2686 = vld [vmem:[#allocation9 + $0x108] sm:$0xf]
        %v2687 = vld [vmem:[#allocation9 + $0x10c] sm:$0xf]
        %v2688 = vld [vmem:[#allocation9 + $0x110] sm:$0xf]
        %v2689 = vld [vmem:[#allocation9 + $0x114] sm:$0xf]
        %v2690 = vld [vmem:[#allocation9 + $0x118] sm:$0xf]
        %v2691 = vld [vmem:[#allocation9 + $0x11c] sm:$0xf]
        %v2692 = vld [vmem:[#allocation9 + $0x120] sm:$0xf]
        %v2693 = vld [vmem:[#allocation9 + $0x124] sm:$0xf]
        %v2694 = vld [vmem:[#allocation9 + $0x128] sm:$0xf]
        %v2695 = vld [vmem:[#allocation9 + $0x12c] sm:$0xf]
        %v2696 = vld [vmem:[#allocation9 + $0x130] sm:$0xf]
        %v2697 = vld [vmem:[#allocation9 + $0x134] sm:$0xf]
        %v2698 = vld [vmem:[#allocation9 + $0x138] sm:$0xf]
        %v2699 = vld [vmem:[#allocation9 + $0x13c] sm:$0xf]
        %v2700 = vld [vmem:[#allocation9 + $0x140] sm:$0xf]
        %v2701 = vld [vmem:[#allocation9 + $0x144] sm:$0xf]
        %v2702 = vld [vmem:[#allocation9 + $0x148] sm:$0xf]
        %v2703 = vld [vmem:[#allocation9 + $0x14c] sm:$0xf]
        %v2704 = vld [vmem:[#allocation9 + $0x150] sm:$0xf]
        %v2705 = vld [vmem:[#allocation9 + $0x154] sm:$0xf]
        %v2706 = vld [vmem:[#allocation9 + $0x158] sm:$0xf]
        %v2707 = vld [vmem:[#allocation9 + $0x15c] sm:$0xf]
        %v2708 = vld [vmem:[#allocation9 + $0x160] sm:$0xf]
        %v2709 = vld [vmem:[#allocation9 + $0x164] sm:$0xf]
        %v2710 = vld [vmem:[#allocation9 + $0x168] sm:$0xf]
        %v2711 = vld [vmem:[#allocation9 + $0x16c] sm:$0xf]
        %v2712 = vld [vmem:[#allocation9 + $0x170] sm:$0xf]
        %v2713 = vld [vmem:[#allocation9 + $0x174] sm:$0xf]
        %v2714 = vld [vmem:[#allocation9 + $0x178] sm:$0xf]
        %v2715 = vld [vmem:[#allocation9 + $0x17c] sm:$0xf]
        %v2716 = vld [vmem:[#allocation9 + $0x180] sm:$0xf]
        %v2717 = vld [vmem:[#allocation9 + $0x184] sm:$0xf]
        %v2718 = vld [vmem:[#allocation9 + $0x188] sm:$0xf]
        %v2719 = vld [vmem:[#allocation9 + $0x18c] sm:$0xf]
        %v2720 = vld [vmem:[#allocation9 + $0x190] sm:$0xf]
        %v2721 = vld [vmem:[#allocation9 + $0x194] sm:$0xf]
        %v2722 = vld [vmem:[#allocation9 + $0x198] sm:$0xf]
        %v2723 = vld [vmem:[#allocation9 + $0x19c] sm:$0xf]
        %v2724 = vld [vmem:[#allocation9 + $0x1a0] sm:$0xf]
        %v2725 = vld [vmem:[#allocation9 + $0x1a4] sm:$0xf]
        %v2726 = vld [vmem:[#allocation9 + $0x1a8] sm:$0xf]
        %v2727 = vld [vmem:[#allocation9 + $0x1ac] sm:$0xf]
        %v2728 = vld [vmem:[#allocation9 + $0x1b0] sm:$0xf]
        %v2729 = vld [vmem:[#allocation9 + $0x1b4] sm:$0xf]
        %v2730 = vld [vmem:[#allocation9 + $0x1b8] sm:$0xf]
        %v2731 = vld [vmem:[#allocation9 + $0x1bc] sm:$0xf]
        %v2732 = vld [vmem:[#allocation9 + $0x1c0] sm:$0xf]
        %v2733 = vld [vmem:[#allocation9 + $0x1c4] sm:$0xf]
        %v2734 = vld [vmem:[#allocation9 + $0x1c8] sm:$0xf]
        %v2735 = vld [vmem:[#allocation9 + $0x1cc] sm:$0xf]
        %v2736 = vld [vmem:[#allocation9 + $0x1d0] sm:$0xf]
        %v2737 = vld [vmem:[#allocation9 + $0x1d4] sm:$0xf]
        %v2738 = vld [vmem:[#allocation9 + $0x1d8] sm:$0xf]
        %v2739 = vld [vmem:[#allocation9 + $0x1dc] sm:$0xf]
        %v2740 = vld [vmem:[#allocation9 + $0x1e0] sm:$0xf]
        %v2741 = vld [vmem:[#allocation9 + $0x1e4] sm:$0xf]
        %v2742 = vld [vmem:[#allocation9 + $0x1e8] sm:$0xf]
        %v2743 = vld [vmem:[#allocation9 + $0x1ec] sm:$0xf]
        %v2744 = vld [vmem:[#allocation9 + $0x1f0] sm:$0xf]
        %v2745 = vld [vmem:[#allocation9 + $0x1f4] sm:$0xf]
        %v2746 = vld [vmem:[#allocation9 + $0x1f8] sm:$0xf]
        %v2747 = vld [vmem:[#allocation9 + $0x1fc] sm:$0xf]
        %v2748 = vld [vmem:[#allocation9 + $0x200] sm:$0xf]
        %v2749 = vld [vmem:[#allocation9 + $0x204] sm:$0xf]
        %v2750 = vld [vmem:[#allocation9 + $0x208] sm:$0xf]
        %v2751 = vld [vmem:[#allocation9 + $0x20c] sm:$0xf]
        %v2752 = vld [vmem:[#allocation9 + $0x210] sm:$0xf]
        %v2753 = vld [vmem:[#allocation9 + $0x214] sm:$0xf]
        %v2754 = vld [vmem:[#allocation9 + $0x218] sm:$0xf]
        %v2755 = vld [vmem:[#allocation9 + $0x21c] sm:$0xf]
        %v2756 = vld [vmem:[#allocation9 + $0x220] sm:$0xf]
        %v2757 = vld [vmem:[#allocation9 + $0x224] sm:$0xf]
        %v2758 = vld [vmem:[#allocation9 + $0x228] sm:$0xf]
        %v2759 = vld [vmem:[#allocation9 + $0x22c] sm:$0xf]
        %v2760 = vld [vmem:[#allocation9 + $0x230] sm:$0xf]
        %v2761 = vld [vmem:[#allocation9 + $0x234] sm:$0xf]
        %v2762 = vld [vmem:[#allocation9 + $0x238] sm:$0xf]
        %v2763 = vld [vmem:[#allocation9 + $0x23c] sm:$0xf]
        %v2764 = vld [vmem:[%s4] sm:$0x1]
        %v2766 = vlaneseq
        %v2767 = vshrl.u32 %v2766, 7
        %v2768 = vsub.s32 0, %v2767
        %v2769 = vrot.slane %v2764, %v2768
        %v2851 = vunpack.c.l.b16 %v2540
        %v2852 = vunpack.c.h.b16 %v2540
        %v2853 = vunpack.c.l.b16 %v2541
        %v2854 = vunpack.c.h.b16 %v2541
        %v2855 = vunpack.c.l.b16 %v2542
        %v2856 = vunpack.c.h.b16 %v2542
        %v2857 = vunpack.c.l.b16 %v2543
        %v2858 = vunpack.c.h.b16 %v2543
        %v2859 = vunpack.c.l.b16 %v2544
        %v2860 = vunpack.c.l.b16 %v2545
        %v2861 = vunpack.c.h.b16 %v2545
        %v2862 = vunpack.c.l.b16 %v2546
        %v2863 = vunpack.c.h.b16 %v2546
        %v2864 = vunpack.c.l.b16 %v2547
        %v2865 = vunpack.c.h.b16 %v2547
        %v2866 = vunpack.c.l.b16 %v2548
        %v2867 = vunpack.c.h.b16 %v2548
        %v2868 = vunpack.c.l.b16 %v2549
        %v2869 = vunpack.c.l.b16 %v2550
        %v2870 = vunpack.c.h.b16 %v2550
        %v2871 = vunpack.c.l.b16 %v2551
        %v2872 = vunpack.c.h.b16 %v2551
        %v2873 = vunpack.c.l.b16 %v2552
        %v2874 = vunpack.c.h.b16 %v2552
        %v2875 = vunpack.c.l.b16 %v2553
        %v2876 = vunpack.c.h.b16 %v2553
        %v2877 = vunpack.c.l.b16 %v2554
        %v2878 = vunpack.c.l.b16 %v2555
        %v2879 = vunpack.c.h.b16 %v2555
        %v2880 = vunpack.c.l.b16 %v2556
        %v2881 = vunpack.c.h.b16 %v2556
        %v2882 = vunpack.c.l.b16 %v2557
        %v2883 = vunpack.c.h.b16 %v2557
        %v2884 = vunpack.c.l.b16 %v2558
        %v2885 = vunpack.c.h.b16 %v2558
        %v2886 = vunpack.c.l.b16 %v2559
        %v2887 = vunpack.c.l.b16 %v2560
        %v2888 = vunpack.c.h.b16 %v2560
        %v2889 = vunpack.c.l.b16 %v2561
        %v2890 = vunpack.c.h.b16 %v2561
        %v2891 = vunpack.c.l.b16 %v2562
        %v2892 = vunpack.c.h.b16 %v2562
        %v2893 = vunpack.c.l.b16 %v2563
        %v2894 = vunpack.c.h.b16 %v2563
        %v2895 = vunpack.c.l.b16 %v2564
        %v2896 = vunpack.c.l.b16 %v2565
        %v2897 = vunpack.c.h.b16 %v2565
        %v2898 = vunpack.c.l.b16 %v2566
        %v2899 = vunpack.c.h.b16 %v2566
        %v2900 = vunpack.c.l.b16 %v2567
        %v2901 = vunpack.c.h.b16 %v2567
        %v2902 = vunpack.c.l.b16 %v2568
        %v2903 = vunpack.c.h.b16 %v2568
        %v2904 = vunpack.c.l.b16 %v2569
        %v2905 = vunpack.c.l.b16 %v2570
        %v2906 = vunpack.c.h.b16 %v2570
        %v2907 = vunpack.c.l.b16 %v2571
        %v2908 = vunpack.c.h.b16 %v2571
        %v2909 = vunpack.c.l.b16 %v2572
        %v2910 = vunpack.c.h.b16 %v2572
        %v2911 = vunpack.c.l.b16 %v2573
        %v2912 = vunpack.c.h.b16 %v2573
        %v2913 = vunpack.c.l.b16 %v2574
        %v2914 = vunpack.c.l.b16 %v2575
        %v2915 = vunpack.c.h.b16 %v2575
        %v2916 = vunpack.c.l.b16 %v2576
        %v2917 = vunpack.c.h.b16 %v2576
        %v2918 = vunpack.c.l.b16 %v2577
        %v2919 = vunpack.c.h.b16 %v2577
        %v2920 = vunpack.c.l.b16 %v2578
        %v2921 = vunpack.c.h.b16 %v2578
        %v2922 = vunpack.c.l.b16 %v2579
        %v2923 = vunpack.c.l.b16 %v2580
        %v2924 = vunpack.c.h.b16 %v2580
        %v2925 = vunpack.c.l.b16 %v2581
        %v2926 = vunpack.c.h.b16 %v2581
        %v2927 = vunpack.c.l.b16 %v2582
        %v2928 = vunpack.c.h.b16 %v2582
        %v2929 = vunpack.c.l.b16 %v2583
        %v2930 = vunpack.c.h.b16 %v2583
        %v2931 = vunpack.c.l.b16 %v2584
        %v2932 = vunpack.c.l.b16 %v2585
        %v2933 = vunpack.c.h.b16 %v2585
        %v2934 = vunpack.c.l.b16 %v2586
        %v2935 = vunpack.c.h.b16 %v2586
        %v2936 = vunpack.c.l.b16 %v2587
        %v2937 = vunpack.c.h.b16 %v2587
        %v2938 = vunpack.c.l.b16 %v2588
        %v2939 = vunpack.c.h.b16 %v2588
        %v2940 = vunpack.c.l.b16 %v2589
        %v2941 = vunpack.c.l.b16 %v2590
        %v2942 = vunpack.c.h.b16 %v2590
        %v2943 = vunpack.c.l.b16 %v2591
        %v2944 = vunpack.c.h.b16 %v2591
        %v2945 = vunpack.c.l.b16 %v2592
        %v2946 = vunpack.c.h.b16 %v2592
        %v2947 = vunpack.c.l.b16 %v2593
        %v2948 = vunpack.c.h.b16 %v2593
        %v2949 = vunpack.c.l.b16 %v2594
        %v2950 = vunpack.c.l.b16 %v2595
        %v2951 = vunpack.c.h.b16 %v2595
        %v2952 = vunpack.c.l.b16 %v2596
        %v2953 = vunpack.c.h.b16 %v2596
        %v2954 = vunpack.c.l.b16 %v2597
        %v2955 = vunpack.c.h.b16 %v2597
        %v2956 = vunpack.c.l.b16 %v2598
        %v2957 = vunpack.c.h.b16 %v2598
        %v2958 = vunpack.c.l.b16 %v2599
        %v2959 = vunpack.c.l.b16 %v2600
        %v2960 = vunpack.c.h.b16 %v2600
        %v2961 = vunpack.c.l.b16 %v2601
        %v2962 = vunpack.c.h.b16 %v2601
        %v2963 = vunpack.c.l.b16 %v2602
        %v2964 = vunpack.c.h.b16 %v2602
        %v2965 = vunpack.c.l.b16 %v2603
        %v2966 = vunpack.c.h.b16 %v2603
        %v2967 = vunpack.c.l.b16 %v2604
        %v2968 = vunpack.c.l.b16 %v2605
        %v2969 = vunpack.c.h.b16 %v2605
        %v2970 = vunpack.c.l.b16 %v2606
        %v2971 = vunpack.c.h.b16 %v2606
        %v2972 = vunpack.c.l.b16 %v2607
        %v2973 = vunpack.c.h.b16 %v2607
        %v2974 = vunpack.c.l.b16 %v2608
        %v2975 = vunpack.c.h.b16 %v2608
        %v2976 = vunpack.c.l.b16 %v2609
        %v2977 = vunpack.c.l.b16 %v2610
        %v2978 = vunpack.c.h.b16 %v2610
        %v2979 = vunpack.c.l.b16 %v2611
        %v2980 = vunpack.c.h.b16 %v2611
        %v2981 = vunpack.c.l.b16 %v2612
        %v2982 = vunpack.c.h.b16 %v2612
        %v2983 = vunpack.c.l.b16 %v2613
        %v2984 = vunpack.c.h.b16 %v2613
        %v2985 = vunpack.c.l.b16 %v2614
        %v2986 = vunpack.c.l.b16 %v2615
        %v2987 = vunpack.c.h.b16 %v2615
        %v2988 = vunpack.c.l.b16 %v2616
        %v2989 = vunpack.c.h.b16 %v2616
        %v2990 = vunpack.c.l.b16 %v2617
        %v2991 = vunpack.c.h.b16 %v2617
        %v2992 = vunpack.c.l.b16 %v2618
        %v2993 = vunpack.c.h.b16 %v2618
        %v2994 = vunpack.c.l.b16 %v2619
        %v2995 = vpack.c.b16 %v2860, %v2851
        %v2996 = vpack.c.b16 %v2861, %v2852
        %v2997 = vpack.c.b16 %v2862, %v2853
        %v2998 = vpack.c.b16 %v2863, %v2854
        %v2999 = vpack.c.b16 %v2864, %v2855
        %v3000 = vpack.c.b16 %v2865, %v2856
        %v3001 = vpack.c.b16 %v2866, %v2857
        %v3002 = vpack.c.b16 %v2867, %v2858
        %v3003 = vpack.c.b16 %v2868, %v2859
        %v3004 = vpack.c.b16 %v2878, %v2869
        %v3005 = vpack.c.b16 %v2879, %v2870
        %v3006 = vpack.c.b16 %v2880, %v2871
        %v3007 = vpack.c.b16 %v2881, %v2872
        %v3008 = vpack.c.b16 %v2882, %v2873
        %v3009 = vpack.c.b16 %v2883, %v2874
        %v3010 = vpack.c.b16 %v2884, %v2875
        %v3011 = vpack.c.b16 %v2885, %v2876
        %v3012 = vpack.c.b16 %v2886, %v2877
        %v3013 = vpack.c.b16 %v2896, %v2887
        %v3014 = vpack.c.b16 %v2897, %v2888
        %v3015 = vpack.c.b16 %v2898, %v2889
        %v3016 = vpack.c.b16 %v2899, %v2890
        %v3017 = vpack.c.b16 %v2900, %v2891
        %v3018 = vpack.c.b16 %v2901, %v2892
        %v3019 = vpack.c.b16 %v2902, %v2893
        %v3020 = vpack.c.b16 %v2903, %v2894
        %v3021 = vpack.c.b16 %v2904, %v2895
        %v3022 = vpack.c.b16 %v2914, %v2905
        %v3023 = vpack.c.b16 %v2915, %v2906
        %v3024 = vpack.c.b16 %v2916, %v2907
        %v3025 = vpack.c.b16 %v2917, %v2908
        %v3026 = vpack.c.b16 %v2918, %v2909
        %v3027 = vpack.c.b16 %v2919, %v2910
        %v3028 = vpack.c.b16 %v2920, %v2911
        %v3029 = vpack.c.b16 %v2921, %v2912
        %v3030 = vpack.c.b16 %v2922, %v2913
        %v3031 = vpack.c.b16 %v2932, %v2923
        %v3032 = vpack.c.b16 %v2933, %v2924
        %v3033 = vpack.c.b16 %v2934, %v2925
        %v3034 = vpack.c.b16 %v2935, %v2926
        %v3035 = vpack.c.b16 %v2936, %v2927
        %v3036 = vpack.c.b16 %v2937, %v2928
        %v3037 = vpack.c.b16 %v2938, %v2929
        %v3038 = vpack.c.b16 %v2939, %v2930
        %v3039 = vpack.c.b16 %v2940, %v2931
        %v3040 = vpack.c.b16 %v2950, %v2941
        %v3041 = vpack.c.b16 %v2951, %v2942
        %v3042 = vpack.c.b16 %v2952, %v2943
        %v3043 = vpack.c.b16 %v2953, %v2944
        %v3044 = vpack.c.b16 %v2954, %v2945
        %v3045 = vpack.c.b16 %v2955, %v2946
        %v3046 = vpack.c.b16 %v2956, %v2947
        %v3047 = vpack.c.b16 %v2957, %v2948
        %v3048 = vpack.c.b16 %v2958, %v2949
        %v3049 = vpack.c.b16 %v2968, %v2959
        %v3050 = vpack.c.b16 %v2969, %v2960
        %v3051 = vpack.c.b16 %v2970, %v2961
        %v3052 = vpack.c.b16 %v2971, %v2962
        %v3053 = vpack.c.b16 %v2972, %v2963
        %v3054 = vpack.c.b16 %v2973, %v2964
        %v3055 = vpack.c.b16 %v2974, %v2965
        %v3056 = vpack.c.b16 %v2975, %v2966
        %v3057 = vpack.c.b16 %v2976, %v2967
        %v3058 = vpack.c.b16 %v2986, %v2977
        %v3059 = vpack.c.b16 %v2987, %v2978
        %v3060 = vpack.c.b16 %v2988, %v2979
        %v3061 = vpack.c.b16 %v2989, %v2980
        %v3062 = vpack.c.b16 %v2990, %v2981
        %v3063 = vpack.c.b16 %v2991, %v2982
        %v3064 = vpack.c.b16 %v2992, %v2983
        %v3065 = vpack.c.b16 %v2993, %v2984
        %v3066 = vpack.c.b16 %v2994, %v2985
        %v3283 = vunpack.c.l.b16 %v2620
        %v3284 = vunpack.c.l.b16 %v2621
        %v3285 = vunpack.c.l.b16 %v2622
        %v3286 = vunpack.c.l.b16 %v2623
        %v3287 = vunpack.c.l.b16 %v2624
        %v3288 = vunpack.c.l.b16 %v2625
        %v3289 = vunpack.c.l.b16 %v2626
        %v3290 = vunpack.c.l.b16 %v2627
        %v3291 = vunpack.c.l.b16 %v2628
        %v3292 = vunpack.c.l.b16 %v2629
        %v3293 = vunpack.c.l.b16 %v2630
        %v3294 = vunpack.c.l.b16 %v2631
        %v3295 = vunpack.c.l.b16 %v2632
        %v3296 = vunpack.c.l.b16 %v2633
        %v3297 = vunpack.c.l.b16 %v2634
        %v3298 = vunpack.c.l.b16 %v2635
        %v3299 = vunpack.c.l.b16 %v2636
        %v3300 = vunpack.c.l.b16 %v2637
        %v3301 = vunpack.c.l.b16 %v2638
        %v3302 = vunpack.c.l.b16 %v2639
        %v3303 = vunpack.c.l.b16 %v2640
        %v3304 = vunpack.c.l.b16 %v2641
        %v3305 = vunpack.c.l.b16 %v2642
        %v3306 = vunpack.c.l.b16 %v2643
        %v3307 = vunpack.c.l.b16 %v2644
        %v3308 = vunpack.c.l.b16 %v2645
        %v3309 = vunpack.c.l.b16 %v2646
        %v3310 = vunpack.c.l.b16 %v2647
        %v3311 = vunpack.c.l.b16 %v2648
        %v3312 = vunpack.c.l.b16 %v2649
        %v3313 = vunpack.c.l.b16 %v2650
        %v3314 = vunpack.c.l.b16 %v2651
        %v3315 = vunpack.c.l.b16 %v2652
        %v3316 = vunpack.c.l.b16 %v2653
        %v3317 = vunpack.c.l.b16 %v2654
        %v3318 = vunpack.c.l.b16 %v2655
        %v3319 = vunpack.c.l.b16 %v2656
        %v3320 = vunpack.c.l.b16 %v2657
        %v3321 = vunpack.c.l.b16 %v2658
        %v3322 = vunpack.c.l.b16 %v2659
        %v3323 = vunpack.c.l.b16 %v2660
        %v3324 = vunpack.c.l.b16 %v2661
        %v3325 = vunpack.c.l.b16 %v2662
        %v3326 = vunpack.c.l.b16 %v2663
        %v3327 = vunpack.c.l.b16 %v2664
        %v3328 = vunpack.c.l.b16 %v2665
        %v3329 = vunpack.c.l.b16 %v2666
        %v3330 = vunpack.c.l.b16 %v2667
        %v3331 = vunpack.c.l.b16 %v2668
        %v3332 = vunpack.c.l.b16 %v2669
        %v3333 = vunpack.c.l.b16 %v2670
        %v3334 = vunpack.c.l.b16 %v2671
        %v3335 = vunpack.c.l.b16 %v2672
        %v3336 = vunpack.c.l.b16 %v2673
        %v3337 = vunpack.c.l.b16 %v2674
        %v3338 = vunpack.c.l.b16 %v2675
        %v3339 = vunpack.c.l.b16 %v2676
        %v3340 = vunpack.c.l.b16 %v2677
        %v3341 = vunpack.c.l.b16 %v2678
        %v3342 = vunpack.c.l.b16 %v2679
        %v3343 = vunpack.c.l.b16 %v2680
        %v3344 = vunpack.c.l.b16 %v2681
        %v3345 = vunpack.c.l.b16 %v2682
        %v3346 = vunpack.c.l.b16 %v2683
        %v3347 = vunpack.c.l.b16 %v2684
        %v3348 = vunpack.c.l.b16 %v2685
        %v3349 = vunpack.c.l.b16 %v2686
        %v3350 = vunpack.c.l.b16 %v2687
        %v3351 = vunpack.c.l.b16 %v2688
        %v3352 = vunpack.c.l.b16 %v2689
        %v3353 = vunpack.c.l.b16 %v2690
        %v3354 = vunpack.c.l.b16 %v2691
        %v3355 = vunpack.c.l.b16 %v2692
        %v3356 = vunpack.c.l.b16 %v2693
        %v3357 = vunpack.c.l.b16 %v2694
        %v3358 = vunpack.c.l.b16 %v2695
        %v3359 = vunpack.c.l.b16 %v2696
        %v3360 = vunpack.c.l.b16 %v2697
        %v3361 = vunpack.c.l.b16 %v2698
        %v3362 = vunpack.c.l.b16 %v2699
        %v3363 = vunpack.c.l.b16 %v2700
        %v3364 = vunpack.c.l.b16 %v2701
        %v3365 = vunpack.c.l.b16 %v2702
        %v3366 = vunpack.c.l.b16 %v2703
        %v3367 = vunpack.c.l.b16 %v2704
        %v3368 = vunpack.c.l.b16 %v2705
        %v3369 = vunpack.c.l.b16 %v2706
        %v3370 = vunpack.c.l.b16 %v2707
        %v3371 = vunpack.c.l.b16 %v2708
        %v3372 = vunpack.c.l.b16 %v2709
        %v3373 = vunpack.c.l.b16 %v2710
        %v3374 = vunpack.c.l.b16 %v2711
        %v3375 = vunpack.c.l.b16 %v2712
        %v3376 = vunpack.c.l.b16 %v2713
        %v3377 = vunpack.c.l.b16 %v2714
        %v3378 = vunpack.c.l.b16 %v2715
        %v3379 = vunpack.c.l.b16 %v2716
        %v3380 = vunpack.c.l.b16 %v2717
        %v3381 = vunpack.c.l.b16 %v2718
        %v3382 = vunpack.c.l.b16 %v2719
        %v3383 = vunpack.c.l.b16 %v2720
        %v3384 = vunpack.c.l.b16 %v2721
        %v3385 = vunpack.c.l.b16 %v2722
        %v3386 = vunpack.c.l.b16 %v2723
        %v3387 = vunpack.c.l.b16 %v2724
        %v3388 = vunpack.c.l.b16 %v2725
        %v3389 = vunpack.c.l.b16 %v2726
        %v3390 = vunpack.c.l.b16 %v2727
        %v3391 = vunpack.c.l.b16 %v2728
        %v3392 = vunpack.c.l.b16 %v2729
        %v3393 = vunpack.c.l.b16 %v2730
        %v3394 = vunpack.c.l.b16 %v2731
        %v3395 = vunpack.c.l.b16 %v2732
        %v3396 = vunpack.c.l.b16 %v2733
        %v3397 = vunpack.c.l.b16 %v2734
        %v3398 = vunpack.c.l.b16 %v2735
        %v3399 = vunpack.c.l.b16 %v2736
        %v3400 = vunpack.c.l.b16 %v2737
        %v3401 = vunpack.c.l.b16 %v2738
        %v3402 = vunpack.c.l.b16 %v2739
        %v3403 = vunpack.c.l.b16 %v2740
        %v3404 = vunpack.c.l.b16 %v2741
        %v3405 = vunpack.c.l.b16 %v2742
        %v3406 = vunpack.c.l.b16 %v2743
        %v3407 = vunpack.c.l.b16 %v2744
        %v3408 = vunpack.c.l.b16 %v2745
        %v3409 = vunpack.c.l.b16 %v2746
        %v3410 = vunpack.c.l.b16 %v2747
        %v3411 = vunpack.c.l.b16 %v2748
        %v3412 = vunpack.c.l.b16 %v2749
        %v3413 = vunpack.c.l.b16 %v2750
        %v3414 = vunpack.c.l.b16 %v2751
        %v3415 = vunpack.c.l.b16 %v2752
        %v3416 = vunpack.c.l.b16 %v2753
        %v3417 = vunpack.c.l.b16 %v2754
        %v3418 = vunpack.c.l.b16 %v2755
        %v3419 = vunpack.c.l.b16 %v2756
        %v3420 = vunpack.c.l.b16 %v2757
        %v3421 = vunpack.c.l.b16 %v2758
        %v3422 = vunpack.c.l.b16 %v2759
        %v3423 = vunpack.c.l.b16 %v2760
        %v3424 = vunpack.c.l.b16 %v2761
        %v3425 = vunpack.c.l.b16 %v2762
        %v3426 = vunpack.c.l.b16 %v2763
        %v3427 = vpack.c.b16 %v3284, %v3283
        %v3428 = vpack.c.b16 %v3286, %v3285
        %v3429 = vpack.c.b16 %v3288, %v3287
        %v3430 = vpack.c.b16 %v3290, %v3289
        %v3431 = vpack.c.b16 %v3292, %v3291
        %v3432 = vpack.c.b16 %v3294, %v3293
        %v3433 = vpack.c.b16 %v3296, %v3295
        %v3434 = vpack.c.b16 %v3298, %v3297
        %v3435 = vpack.c.b16 %v3300, %v3299
        %v3436 = vpack.c.b16 %v3302, %v3301
        %v3437 = vpack.c.b16 %v3304, %v3303
        %v3438 = vpack.c.b16 %v3306, %v3305
        %v3439 = vpack.c.b16 %v3308, %v3307
        %v3440 = vpack.c.b16 %v3310, %v3309
        %v3441 = vpack.c.b16 %v3312, %v3311
        %v3442 = vpack.c.b16 %v3314, %v3313
        %v3443 = vpack.c.b16 %v3316, %v3315
        %v3444 = vpack.c.b16 %v3318, %v3317
        %v3445 = vpack.c.b16 %v3320, %v3319
        %v3446 = vpack.c.b16 %v3322, %v3321
        %v3447 = vpack.c.b16 %v3324, %v3323
        %v3448 = vpack.c.b16 %v3326, %v3325
        %v3449 = vpack.c.b16 %v3328, %v3327
        %v3450 = vpack.c.b16 %v3330, %v3329
        %v3451 = vpack.c.b16 %v3332, %v3331
        %v3452 = vpack.c.b16 %v3334, %v3333
        %v3453 = vpack.c.b16 %v3336, %v3335
        %v3454 = vpack.c.b16 %v3338, %v3337
        %v3455 = vpack.c.b16 %v3340, %v3339
        %v3456 = vpack.c.b16 %v3342, %v3341
        %v3457 = vpack.c.b16 %v3344, %v3343
        %v3458 = vpack.c.b16 %v3346, %v3345
        %v3459 = vpack.c.b16 %v3348, %v3347
        %v3460 = vpack.c.b16 %v3350, %v3349
        %v3461 = vpack.c.b16 %v3352, %v3351
        %v3462 = vpack.c.b16 %v3354, %v3353
        %v3463 = vpack.c.b16 %v3356, %v3355
        %v3464 = vpack.c.b16 %v3358, %v3357
        %v3465 = vpack.c.b16 %v3360, %v3359
        %v3466 = vpack.c.b16 %v3362, %v3361
        %v3467 = vpack.c.b16 %v3364, %v3363
        %v3468 = vpack.c.b16 %v3366, %v3365
        %v3469 = vpack.c.b16 %v3368, %v3367
        %v3470 = vpack.c.b16 %v3370, %v3369
        %v3471 = vpack.c.b16 %v3372, %v3371
        %v3472 = vpack.c.b16 %v3374, %v3373
        %v3473 = vpack.c.b16 %v3376, %v3375
        %v3474 = vpack.c.b16 %v3378, %v3377
        %v3475 = vpack.c.b16 %v3380, %v3379
        %v3476 = vpack.c.b16 %v3382, %v3381
        %v3477 = vpack.c.b16 %v3384, %v3383
        %v3478 = vpack.c.b16 %v3386, %v3385
        %v3479 = vpack.c.b16 %v3388, %v3387
        %v3480 = vpack.c.b16 %v3390, %v3389
        %v3481 = vpack.c.b16 %v3392, %v3391
        %v3482 = vpack.c.b16 %v3394, %v3393
        %v3483 = vpack.c.b16 %v3396, %v3395
        %v3484 = vpack.c.b16 %v3398, %v3397
        %v3485 = vpack.c.b16 %v3400, %v3399
        %v3486 = vpack.c.b16 %v3402, %v3401
        %v3487 = vpack.c.b16 %v3404, %v3403
        %v3488 = vpack.c.b16 %v3406, %v3405
        %v3489 = vpack.c.b16 %v3408, %v3407
        %v3490 = vpack.c.b16 %v3410, %v3409
        %v3491 = vpack.c.b16 %v3412, %v3411
        %v3492 = vpack.c.b16 %v3414, %v3413
        %v3493 = vpack.c.b16 %v3416, %v3415
        %v3494 = vpack.c.b16 %v3418, %v3417
        %v3495 = vpack.c.b16 %v3420, %v3419
        %v3496 = vpack.c.b16 %v3422, %v3421
        %v3497 = vpack.c.b16 %v3424, %v3423
        %v3498 = vpack.c.b16 %v3426, %v3425
        %3571 = vmatprep.subr.bf16.mxu0 0
        %3572 = vmatpush1.bf16.msra.mxu0 %v3434
        %3573 = vmatprep.subr.bf16.mxu0 0
        %3574 = vmatpush1.bf16.msra.mxu0 %v3433
        %3575 = vmatprep.subr.bf16.mxu0 0
        %3576 = vmatpush1.bf16.msra.mxu0 %v3432
        %3577 = vmatprep.subr.bf16.mxu0 0
        %3578 = vmatpush1.bf16.msra.mxu0 %v3431
        %3579 = vmatprep.subr.bf16.mxu0 0
        %3580 = vmatpush1.bf16.msra.mxu0 %v3430
        %3581 = vmatprep.subr.bf16.mxu0 0
        %3582 = vmatpush1.bf16.msra.mxu0 %v3429
        %3583 = vmatprep.subr.bf16.mxu0 0
        %3584 = vmatpush1.bf16.msra.mxu0 %v3428
        %3585 = vmatprep.subr.bf16.mxu0 0
        %3586 = vmatpush1.bf16.msra.mxu0 %v3427
        %3587 = vmatprep.subr.bf16.mxu0 0
        %3588 = vmatpush2.bf16.msra.mxu0 %v3442
        %3589 = vmatprep.subr.bf16.mxu0 0
        %3590 = vmatpush2.bf16.msra.mxu0 %v3441
        %3591 = vmatprep.subr.bf16.mxu0 0
        %3592 = vmatpush2.bf16.msra.mxu0 %v3440
        %3593 = vmatprep.subr.bf16.mxu0 0
        %3594 = vmatpush2.bf16.msra.mxu0 %v3439
        %3595 = vmatprep.subr.bf16.mxu0 0
        %3596 = vmatpush2.bf16.msra.mxu0 %v3438
        %3597 = vmatprep.subr.bf16.mxu0 0
        %3598 = vmatpush2.bf16.msra.mxu0 %v3437
        %3599 = vmatprep.subr.bf16.mxu0 0
        %3600 = vmatpush2.bf16.msra.mxu0 %v3436
        %3601 = vmatprep.subr.bf16.mxu0 0
        %3602 = vmatpush2.bf16.msra.mxu0 %v3435
        %3603 = vmatprep.mubr.bf16.mxu0 %v2996
        %3604 = vmatmul.mubr.bf16.gmra.mxu0 %v2995
        %v3605 = vpop.f32.mrf.mxu0
        %v3606 = vadd.f32 %v2769, %v3605
        %v3607 = vpop.f32.mrf.mxu0
        %v3608 = vpop.f32.mrf.mxu0
        %v3609 = vadd.f32 %v2769, %v3608
        %v3610 = vpop.f32.mrf.mxu0
        %3611 = vmatprep.mubr.bf16.mxu0 %v3005
        %3612 = vmatmul.mubr.bf16.gmra.mxu0 %v3004
        %v3613 = vpop.f32.mrf.mxu0
        %v3614 = vadd.f32 %v2769, %v3613
        %v3615 = vpop.f32.mrf.mxu0
        %v3616 = vpop.f32.mrf.mxu0
        %v3617 = vadd.f32 %v2769, %v3616
        %v3618 = vpop.f32.mrf.mxu0
        %3619 = vmatprep.mubr.bf16.mxu0 %v3014
        %3620 = vmatmul.mubr.bf16.gmra.mxu0 %v3013
        %v3621 = vpop.f32.mrf.mxu0
        %v3622 = vadd.f32 %v2769, %v3621
        %v3623 = vpop.f32.mrf.mxu0
        %v3624 = vpop.f32.mrf.mxu0
        %v3625 = vadd.f32 %v2769, %v3624
        %v3626 = vpop.f32.mrf.mxu0
        %3627 = vmatprep.mubr.bf16.mxu0 %v3023
        %3628 = vmatmul.mubr.bf16.gmra.mxu0 %v3022
        %v3629 = vpop.f32.mrf.mxu0
        %v3630 = vadd.f32 %v2769, %v3629
        %v3631 = vpop.f32.mrf.mxu0
        %v3632 = vpop.f32.mrf.mxu0
        %v3633 = vadd.f32 %v2769, %v3632
        %v3634 = vpop.f32.mrf.mxu0
        %3635 = vmatprep.mubr.bf16.mxu0 %v3032
        %3636 = vmatmul.mubr.bf16.gmra.mxu0 %v3031
        %v3637 = vpop.f32.mrf.mxu0
        %v3638 = vadd.f32 %v2769, %v3637
        %v3639 = vpop.f32.mrf.mxu0
        %v3640 = vpop.f32.mrf.mxu0
        %v3641 = vadd.f32 %v2769, %v3640
        %v3642 = vpop.f32.mrf.mxu0
        %3643 = vmatprep.mubr.bf16.mxu0 %v3041
        %3644 = vmatmul.mubr.bf16.gmra.mxu0 %v3040
        %v3645 = vpop.f32.mrf.mxu0
        %v3646 = vadd.f32 %v2769, %v3645
        %v3647 = vpop.f32.mrf.mxu0
        %v3648 = vpop.f32.mrf.mxu0
        %v3649 = vadd.f32 %v2769, %v3648
        %v3650 = vpop.f32.mrf.mxu0
        %3651 = vmatprep.mubr.bf16.mxu0 %v3050
        %3652 = vmatmul.mubr.bf16.gmra.mxu0 %v3049
        %v3653 = vpop.f32.mrf.mxu0
        %v3654 = vadd.f32 %v2769, %v3653
        %v3655 = vpop.f32.mrf.mxu0
        %v3656 = vpop.f32.mrf.mxu0
        %v3657 = vadd.f32 %v2769, %v3656
        %v3658 = vpop.f32.mrf.mxu0
        %3659 = vmatprep.mubr.bf16.mxu0 %v3059
        %3660 = vmatmul.mubr.bf16.gmra.mxu0 %v3058
        %v3661 = vpop.f32.mrf.mxu0
        %v3662 = vadd.f32 %v2769, %v3661
        %v3663 = vpop.f32.mrf.mxu0
        %v3664 = vpop.f32.mrf.mxu0
        %v3665 = vadd.f32 %v2769, %v3664
        %v3666 = vpop.f32.mrf.mxu0
        %3667 = vdwg.mxu0
        %3668 = vmatprep.subr.bf16.mxu0 0
        %3669 = vmatpush1.bf16.msra.mxu0 %v3450
        %3670 = vmatprep.subr.bf16.mxu0 0
        %3671 = vmatpush1.bf16.msra.mxu0 %v3449
        %3672 = vmatprep.subr.bf16.mxu0 0
        %3673 = vmatpush1.bf16.msra.mxu0 %v3448
        %3674 = vmatprep.subr.bf16.mxu0 0
        %3675 = vmatpush1.bf16.msra.mxu0 %v3447
        %3676 = vmatprep.subr.bf16.mxu0 0
        %3677 = vmatpush1.bf16.msra.mxu0 %v3446
        %3678 = vmatprep.subr.bf16.mxu0 0
        %3679 = vmatpush1.bf16.msra.mxu0 %v3445
        %3680 = vmatprep.subr.bf16.mxu0 0
        %3681 = vmatpush1.bf16.msra.mxu0 %v3444
        %3682 = vmatprep.subr.bf16.mxu0 0
        %3683 = vmatpush1.bf16.msra.mxu0 %v3443
        %3684 = vmatprep.subr.bf16.mxu0 0
        %3685 = vmatpush2.bf16.msra.mxu0 %v3458
        %3686 = vmatprep.subr.bf16.mxu0 0
        %3687 = vmatpush2.bf16.msra.mxu0 %v3457
        %3688 = vmatprep.subr.bf16.mxu0 0
        %3689 = vmatpush2.bf16.msra.mxu0 %v3456
        %3690 = vmatprep.subr.bf16.mxu0 0
        %3691 = vmatpush2.bf16.msra.mxu0 %v3455
        %3692 = vmatprep.subr.bf16.mxu0 0
        %3693 = vmatpush2.bf16.msra.mxu0 %v3454
        %3694 = vmatprep.subr.bf16.mxu0 0
        %3695 = vmatpush2.bf16.msra.mxu0 %v3453
        %3696 = vmatprep.subr.bf16.mxu0 0
        %3697 = vmatpush2.bf16.msra.mxu0 %v3452
        %3698 = vmatprep.subr.bf16.mxu0 0
        %3699 = vmatpush2.bf16.msra.mxu0 %v3451
        %3700 = vmatprep.mubr.bf16.mxu0 %v2998
        %3701 = vmatmul.mubr.bf16.gmra.mxu0 %v2997
        %v3702 = vpop.f32.mrf.mxu0
        %v3703 = vadd.f32 %v3606, %v3702
        %v3704 = vpop.f32.mrf.mxu0
        %v3705 = vpop.f32.mrf.mxu0
        %v3706 = vadd.f32 %v3609, %v3705
        %v3707 = vpop.f32.mrf.mxu0
        %3708 = vmatprep.mubr.bf16.mxu0 %v3007
        %3709 = vmatmul.mubr.bf16.gmra.mxu0 %v3006
        %v3710 = vpop.f32.mrf.mxu0
        %v3711 = vadd.f32 %v3614, %v3710
        %v3712 = vpop.f32.mrf.mxu0
        %v3713 = vpop.f32.mrf.mxu0
        %v3714 = vadd.f32 %v3617, %v3713
        %v3715 = vpop.f32.mrf.mxu0
        %3716 = vmatprep.mubr.bf16.mxu0 %v3016
        %3717 = vmatmul.mubr.bf16.gmra.mxu0 %v3015
        %v3718 = vpop.f32.mrf.mxu0
        %v3719 = vadd.f32 %v3622, %v3718
        %v3720 = vpop.f32.mrf.mxu0
        %v3721 = vpop.f32.mrf.mxu0
        %v3722 = vadd.f32 %v3625, %v3721
        %v3723 = vpop.f32.mrf.mxu0
        %3724 = vmatprep.mubr.bf16.mxu0 %v3025
        %3725 = vmatmul.mubr.bf16.gmra.mxu0 %v3024
        %v3726 = vpop.f32.mrf.mxu0
        %v3727 = vadd.f32 %v3630, %v3726
        %v3728 = vpop.f32.mrf.mxu0
        %v3729 = vpop.f32.mrf.mxu0
        %v3730 = vadd.f32 %v3633, %v3729
        %v3731 = vpop.f32.mrf.mxu0
        %3732 = vmatprep.mubr.bf16.mxu0 %v3034
        %3733 = vmatmul.mubr.bf16.gmra.mxu0 %v3033
        %v3734 = vpop.f32.mrf.mxu0
        %v3735 = vadd.f32 %v3638, %v3734
        %v3736 = vpop.f32.mrf.mxu0
        %v3737 = vpop.f32.mrf.mxu0
        %v3738 = vadd.f32 %v3641, %v3737
        %v3739 = vpop.f32.mrf.mxu0
        %3740 = vmatprep.mubr.bf16.mxu0 %v3043
        %3741 = vmatmul.mubr.bf16.gmra.mxu0 %v3042
        %v3742 = vpop.f32.mrf.mxu0
        %v3743 = vadd.f32 %v3646, %v3742
        %v3744 = vpop.f32.mrf.mxu0
        %v3745 = vpop.f32.mrf.mxu0
        %v3746 = vadd.f32 %v3649, %v3745
        %v3747 = vpop.f32.mrf.mxu0
        %3748 = vmatprep.mubr.bf16.mxu0 %v3052
        %3749 = vmatmul.mubr.bf16.gmra.mxu0 %v3051
        %v3750 = vpop.f32.mrf.mxu0
        %v3751 = vadd.f32 %v3654, %v3750
        %v3752 = vpop.f32.mrf.mxu0
        %v3753 = vpop.f32.mrf.mxu0
        %v3754 = vadd.f32 %v3657, %v3753
        %v3755 = vpop.f32.mrf.mxu0
        %3756 = vmatprep.mubr.bf16.mxu0 %v3061
        %3757 = vmatmul.mubr.bf16.gmra.mxu0 %v3060
        %v3758 = vpop.f32.mrf.mxu0
        %v3759 = vadd.f32 %v3662, %v3758
        %v3760 = vpop.f32.mrf.mxu0
        %v3761 = vpop.f32.mrf.mxu0
        %v3762 = vadd.f32 %v3665, %v3761
        %v3763 = vpop.f32.mrf.mxu0
        %3764 = vdwg.mxu0
        %3765 = vmatprep.subr.bf16.mxu0 0
        %3766 = vmatpush1.bf16.msra.mxu0 %v3466
        %3767 = vmatprep.subr.bf16.mxu0 0
        %3768 = vmatpush1.bf16.msra.mxu0 %v3465
        %3769 = vmatprep.subr.bf16.mxu0 0
        %3770 = vmatpush1.bf16.msra.mxu0 %v3464
        %3771 = vmatprep.subr.bf16.mxu0 0
        %3772 = vmatpush1.bf16.msra.mxu0 %v3463
        %3773 = vmatprep.subr.bf16.mxu0 0
        %3774 = vmatpush1.bf16.msra.mxu0 %v3462
        %3775 = vmatprep.subr.bf16.mxu0 0
        %3776 = vmatpush1.bf16.msra.mxu0 %v3461
        %3777 = vmatprep.subr.bf16.mxu0 0
        %3778 = vmatpush1.bf16.msra.mxu0 %v3460
        %3779 = vmatprep.subr.bf16.mxu0 0
        %3780 = vmatpush1.bf16.msra.mxu0 %v3459
        %3781 = vmatprep.subr.bf16.mxu0 0
        %3782 = vmatpush2.bf16.msra.mxu0 %v3474
        %3783 = vmatprep.subr.bf16.mxu0 0
        %3784 = vmatpush2.bf16.msra.mxu0 %v3473
        %3785 = vmatprep.subr.bf16.mxu0 0
        %3786 = vmatpush2.bf16.msra.mxu0 %v3472
        %3787 = vmatprep.subr.bf16.mxu0 0
        %3788 = vmatpush2.bf16.msra.mxu0 %v3471
        %3789 = vmatprep.subr.bf16.mxu0 0
        %3790 = vmatpush2.bf16.msra.mxu0 %v3470
        %3791 = vmatprep.subr.bf16.mxu0 0
        %3792 = vmatpush2.bf16.msra.mxu0 %v3469
        %3793 = vmatprep.subr.bf16.mxu0 0
        %3794 = vmatpush2.bf16.msra.mxu0 %v3468
        %3795 = vmatprep.subr.bf16.mxu0 0
        %3796 = vmatpush2.bf16.msra.mxu0 %v3467
        %3797 = vmatprep.mubr.bf16.mxu0 %v3000
        %3798 = vmatmul.mubr.bf16.gmra.mxu0 %v2999
        %v3799 = vpop.f32.mrf.mxu0
        %v3800 = vadd.f32 %v3703, %v3799
        %v3801 = vpop.f32.mrf.mxu0
        %v3802 = vpop.f32.mrf.mxu0
        %v3803 = vadd.f32 %v3706, %v3802
        %v3804 = vpop.f32.mrf.mxu0
        %3805 = vmatprep.mubr.bf16.mxu0 %v3009
        %3806 = vmatmul.mubr.bf16.gmra.mxu0 %v3008
        %v3807 = vpop.f32.mrf.mxu0
        %v3808 = vadd.f32 %v3711, %v3807
        %v3809 = vpop.f32.mrf.mxu0
        %v3810 = vpop.f32.mrf.mxu0
        %v3811 = vadd.f32 %v3714, %v3810
        %v3812 = vpop.f32.mrf.mxu0
        %3813 = vmatprep.mubr.bf16.mxu0 %v3018
        %3814 = vmatmul.mubr.bf16.gmra.mxu0 %v3017
        %v3815 = vpop.f32.mrf.mxu0
        %v3816 = vadd.f32 %v3719, %v3815
        %v3817 = vpop.f32.mrf.mxu0
        %v3818 = vpop.f32.mrf.mxu0
        %v3819 = vadd.f32 %v3722, %v3818
        %v3820 = vpop.f32.mrf.mxu0
        %3821 = vmatprep.mubr.bf16.mxu0 %v3027
        %3822 = vmatmul.mubr.bf16.gmra.mxu0 %v3026
        %v3823 = vpop.f32.mrf.mxu0
        %v3824 = vadd.f32 %v3727, %v3823
        %v3825 = vpop.f32.mrf.mxu0
        %v3826 = vpop.f32.mrf.mxu0
        %v3827 = vadd.f32 %v3730, %v3826
        %v3828 = vpop.f32.mrf.mxu0
        %3829 = vmatprep.mubr.bf16.mxu0 %v3036
        %3830 = vmatmul.mubr.bf16.gmra.mxu0 %v3035
        %v3831 = vpop.f32.mrf.mxu0
        %v3832 = vadd.f32 %v3735, %v3831
        %v3833 = vpop.f32.mrf.mxu0
        %v3834 = vpop.f32.mrf.mxu0
        %v3835 = vadd.f32 %v3738, %v3834
        %v3836 = vpop.f32.mrf.mxu0
        %3837 = vmatprep.mubr.bf16.mxu0 %v3045
        %3838 = vmatmul.mubr.bf16.gmra.mxu0 %v3044
        %v3839 = vpop.f32.mrf.mxu0
        %v3840 = vadd.f32 %v3743, %v3839
        %v3841 = vpop.f32.mrf.mxu0
        %v3842 = vpop.f32.mrf.mxu0
        %v3843 = vadd.f32 %v3746, %v3842
        %v3844 = vpop.f32.mrf.mxu0
        %3845 = vmatprep.mubr.bf16.mxu0 %v3054
        %3846 = vmatmul.mubr.bf16.gmra.mxu0 %v3053
        %v3847 = vpop.f32.mrf.mxu0
        %v3848 = vadd.f32 %v3751, %v3847
        %v3849 = vpop.f32.mrf.mxu0
        %v3850 = vpop.f32.mrf.mxu0
        %v3851 = vadd.f32 %v3754, %v3850
        %v3852 = vpop.f32.mrf.mxu0
        %3853 = vmatprep.mubr.bf16.mxu0 %v3063
        %3854 = vmatmul.mubr.bf16.gmra.mxu0 %v3062
        %v3855 = vpop.f32.mrf.mxu0
        %v3856 = vadd.f32 %v3759, %v3855
        %v3857 = vpop.f32.mrf.mxu0
        %v3858 = vpop.f32.mrf.mxu0
        %v3859 = vadd.f32 %v3762, %v3858
        %v3860 = vpop.f32.mrf.mxu0
        %3861 = vdwg.mxu0
        %3862 = vmatprep.subr.bf16.mxu0 0
        %3863 = vmatpush1.bf16.msra.mxu0 %v3482
        %3864 = vmatprep.subr.bf16.mxu0 0
        %3865 = vmatpush1.bf16.msra.mxu0 %v3481
        %3866 = vmatprep.subr.bf16.mxu0 0
        %3867 = vmatpush1.bf16.msra.mxu0 %v3480
        %3868 = vmatprep.subr.bf16.mxu0 0
        %3869 = vmatpush1.bf16.msra.mxu0 %v3479
        %3870 = vmatprep.subr.bf16.mxu0 0
        %3871 = vmatpush1.bf16.msra.mxu0 %v3478
        %3872 = vmatprep.subr.bf16.mxu0 0
        %3873 = vmatpush1.bf16.msra.mxu0 %v3477
        %3874 = vmatprep.subr.bf16.mxu0 0
        %3875 = vmatpush1.bf16.msra.mxu0 %v3476
        %3876 = vmatprep.subr.bf16.mxu0 0
        %3877 = vmatpush1.bf16.msra.mxu0 %v3475
        %3878 = vmatprep.subr.bf16.mxu0 0
        %3879 = vmatpush2.bf16.msra.mxu0 %v3490
        %3880 = vmatprep.subr.bf16.mxu0 0
        %3881 = vmatpush2.bf16.msra.mxu0 %v3489
        %3882 = vmatprep.subr.bf16.mxu0 0
        %3883 = vmatpush2.bf16.msra.mxu0 %v3488
        %3884 = vmatprep.subr.bf16.mxu0 0
        %3885 = vmatpush2.bf16.msra.mxu0 %v3487
        %3886 = vmatprep.subr.bf16.mxu0 0
        %3887 = vmatpush2.bf16.msra.mxu0 %v3486
        %3888 = vmatprep.subr.bf16.mxu0 0
        %3889 = vmatpush2.bf16.msra.mxu0 %v3485
        %3890 = vmatprep.subr.bf16.mxu0 0
        %3891 = vmatpush2.bf16.msra.mxu0 %v3484
        %3892 = vmatprep.subr.bf16.mxu0 0
        %3893 = vmatpush2.bf16.msra.mxu0 %v3483
        %3894 = vmatprep.mubr.bf16.mxu0 %v3002
        %3895 = vmatmul.mubr.bf16.gmra.mxu0 %v3001
        %v3896 = vpop.f32.mrf.mxu0
        %v3897 = vadd.f32 %v3800, %v3896
        %v3898 = vpop.f32.mrf.mxu0
        %v3899 = vpop.f32.mrf.mxu0
        %v3900 = vadd.f32 %v3803, %v3899
        %v3901 = vpop.f32.mrf.mxu0
        %3902 = vmatprep.mubr.bf16.mxu0 %v3011
        %3903 = vmatmul.mubr.bf16.gmra.mxu0 %v3010
        %v3904 = vpop.f32.mrf.mxu0
        %v3905 = vadd.f32 %v3808, %v3904
        %v3906 = vpop.f32.mrf.mxu0
        %v3907 = vpop.f32.mrf.mxu0
        %v3908 = vadd.f32 %v3811, %v3907
        %v3909 = vpop.f32.mrf.mxu0
        %3910 = vmatprep.mubr.bf16.mxu0 %v3020
        %3911 = vmatmul.mubr.bf16.gmra.mxu0 %v3019
        %v3912 = vpop.f32.mrf.mxu0
        %v3913 = vadd.f32 %v3816, %v3912
        %v3914 = vpop.f32.mrf.mxu0
        %v3915 = vpop.f32.mrf.mxu0
        %v3916 = vadd.f32 %v3819, %v3915
        %v3917 = vpop.f32.mrf.mxu0
        %3918 = vmatprep.mubr.bf16.mxu0 %v3029
        %3919 = vmatmul.mubr.bf16.gmra.mxu0 %v3028
        %v3920 = vpop.f32.mrf.mxu0
        %v3921 = vadd.f32 %v3824, %v3920
        %v3922 = vpop.f32.mrf.mxu0
        %v3923 = vpop.f32.mrf.mxu0
        %v3924 = vadd.f32 %v3827, %v3923
        %v3925 = vpop.f32.mrf.mxu0
        %3926 = vmatprep.mubr.bf16.mxu0 %v3038
        %3927 = vmatmul.mubr.bf16.gmra.mxu0 %v3037
        %v3928 = vpop.f32.mrf.mxu0
        %v3929 = vadd.f32 %v3832, %v3928
        %v3930 = vpop.f32.mrf.mxu0
        %v3931 = vpop.f32.mrf.mxu0
        %v3932 = vadd.f32 %v3835, %v3931
        %v3933 = vpop.f32.mrf.mxu0
        %3934 = vmatprep.mubr.bf16.mxu0 %v3047
        %3935 = vmatmul.mubr.bf16.gmra.mxu0 %v3046
        %v3936 = vpop.f32.mrf.mxu0
        %v3937 = vadd.f32 %v3840, %v3936
        %v3938 = vpop.f32.mrf.mxu0
        %v3939 = vpop.f32.mrf.mxu0
        %v3940 = vadd.f32 %v3843, %v3939
        %v3941 = vpop.f32.mrf.mxu0
        %3942 = vmatprep.mubr.bf16.mxu0 %v3056
        %3943 = vmatmul.mubr.bf16.gmra.mxu0 %v3055
        %v3944 = vpop.f32.mrf.mxu0
        %v3945 = vadd.f32 %v3848, %v3944
        %v3946 = vpop.f32.mrf.mxu0
        %v3947 = vpop.f32.mrf.mxu0
        %v3948 = vadd.f32 %v3851, %v3947
        %v3949 = vpop.f32.mrf.mxu0
        %3950 = vmatprep.mubr.bf16.mxu0 %v3065
        %3951 = vmatmul.mubr.bf16.gmra.mxu0 %v3064
        %v3952 = vpop.f32.mrf.mxu0
        %v3953 = vadd.f32 %v3856, %v3952
        %v3954 = vpop.f32.mrf.mxu0
        %v3955 = vpop.f32.mrf.mxu0
        %v3956 = vadd.f32 %v3859, %v3955
        %v3957 = vpop.f32.mrf.mxu0
        %3958 = vdwg.mxu0
        %3959 = vmatprep.subr.bf16.mxu0 0
        %3960 = vmatpush1.bf16.msra.mxu0 %v3498
        %3961 = vmatprep.subr.bf16.mxu0 0
        %3962 = vmatpush1.bf16.msra.mxu0 %v3497
        %3963 = vmatprep.subr.bf16.mxu0 0
        %3964 = vmatpush1.bf16.msra.mxu0 %v3496
        %3965 = vmatprep.subr.bf16.mxu0 0
        %3966 = vmatpush1.bf16.msra.mxu0 %v3495
        %3967 = vmatprep.subr.bf16.mxu0 0
        %3968 = vmatpush1.bf16.msra.mxu0 %v3494
        %3969 = vmatprep.subr.bf16.mxu0 0
        %3970 = vmatpush1.bf16.msra.mxu0 %v3493
        %3971 = vmatprep.subr.bf16.mxu0 0
        %3972 = vmatpush1.bf16.msra.mxu0 %v3492
        %3973 = vmatprep.subr.bf16.mxu0 0
        %3974 = vmatpush1.bf16.msra.mxu0 %v3491
        %3975 = vmatprep.subr.bf16.mxu0 0
        %3976 = vmatpush2.bf16.msra.mxu0 0
        %3977 = vmatprep.subr.bf16.mxu0 0
        %3978 = vmatpush2.bf16.msra.mxu0 0
        %3979 = vmatprep.subr.bf16.mxu0 0
        %3980 = vmatpush2.bf16.msra.mxu0 0
        %3981 = vmatprep.subr.bf16.mxu0 0
        %3982 = vmatpush2.bf16.msra.mxu0 0
        %3983 = vmatprep.subr.bf16.mxu0 0
        %3984 = vmatpush2.bf16.msra.mxu0 0
        %3985 = vmatprep.subr.bf16.mxu0 0
        %3986 = vmatpush2.bf16.msra.mxu0 0
        %3987 = vmatprep.subr.bf16.mxu0 0
        %3988 = vmatpush2.bf16.msra.mxu0 0
        %3989 = vmatprep.subr.bf16.mxu0 0
        %3990 = vmatpush2.bf16.msra.mxu0 0
        %3991 = vmatprep.mubr.bf16.mxu0 0
        %3992 = vmatmul.mubr.bf16.gmra.mxu0 %v3003
        %v3993 = vpop.f32.mrf.mxu0
        %v3994 = vadd.f32 %v3897, %v3993
        %v3995 = vpop.f32.mrf.mxu0
        %v3996 = vpop.f32.mrf.mxu0
        %v3997 = vadd.f32 %v3900, %v3996
        %v3998 = vpop.f32.mrf.mxu0
        %3999 = vmatprep.mubr.bf16.mxu0 0
        %4000 = vmatmul.mubr.bf16.gmra.mxu0 %v3012
        %v4001 = vpop.f32.mrf.mxu0
        %v4002 = vadd.f32 %v3905, %v4001
        %v4003 = vpop.f32.mrf.mxu0
        %v4004 = vpop.f32.mrf.mxu0
        %v4005 = vadd.f32 %v3908, %v4004
        %v4006 = vpop.f32.mrf.mxu0
        %4007 = vmatprep.mubr.bf16.mxu0 0
        %4008 = vmatmul.mubr.bf16.gmra.mxu0 %v3021
        %v4009 = vpop.f32.mrf.mxu0
        %v4010 = vadd.f32 %v3913, %v4009
        %v4011 = vpop.f32.mrf.mxu0
        %v4012 = vpop.f32.mrf.mxu0
        %v4013 = vadd.f32 %v3916, %v4012
        %v4014 = vpop.f32.mrf.mxu0
        %4015 = vmatprep.mubr.bf16.mxu0 0
        %4016 = vmatmul.mubr.bf16.gmra.mxu0 %v3030
        %v4017 = vpop.f32.mrf.mxu0
        %v4018 = vadd.f32 %v3921, %v4017
        %v4019 = vpop.f32.mrf.mxu0
        %v4020 = vpop.f32.mrf.mxu0
        %v4021 = vadd.f32 %v3924, %v4020
        %v4022 = vpop.f32.mrf.mxu0
        %4023 = vmatprep.mubr.bf16.mxu0 0
        %4024 = vmatmul.mubr.bf16.gmra.mxu0 %v3039
        %v4025 = vpop.f32.mrf.mxu0
        %v4026 = vadd.f32 %v3929, %v4025
        %v4027 = vpop.f32.mrf.mxu0
        %v4028 = vpop.f32.mrf.mxu0
        %v4029 = vadd.f32 %v3932, %v4028
        %v4030 = vpop.f32.mrf.mxu0
        %4031 = vmatprep.mubr.bf16.mxu0 0
        %4032 = vmatmul.mubr.bf16.gmra.mxu0 %v3048
        %v4033 = vpop.f32.mrf.mxu0
        %v4034 = vadd.f32 %v3937, %v4033
        %v4035 = vpop.f32.mrf.mxu0
        %v4036 = vpop.f32.mrf.mxu0
        %v4037 = vadd.f32 %v3940, %v4036
        %v4038 = vpop.f32.mrf.mxu0
        %4039 = vmatprep.mubr.bf16.mxu0 0
        %4040 = vmatmul.mubr.bf16.gmra.mxu0 %v3057
        %v4041 = vpop.f32.mrf.mxu0
        %v4042 = vadd.f32 %v3945, %v4041
        %v4043 = vpop.f32.mrf.mxu0
        %v4044 = vpop.f32.mrf.mxu0
        %v4045 = vadd.f32 %v3948, %v4044
        %v4046 = vpop.f32.mrf.mxu0
        %4047 = vmatprep.mubr.bf16.mxu0 0
        %4048 = vmatmul.mubr.bf16.gmra.mxu0 %v3066
        %v4049 = vpop.f32.mrf.mxu0
        %v4050 = vadd.f32 %v3953, %v4049
        %v4051 = vpop.f32.mrf.mxu0
        %v4052 = vpop.f32.mrf.mxu0
        %v4053 = vadd.f32 %v3956, %v4052
        %v4054 = vpop.f32.mrf.mxu0
        %4055 = vdwg.mxu0
        %v4056 = vmax.f32 %v3994, 0.0
        %v4057 = vmax.f32 %v3997, 0.0
        %v4058 = vmax.f32 %v4002, 0.0
        %v4059 = vmax.f32 %v4005, 0.0
        %v4060 = vmax.f32 %v4010, 0.0
        %v4061 = vmax.f32 %v4013, 0.0
        %v4062 = vmax.f32 %v4018, 0.0
        %v4063 = vmax.f32 %v4021, 0.0
        %v4064 = vmax.f32 %v4026, 0.0
        %v4065 = vmax.f32 %v4029, 0.0
        %v4066 = vmax.f32 %v4034, 0.0
        %v4067 = vmax.f32 %v4037, 0.0
        %v4068 = vmax.f32 %v4042, 0.0
        %v4069 = vmax.f32 %v4045, 0.0
        %v4070 = vmax.f32 %v4050, 0.0
        %v4071 = vmax.f32 %v4053, 0.0
        %v4072 = vpack.c.bf16 %v4057, %v4056
        %v4073 = vpack.c.bf16 %v4059, %v4058
        %v4074 = vpack.c.bf16 %v4061, %v4060
        %v4075 = vpack.c.bf16 %v4063, %v4062
        %v4076 = vpack.c.bf16 %v4065, %v4064
        %v4077 = vpack.c.bf16 %v4067, %v4066
        %v4078 = vpack.c.bf16 %v4069, %v4068
        %v4079 = vpack.c.bf16 %v4071, %v4070
        %v4080 = vld [vmem:[#allocation10] sm:$0xf]
        %v4081 = vld [vmem:[#allocation10 + $0x4] sm:$0xf]
        %v4082 = vld [vmem:[#allocation10 + $0x8] sm:$0xf]
        %v4083 = vld [vmem:[#allocation10 + $0xc] sm:$0xf]
        %v4084 = vld [vmem:[#allocation10 + $0x10] sm:$0xf]
        %v4085 = vld [vmem:[#allocation10 + $0x14] sm:$0xf]
        %v4086 = vld [vmem:[#allocation10 + $0x18] sm:$0xf]
        %v4087 = vld [vmem:[#allocation10 + $0x1c] sm:$0xf]
        %v4088 = vld [vmem:[#allocation10 + $0x20] sm:$0xf]
        %v4089 = vld [vmem:[#allocation10 + $0x24] sm:$0xf]
        %v4090 = vld [vmem:[#allocation10 + $0x28] sm:$0xf]
        %v4091 = vld [vmem:[#allocation10 + $0x2c] sm:$0xf]
        %v4092 = vld [vmem:[#allocation10 + $0x30] sm:$0xf]
        %v4093 = vld [vmem:[#allocation10 + $0x34] sm:$0xf]
        %v4094 = vld [vmem:[#allocation10 + $0x38] sm:$0xf]
        %v4095 = vld [vmem:[#allocation10 + $0x3c] sm:$0xf]
        %v4096 = vld [vmem:[%s6] sm:$0x1]
        %v4098 = vlaneseq
        %v4099 = vshrl.u32 %v4098, 7
        %v4100 = vsub.s32 0, %v4099
        %v4101 = vrot.slane %v4096, %v4100
        %v4119 = vunpack.c.l.b16 %v4080
        %v4120 = vunpack.c.l.b16 %v4081
        %v4121 = vunpack.c.l.b16 %v4082
        %v4122 = vunpack.c.l.b16 %v4083
        %v4123 = vunpack.c.l.b16 %v4084
        %v4124 = vunpack.c.l.b16 %v4085
        %v4125 = vunpack.c.l.b16 %v4086
        %v4126 = vunpack.c.l.b16 %v4087
        %v4127 = vunpack.c.l.b16 %v4088
        %v4128 = vunpack.c.l.b16 %v4089
        %v4129 = vunpack.c.l.b16 %v4090
        %v4130 = vunpack.c.l.b16 %v4091
        %v4131 = vunpack.c.l.b16 %v4092
        %v4132 = vunpack.c.l.b16 %v4093
        %v4133 = vunpack.c.l.b16 %v4094
        %v4134 = vunpack.c.l.b16 %v4095
        %v4135 = vpack.c.b16 %v4120, %v4119
        %v4136 = vpack.c.b16 %v4122, %v4121
        %v4137 = vpack.c.b16 %v4124, %v4123
        %v4138 = vpack.c.b16 %v4126, %v4125
        %v4139 = vpack.c.b16 %v4128, %v4127
        %v4140 = vpack.c.b16 %v4130, %v4129
        %v4141 = vpack.c.b16 %v4132, %v4131
        %v4142 = vpack.c.b16 %v4134, %v4133
        %4151 = vmatprep.subr.bf16.mxu0 0
        %4152 = vmatpush1.bf16.msra.mxu0 %v4142
        %4153 = vmatprep.subr.bf16.mxu0 0
        %4154 = vmatpush1.bf16.msra.mxu0 %v4141
        %4155 = vmatprep.subr.bf16.mxu0 0
        %4156 = vmatpush1.bf16.msra.mxu0 %v4140
        %4157 = vmatprep.subr.bf16.mxu0 0
        %4158 = vmatpush1.bf16.msra.mxu0 %v4139
        %4159 = vmatprep.subr.bf16.mxu0 0
        %4160 = vmatpush1.bf16.msra.mxu0 %v4138
        %4161 = vmatprep.subr.bf16.mxu0 0
        %4162 = vmatpush1.bf16.msra.mxu0 %v4137
        %4163 = vmatprep.subr.bf16.mxu0 0
        %4164 = vmatpush1.bf16.msra.mxu0 %v4136
        %4165 = vmatprep.subr.bf16.mxu0 0
        %4166 = vmatpush1.bf16.msra.mxu0 %v4135
        %4167 = vmatprep.subr.bf16.mxu0 0
        %4168 = vmatpush2.bf16.msra.mxu0 0
        %4169 = vmatprep.subr.bf16.mxu0 0
        %4170 = vmatpush2.bf16.msra.mxu0 0
        %4171 = vmatprep.subr.bf16.mxu0 0
        %4172 = vmatpush2.bf16.msra.mxu0 0
        %4173 = vmatprep.subr.bf16.mxu0 0
        %4174 = vmatpush2.bf16.msra.mxu0 0
        %4175 = vmatprep.subr.bf16.mxu0 0
        %4176 = vmatpush2.bf16.msra.mxu0 0
        %4177 = vmatprep.subr.bf16.mxu0 0
        %4178 = vmatpush2.bf16.msra.mxu0 0
        %4179 = vmatprep.subr.bf16.mxu0 0
        %4180 = vmatpush2.bf16.msra.mxu0 0
        %4181 = vmatprep.subr.bf16.mxu0 0
        %4182 = vmatpush2.bf16.msra.mxu0 0
        %4183 = vmatprep.mubr.bf16.mxu0 0
        %4184 = vmatmul.mubr.bf16.gmra.mxu0 %v4072
        %v4185 = vpop.f32.mrf.mxu0
        %v4186 = vadd.f32 %v4101, %v4185
        %v4187 = vpop.f32.mrf.mxu0
        %v4188 = vpop.f32.mrf.mxu0
        %v4189 = vadd.f32 %v4101, %v4188
        %v4190 = vpop.f32.mrf.mxu0
        %4191 = vmatprep.mubr.bf16.mxu0 0
        %4192 = vmatmul.mubr.bf16.gmra.mxu0 %v4073
        %v4193 = vpop.f32.mrf.mxu0
        %v4194 = vadd.f32 %v4101, %v4193
        %v4195 = vpop.f32.mrf.mxu0
        %v4196 = vpop.f32.mrf.mxu0
        %v4197 = vadd.f32 %v4101, %v4196
        %v4198 = vpop.f32.mrf.mxu0
        %4199 = vmatprep.mubr.bf16.mxu0 0
        %4200 = vmatmul.mubr.bf16.gmra.mxu0 %v4074
        %v4201 = vpop.f32.mrf.mxu0
        %v4202 = vadd.f32 %v4101, %v4201
        %v4203 = vpop.f32.mrf.mxu0
        %v4204 = vpop.f32.mrf.mxu0
        %v4205 = vadd.f32 %v4101, %v4204
        %v4206 = vpop.f32.mrf.mxu0
        %4207 = vmatprep.mubr.bf16.mxu0 0
        %4208 = vmatmul.mubr.bf16.gmra.mxu0 %v4075
        %v4209 = vpop.f32.mrf.mxu0
        %v4210 = vadd.f32 %v4101, %v4209
        %v4211 = vpop.f32.mrf.mxu0
        %v4212 = vpop.f32.mrf.mxu0
        %v4213 = vadd.f32 %v4101, %v4212
        %v4214 = vpop.f32.mrf.mxu0
        %4215 = vmatprep.mubr.bf16.mxu0 0
        %4216 = vmatmul.mubr.bf16.gmra.mxu0 %v4076
        %v4217 = vpop.f32.mrf.mxu0
        %v4218 = vadd.f32 %v4101, %v4217
        %v4219 = vpop.f32.mrf.mxu0
        %v4220 = vpop.f32.mrf.mxu0
        %v4221 = vadd.f32 %v4101, %v4220
        %v4222 = vpop.f32.mrf.mxu0
        %4223 = vmatprep.mubr.bf16.mxu0 0
        %4224 = vmatmul.mubr.bf16.gmra.mxu0 %v4077
        %v4225 = vpop.f32.mrf.mxu0
        %v4226 = vadd.f32 %v4101, %v4225
        %v4227 = vpop.f32.mrf.mxu0
        %v4228 = vpop.f32.mrf.mxu0
        %v4229 = vadd.f32 %v4101, %v4228
        %v4230 = vpop.f32.mrf.mxu0
        %4231 = vmatprep.mubr.bf16.mxu0 0
        %4232 = vmatmul.mubr.bf16.gmra.mxu0 %v4078
        %v4233 = vpop.f32.mrf.mxu0
        %v4234 = vadd.f32 %v4101, %v4233
        %v4235 = vpop.f32.mrf.mxu0
        %v4236 = vpop.f32.mrf.mxu0
        %v4237 = vadd.f32 %v4101, %v4236
        %v4238 = vpop.f32.mrf.mxu0
        %4239 = vmatprep.mubr.bf16.mxu0 0
        %4240 = vmatmul.mubr.bf16.gmra.mxu0 %v4079
        %v4241 = vpop.f32.mrf.mxu0
        %v4242 = vadd.f32 %v4101, %v4241
        %v4243 = vpop.f32.mrf.mxu0
        %v4244 = vpop.f32.mrf.mxu0
        %v4245 = vadd.f32 %v4101, %v4244
        %v4246 = vpop.f32.mrf.mxu0
        %4247 = vdwg.mxu0
        %v4248 = vld [vmem:[%s425] sm:$0xf]
        %v4249 = vld [vmem:[%s425 + $0x4] sm:$0xf]
        %v4250 = vld [vmem:[%s425 + $0x8] sm:$0xf]
        %v4251 = vld [vmem:[%s425 + $0xc] sm:$0xf]
        %v4252 = vld [vmem:[%s425 + $0x10] sm:$0xf]
        %v4253 = vld [vmem:[%s425 + $0x14] sm:$0xf]
        %v4254 = vld [vmem:[%s425 + $0x18] sm:$0xf]
        %v4255 = vld [vmem:[%s425 + $0x1c] sm:$0xf]
        %v4256 = vld [vmem:[%s425 + $0x20] sm:$0xf]
        %v4257 = vld [vmem:[%s425 + $0x24] sm:$0xf]
        %v4258 = vld [vmem:[%s425 + $0x28] sm:$0xf]
        %v4259 = vld [vmem:[%s425 + $0x2c] sm:$0xf]
        %v4260 = vld [vmem:[%s425 + $0x30] sm:$0xf]
        %v4261 = vld [vmem:[%s425 + $0x34] sm:$0xf]
        %v4262 = vld [vmem:[%s425 + $0x38] sm:$0xf]
        %v4263 = vld [vmem:[%s425 + $0x3c] sm:$0xf]
        %v4264 = vunpack.c.l.bf16 %v4248
        %v4265 = vunpack.c.l.bf16 %v4249
        %v4266 = vunpack.c.l.bf16 %v4250
        %v4267 = vunpack.c.l.bf16 %v4251
        %v4268 = vunpack.c.l.bf16 %v4252
        %v4269 = vunpack.c.l.bf16 %v4253
        %v4270 = vunpack.c.l.bf16 %v4254
        %v4271 = vunpack.c.l.bf16 %v4255
        %v4272 = vunpack.c.l.bf16 %v4256
        %v4273 = vunpack.c.l.bf16 %v4257
        %v4274 = vunpack.c.l.bf16 %v4258
        %v4275 = vunpack.c.l.bf16 %v4259
        %v4276 = vunpack.c.l.bf16 %v4260
        %v4277 = vunpack.c.l.bf16 %v4261
        %v4278 = vunpack.c.l.bf16 %v4262
        %v4279 = vunpack.c.l.bf16 %v4263
        %v4280 = vadd.f32 %v4186, %v4264
        %v4281 = vadd.f32 %v4189, %v4265
        %v4282 = vadd.f32 %v4194, %v4266
        %v4283 = vadd.f32 %v4197, %v4267
        %v4284 = vadd.f32 %v4202, %v4268
        %v4285 = vadd.f32 %v4205, %v4269
        %v4286 = vadd.f32 %v4210, %v4270
        %v4287 = vadd.f32 %v4213, %v4271
        %v4288 = vadd.f32 %v4218, %v4272
        %v4289 = vadd.f32 %v4221, %v4273
        %v4290 = vadd.f32 %v4226, %v4274
        %v4291 = vadd.f32 %v4229, %v4275
        %v4292 = vadd.f32 %v4234, %v4276
        %v4293 = vadd.f32 %v4237, %v4277
        %v4294 = vadd.f32 %v4242, %v4278
        %v4295 = vadd.f32 %v4245, %v4279
        %v4296 = vmax.f32 %v4280, 0.0
        %v4297 = vmax.f32 %v4281, 0.0
        %v4298 = vmax.f32 %v4282, 0.0
        %v4299 = vmax.f32 %v4283, 0.0
        %v4300 = vmax.f32 %v4284, 0.0
        %v4301 = vmax.f32 %v4285, 0.0
        %v4302 = vmax.f32 %v4286, 0.0
        %v4303 = vmax.f32 %v4287, 0.0
        %v4304 = vmax.f32 %v4288, 0.0
        %v4305 = vmax.f32 %v4289, 0.0
        %v4306 = vmax.f32 %v4290, 0.0
        %v4307 = vmax.f32 %v4291, 0.0
        %v4308 = vmax.f32 %v4292, 0.0
        %v4309 = vmax.f32 %v4293, 0.0
        %v4310 = vmax.f32 %v4294, 0.0
        %v4311 = vmax.f32 %v4295, 0.0
        %v4312 = vpack.c.bf16 %v4297, %v4296
        %v4313 = vpack.c.bf16 %v4299, %v4298
        %v4314 = vpack.c.bf16 %v4301, %v4300
        %v4315 = vpack.c.bf16 %v4303, %v4302
        %v4316 = vpack.c.bf16 %v4305, %v4304
        %v4317 = vpack.c.bf16 %v4307, %v4306
        %v4318 = vpack.c.bf16 %v4309, %v4308
        %v4319 = vpack.c.bf16 %v4311, %v4310
        %v4328 = vunpack.c.l.b16 %v4312
        %v4329 = vunpack.c.h.b16 %v4312
        %v4330 = vunpack.c.l.b16 %v4313
        %v4331 = vunpack.c.h.b16 %v4313
        %v4332 = vunpack.c.l.b16 %v4314
        %v4333 = vunpack.c.h.b16 %v4314
        %v4334 = vunpack.c.l.b16 %v4315
        %v4335 = vunpack.c.h.b16 %v4315
        %v4336 = vunpack.c.l.b16 %v4316
        %v4337 = vunpack.c.h.b16 %v4316
        %v4338 = vunpack.c.l.b16 %v4317
        %v4339 = vunpack.c.h.b16 %v4317
        %v4340 = vunpack.c.l.b16 %v4318
        %v4341 = vunpack.c.h.b16 %v4318
        %v4342 = vunpack.c.l.b16 %v4319
        %v4343 = vunpack.c.h.b16 %v4319
        %v4344 = vpack.c.b16 %v4328, %v4328
        %v4345 = vpack.c.b16 %v4329, %v4329
        %v4346 = vpack.c.b16 %v4330, %v4330
        %v4347 = vpack.c.b16 %v4331, %v4331
        %v4348 = vpack.c.b16 %v4332, %v4332
        %v4349 = vpack.c.b16 %v4333, %v4333
        %v4350 = vpack.c.b16 %v4334, %v4334
        %v4351 = vpack.c.b16 %v4335, %v4335
        %v4352 = vpack.c.b16 %v4336, %v4336
        %v4353 = vpack.c.b16 %v4337, %v4337
        %v4354 = vpack.c.b16 %v4338, %v4338
        %v4355 = vpack.c.b16 %v4339, %v4339
        %v4356 = vpack.c.b16 %v4340, %v4340
        %v4357 = vpack.c.b16 %v4341, %v4341
        %v4358 = vpack.c.b16 %v4342, %v4342
        %v4359 = vpack.c.b16 %v4343, %v4343
        %4376 = vst [vmem:[%s354] sm:$0xf] %v4344
        %4377 = vst [vmem:[%s354 + $0x4] sm:$0xf] %v4345
        %4378 = vst [vmem:[%s354 + $0x8] sm:$0xf] %v4346
        %4379 = vst [vmem:[%s354 + $0xc] sm:$0xf] %v4347
        %4380 = vst [vmem:[%s354 + $0x10] sm:$0xf] %v4348
        %4381 = vst [vmem:[%s354 + $0x14] sm:$0xf] %v4349
        %4382 = vst [vmem:[%s354 + $0x18] sm:$0xf] %v4350
        %4383 = vst [vmem:[%s354 + $0x1c] sm:$0xf] %v4351
        %4384 = vst [vmem:[%s354 + $0x20] sm:$0xf] %v4352
        %4385 = vst [vmem:[%s354 + $0x24] sm:$0xf] %v4353
        %4386 = vst [vmem:[%s354 + $0x28] sm:$0xf] %v4354
        %4387 = vst [vmem:[%s354 + $0x2c] sm:$0xf] %v4355
        %4388 = vst [vmem:[%s354 + $0x30] sm:$0xf] %v4356
        %4389 = vst [vmem:[%s354 + $0x34] sm:$0xf] %v4357
        %4390 = vst [vmem:[%s354 + $0x38] sm:$0xf] %v4358
        %4391 = vst [vmem:[%s354 + $0x3c] sm:$0xf] %v4359
        %s4392 = sand.u32 %s200, 1
        %s4393 = scalar_lea.sflag [#allocation6], %s4392
        %s4394 = sand.u32 %s200, 1
        %s4395 = smul.addr %s4394, 64
        %s4396 = scalar_lea.vmem [#allocation12], %s4395
        // Predicated region
        $region81: #{tpu_custom_call.1} parent=47 // pred_check
          %p4397 = pneg %p210
        $region82: #{tpu_custom_call.1} parent=47 // pred_check_branch
          %4399 = sbr.rel (%p4397) target = $region84
        $region83: #{tpu_custom_call.1} parent=47 // pred_region
          %s4400 = smul.u32 8, %s31
          %s4402 = ssub.s32 1024, 1024
          %4403 = vsyncadd %s4393, %s4402
          %s4404 = smul.addr %s4400, 2
          %s4405 = smul.addr %s30, 32
          %s4406 = sadd.s32 %s4404, %s4405
          %s4407 = smul.addr %s4406, 64
          %s4408 = scalar_lea.hbm %s7, %s4407
          %s4409 = sshll.u32 %s4396, 4
          %s4410 = int_to_ptr.vmem [resolvable:$true] %s4409
          %4415 = dma.vmem_to_hbm [thread:$0]  %s4410, 1024, %s4408, %s4393, 64, 64, 4
        $region84: #{tpu_custom_call.1} parent=47 // pred_fallthru
          _
      $region48: #{tpu_custom_call.1} parent=5 // pred_fallthru
        _
      %p4416 = scmp.le.s32.totalorder 2, %s21
      // Predicated region
      $region85: #{tpu_custom_call.1} parent=5 // pred_check
        %p4417 = pneg %p4416
      $region86: #{tpu_custom_call.1} parent=5 // pred_check_branch
        %4419 = sbr.rel (%p4417) target = $region88
      $region87: #{tpu_custom_call.1} parent=5 // pred_region
        %s4420 = ssub.s32 %s21, 2
        // Predicated region
        $region89: #{tpu_custom_call.1} parent=87 // pred_check
          %p4421 = pneg %p216
        $region90: #{tpu_custom_call.1} parent=87 // pred_check_branch
          %4423 = sbr.rel (%p4421) target = $region92
        $region91: #{tpu_custom_call.1} parent=87 // pred_region
          %s4424 = sand.u32 %s201, 1
          %s4425 = scalar_lea.sflag [#allocation6], %s4424
          %s4426 = sand.u32 %s201, 1
          %s4427 = smul.addr %s4426, 64
          %s4428 = scalar_lea.vmem [#allocation12], %s4427
          %4429 = dma.done %s4425, 1024
        $region92: #{tpu_custom_call.1} parent=87 // pred_fallthru
          _
      $region88: #{tpu_custom_call.1} parent=5 // pred_fallthru
        _
    $region6: #{tpu_custom_call.1} parent=1 // loop_footer
      %s25 = sadd.s32 1, %s21
    $region7: #{tpu_custom_call.1} parent=1 // loop_footer_branch
      %20 = sbr.rel target = $region3
    $region8: #{tpu_custom_call.1} parent=1 // loop_exit
      _
    %4430 = vsyncpa [#allocation5], 1
    %s4431 = scalar_lea.sflag [#allocation5], 1
    %4432 = vsyncpa %s4431, 1
    %4433 = vsyncpa [#allocation8], 1
    %4434 = vsyncpa [#allocation11], 1
    %4435 = vsyncpa [#allocation6], 1
    %s4436 = scalar_lea.sflag [#allocation6], 1
    %4437 = vsyncpa %s4436, 1

</llo_original>
